<compile_context>
chip_gen: v7x
topology: tpu7x:2x2x1
jax: 0.10.0
libtpu: 0.0.40
codegen_flags: <defaults>
</compile_context>

<pallas_src>
import jax
import jax.numpy as jnp
from jax.experimental import pallas as pl
from jax.experimental.pallas import tpu as pltpu

_EPS = 1e-5          # PyTorch BatchNorm2d default eps
_C1, _C2 = 64, 128   # channel widths fixed by the module
_BN1_CHUNK = 256     # rows per BN1-apply chunk (bounds vreg pressure in the finalize)


def _round_up(x, m):
    return (x + m - 1) // m * m


# ---------------------------------------------------------------------------
# Fused kernel factory (all layout constants are static Python ints)
# ---------------------------------------------------------------------------
def _make_fused_kernel(*, M1, M2, TM1, M1p, slab_starts, tap_starts,
                       pool_rows, pool_store_off, R_outp):

    def kernel(a1_ref, w1_ref, g1_ref, b1_ref, w2_ref, g2_ref, b2_ref, msk_ref,
               o_ref, y1_s, sum_s, ssq_s, pp_s):
        step = pl.program_id(0)

        # -------------- streamed pass: conv1 M-tile matmul + BN1 statistics --------------
        @pl.when(step == 0)
        def _init():
            sum_s[...] = jnp.zeros_like(sum_s)
            ssq_s[...] = jnp.zeros_like(ssq_s)

        acc = jnp.dot(a1_ref[...], w1_ref[...],
                      preferred_element_type=jnp.float32)              # (TM1, 64) f32
        row0 = pl.multiple_of(step * TM1, 16)
        y1_s[pl.ds(row0, TM1), :] = acc.astype(jnp.bfloat16)
        # zero-padded im2col rows give zero conv outputs -> stats stay exact with /M1.
        sum_s[...] += jnp.sum(acc, axis=0, keepdims=True)
        ssq_s[...] += jnp.sum(acc * acc, axis=0, keepdims=True)

        # -------------- finalize: BN1+ReLU, maxpool, conv2, BN2+ReLU ---------------------
        @pl.when(step == pl.num_programs(0) - 1)
        def _finalize():
            inv_m1 = 1.0 / M1
            mean1 = sum_s[...] * inv_m1
            var1 = jnp.maximum(ssq_s[...] * inv_m1 - mean1 * mean1, 0.0)
            scale1 = jax.lax.rsqrt(var1 + _EPS) * g1_ref[...]
            shift1 = b1_ref[...] - mean1 * scale1

            # BN1 + ReLU in place over the bf16 y1 scratch (large chunked loads/stores).
            for r0 in range(0, M1p, _BN1_CHUNK):
                rows = min(_BN1_CHUNK, M1p - r0)
                blk = y1_s[pl.ds(r0, rows), :].astype(jnp.float32)
                y1_s[pl.ds(r0, rows), :] = jnp.maximum(
                    blk * scale1 + shift1, 0.0).astype(jnp.bfloat16)

            # 3x3 / stride-2 maxpool == elementwise max of 9 contiguous row slabs.
            # (Row layout (oh_par, w_par, oh_idx, n, w_idx) makes every pool tap a
            # constant-offset contiguous view; cross-row garbage only reaches the spare
            # w_idx == PW column, which is masked to zero below.)
            pooled = y1_s[pl.ds(slab_starts[0], pool_rows), :]
            for s in slab_starts[1:]:
                pooled = jnp.maximum(pooled, y1_s[pl.ds(s, pool_rows), :])
            msk_p = msk_ref[pl.ds(0, pool_rows), :].astype(jnp.bfloat16)   # (pool_rows, 1)
            pp_s[...] = jnp.zeros_like(pp_s)            # zero border == conv2's pad=1
            pp_s[pl.ds(pool_store_off, pool_rows), :] = pooled * msk_p

            # conv2 (3x3/s1/p1): 9 accumulating tap matmuls over shifted pooled views.
            c2 = jnp.zeros((R_outp, _C2), jnp.float32)
            for t, s in enumerate(tap_starts):
                c2 = c2 + jnp.dot(pp_s[pl.ds(s, R_outp), :],
                                  w2_ref[pl.ds(t * _C1, _C1), :],
                                  preferred_element_type=jnp.float32)

            # BN2 over the M2 valid rows (masked batch statistics) + ReLU.
            m = msk_ref[...]                                           # (R_outp, 1) f32
            inv_m2 = 1.0 / M2
            mean2 = jnp.sum(c2 * m, axis=0, keepdims=True) * inv_m2
            var2 = jnp.maximum(
                jnp.sum(c2 * c2 * m, axis=0, keepdims=True) * inv_m2 - mean2 * mean2, 0.0)
            scale2 = jax.lax.rsqrt(var2 + _EPS) * g2_ref[...]
            shift2 = b2_ref[...] - mean2 * scale2
            o_ref[...] = jnp.maximum(c2 * scale2 + shift2, 0.0)        # lane-dense store

    return kernel


# ---------------------------------------------------------------------------
# Plain-JAX glue (im2col for conv1, layout reordering, weight reshapes)
# ---------------------------------------------------------------------------
def _im2col_conv1(x_nhwc, k, s, p):
    N, H, W, C = x_nhwc.shape
    xp = jnp.pad(x_nhwc, ((0, 0), (p, p), (p, p), (0, 0)))
    OH = (H + 2 * p - k) // s + 1
    OW = (W + 2 * p - k) // s + 1
    cols = []
    for i in range(k):
        for j in range(k):
            cols.append(xp[:, i:i + s * OH:s, j:j + s * OW:s, :])
    patches = jnp.concatenate(cols, axis=-1)           # (N, OH, OW, k*k*C), order (kh,kw,cin)
    return patches, OH, OW


def _torch_conv_weight_to_matmul(w_oihw):
    # (Cout, Cin, KH, KW) -> (KH, KW, Cin, Cout) -> (KH*KW*Cin, Cout)
    cout, cin, kh, kw = w_oihw.shape
    return jnp.transpose(w_oihw, (2, 3, 1, 0)).reshape(kh * kw * cin, cout)


def conv_block1(x_nchw, params):
    """Forward pass of ConvBlock1 (training-mode batch statistics, bias-free convs)."""
    x = jnp.transpose(x_nchw, (0, 2, 3, 1)).astype(jnp.float32)        # NCHW -> NHWC
    N = x.shape[0]
    in_ch = x.shape[-1]

    patches, OH1, OW1 = _im2col_conv1(x, k=11, s=3, p=5)
    K1 = 11 * 11 * in_ch
    PH = (OH1 - 3) // 2 + 1
    PW = (OW1 - 3) // 2 + 1
    NE = (OW1 + 1) // 2                     # even-w count per row; always == PW + 1
    NO = OW1 - NE
    NOH0 = (OH1 + 1) // 2                   # even-oh count; always == PH + 1
    NOH1 = OH1 - NOH0
    assert NE == PW + 1 and NOH0 == PH + 1 and NOH1 >= PH

    # Reorder conv1 im2col rows to (oh_parity, w_parity, oh_idx, n, w_idx) so the fused
    # maxpool / conv2 only ever touch large contiguous row slabs inside the kernel.
    ev = patches[:, :, 0::2, :]                                        # (N, OH1, NE, K1)
    od = patches[:, :, 1::2, :]                                        # (N, OH1, NO, K1)
    if NO < NE:
        od = jnp.pad(od, ((0, 0), (0, 0), (0, NE - NO), (0, 0)))
    ev = jnp.transpose(ev, (1, 0, 2, 3))                               # (OH1, N, NE, K1)
    od = jnp.transpose(od, (1, 0, 2, 3))
    a1 = jnp.concatenate([ev[0::2].reshape(-1, K1), od[0::2].reshape(-1, K1),
                          ev[1::2].reshape(-1, K1), od[1::2].reshape(-1, K1)], axis=0)

    B = N * NE                               # rows per oh-slab in this layout
    M1L = a1.shape[0]                        # = 2 * OH1 * B (layout rows, incl. odd-w pad)
    M1 = N * OH1 * OW1                       # true BN1 sample count
    M2 = N * PH * PW                         # true BN2 sample count
    K2 = 9 * _C1

    # Streamed conv1 grid: single step at toy sizes, >=4 steps once inputs are larger.
    TM1 = _round_up(M1L, 16) if M1L <= 1024 else 512
    M1p = _round_up(M1L, TM1)
    K1p = _round_up(K1, 128)

    a1p = jnp.pad(a1, ((0, M1p - M1L), (0, K1p - K1))).astype(jnp.bfloat16)
    w1 = _torch_conv_weight_to_matmul(params["w1"])                    # (K1, 64)
    w2 = _torch_conv_weight_to_matmul(params["w2"]).astype(jnp.bfloat16)   # (576, 128)
    w1p = jnp.pad(w1, ((0, K1p - K1), (0, 0))).astype(jnp.bfloat16)
    g1 = params["g1"].reshape(1, _C1).astype(jnp.float32)
    b1 = params["b1"].reshape(1, _C1).astype(jnp.float32)
    g2 = params["g2"].reshape(1, _C2).astype(jnp.float32)
    b2 = params["b2"].reshape(1, _C2).astype(jnp.float32)

    # Region offsets of the 4 (oh_parity, w_parity) blocks inside a1 / y1.
    off_E_even = 0
    off_O_even = NOH0 * B
    off_E_odd = 2 * NOH0 * B
    off_O_odd = (2 * NOH0 + NOH1) * B
    # 9 pool taps: rows oh = 2ph (even), 2ph+1 (odd), 2ph+2 (even, +B);
    # cols w = 2pw (E), 2pw+2 (E shifted one row), 2pw+1 (O).
    slab_starts = (off_E_even, off_E_even + 1, off_O_even,
                   off_E_odd, off_E_odd + 1, off_O_odd,
                   off_E_even + B, off_E_even + B + 1, off_O_even + B)

    pool_rows = PH * B                       # pooled rows in (ph, n, w_idx) layout
    R_outp = _round_up(pool_rows, 16)        # conv2 / output row count (padded)
    margin = (16 - B % 16) % 16 + 16         # zero rows before pooled data (aligned store)
    pool_store_off = margin + B              # data starts after one zero (ph = -1) block
    pp_rows = _round_up(margin + (PH + 2) * B + 16, 16)
    tap_starts = tuple(margin + di * B + dj - 1 for di in range(3) for dj in range(3))

    # Row-validity mask over the (ph, n, w_idx) output layout: drops the spare
    # w_idx == PW column and trailing row padding (used for pooling + BN2 stats).
    r = jnp.arange(R_outp)
    rmask = (((r % NE) < PW) & (r < pool_rows)).astype(jnp.float32).reshape(R_outp, 1)

    kernel = _make_fused_kernel(
        M1=M1, M2=M2, TM1=TM1, M1p=M1p, slab_starts=slab_starts, tap_starts=tap_starts,
        pool_rows=pool_rows, pool_store_off=pool_store_off, R_outp=R_outp)

    out = pl.pallas_call(
        kernel,
        grid=(M1p // TM1,),
        in_specs=[
            pl.BlockSpec((TM1, K1p), lambda i: (i, 0)),   # conv1 im2col, streamed/pipelined
            pl.BlockSpec((K1p, _C1), lambda i: (0, 0)),   # conv1 weight, resident
            pl.BlockSpec((1, _C1), lambda i: (0, 0)),     # bn1 gamma
            pl.BlockSpec((1, _C1), lambda i: (0, 0)),     # bn1 beta
            pl.BlockSpec((K2, _C2), lambda i: (0, 0)),    # conv2 weight, resident
            pl.BlockSpec((1, _C2), lambda i: (0, 0)),     # bn2 gamma
            pl.BlockSpec((1, _C2), lambda i: (0, 0)),     # bn2 beta
            pl.BlockSpec((R_outp, 1), lambda i: (0, 0)),  # output-row validity mask
        ],
        out_specs=pl.BlockSpec((R_outp, _C2), lambda i: (0, 0)),
        out_shape=jax.ShapeDtypeStruct((R_outp, _C2), jnp.float32),
        scratch_shapes=[
            pltpu.VMEM((M1p, _C1), jnp.bfloat16),         # conv1 activations (resident, bf16)
            pltpu.VMEM((1, _C1), jnp.float32),            # BN1 sum
            pltpu.VMEM((1, _C1), jnp.float32),            # BN1 sum of squares
            pltpu.VMEM((pp_rows, _C1), jnp.bfloat16),     # zero-bordered pooled buffer
        ],
        compiler_params=pltpu.CompilerParams(
            dimension_semantics=("arbitrary",),           # stats/output carried across steps
            vmem_limit_bytes=32 * 1024 * 1024,
        ),
        cost_estimate=pl.CostEstimate(
            flops=2 * M1p * K1p * _C1 + 2 * 9 * R_outp * _C1 * _C2,
            transcendentals=0,
            bytes_accessed=2 * (a1p.size + w1p.size + w2.size) + 4 * R_outp * _C2,
        ),
    )(a1p, w1p, g1, b1, w2, g2, b2, rmask)

    # Extract the M2 valid rows from the lane-dense output slab.
    y = out[:pool_rows].reshape(PH, N, NE, _C2)[:, :, :PW, :]
    return jnp.transpose(y, (1, 3, 0, 2))                              # -> NCHW


# ---------------------------------------------------------------------------
# Params (PyTorch-layout weights) and a pure-JAX f32 reference for checking
# ---------------------------------------------------------------------------
def init_params(key, in_ch):
    k1, k2, k3, k4, k5, k6 = jax.random.split(key, 6)
    return {
        "w1": 0.05 * jax.random.normal(k1, (64, in_ch, 11, 11), jnp.float32),
        "g1": 1.0 + 0.1 * jax.random.normal(k3, (64,), jnp.float32),
        "b1": 0.1 * jax.random.normal(k4, (64,), jnp.float32),
        "w2": 0.05 * jax.random.normal(k2, (128, 64, 3, 3), jnp.float32),
        "g2": 1.0 + 0.1 * jax.random.normal(k5, (128,), jnp.float32),
        "b2": 0.1 * jax.random.normal(k6, (128,), jnp.float32),
    }


def _reference(x_nchw, params):
    """Pure-JAX f32 reference of ConvBlock1.forward (training-mode batch statistics)."""
    def bn_relu(y, g, b):
        mean = jnp.mean(y, axis=(0, 2, 3), keepdims=True)
        var = jnp.mean((y - mean) ** 2, axis=(0, 2, 3), keepdims=True)
        y = (y - mean) * jax.lax.rsqrt(var + _EPS)
        y = y * g.reshape(1, -1, 1, 1) + b.reshape(1, -1, 1, 1)
        return jnp.maximum(y, 0.0)

    dn = ("NCHW", "OIHW", "NCHW")
    y = jax.lax.conv_general_dilated(x_nchw, params["w1"], (3, 3), [(5, 5), (5, 5)],
                                     dimension_numbers=dn,
                                     precision=jax.lax.Precision.HIGHEST)
    y = bn_relu(y, params["g1"], params["b1"])
    y = jax.lax.reduce_window(y, -jnp.inf, jax.lax.max,
                              (1, 1, 3, 3), (1, 1, 2, 2), "VALID")
    y = jax.lax.conv_general_dilated(y, params["w2"], (1, 1), [(1, 1), (1, 1)],
                                     dimension_numbers=dn,
                                     precision=jax.lax.Precision.HIGHEST)
    y = bn_relu(y, params["g2"], params["b2"])
    return y


if __name__ == "__main__":
    key = jax.random.PRNGKey(0)
    kx, kp = jax.random.split(key)
    in_ch = 4
    x = jax.random.normal(kx, (2, in_ch, 32, 32), jnp.float32)   # NCHW like PyTorch
    params = init_params(kp, in_ch)

    out = jax.block_until_ready(jax.jit(conv_block1)(x, params))

    assert out.shape == (2, 128, 5, 5), out.shape
    assert out.dtype == jnp.float32
    assert bool(jnp.all(jnp.isfinite(out)))

    # bf16 MXU operands vs. an f32 reference: expected ~1e-2 absolute error.
    ref = _reference(x, params)
    assert float(jnp.max(jnp.abs(out - ref))) < 0.35
    print("KERNEL_OK")
</pallas_src>

<mosaic_0001>
module attributes {stable_mosaic.version = 11 : i64} {
  func.func @kernel(%arg0: i32, %arg1: memref<272x512xbf16, #tpu.memory_space<vmem>>, %arg2: memref<512x64xbf16, #tpu.memory_space<vmem>>, %arg3: memref<1x64xf32, #tpu.memory_space<vmem>>, %arg4: memref<1x64xf32, #tpu.memory_space<vmem>>, %arg5: memref<576x128xbf16, #tpu.memory_space<vmem>>, %arg6: memref<1x128xf32, #tpu.memory_space<vmem>>, %arg7: memref<1x128xf32, #tpu.memory_space<vmem>>, %arg8: memref<64x1xf32, #tpu.memory_space<vmem>>, %arg9: memref<64x128xf32, #tpu.memory_space<vmem>>, %arg10: memref<272x64xbf16, #tpu.memory_space<vmem>>, %arg11: memref<1x64xf32, #tpu.memory_space<vmem>>, %arg12: memref<1x64xf32, #tpu.memory_space<vmem>>, %arg13: memref<128x64xbf16, #tpu.memory_space<vmem>>) attributes {dimension_semantics = [#tpu.dimension_semantics<arbitrary>], iteration_bounds = array<i64: 1>, scalar_prefetch = 0 : i64, scratch_operands = 4 : i64, tpu.core_type = #tpu.core_type<tc>, window_params = [{transform_indices = @transform_0, window_bounds = array<i64: 272, 512>}, {pipeline_mode = #tpu.pipeline_mode<synchronous>, transform_indices = @transform_1, window_bounds = array<i64: 512, 64>}, {pipeline_mode = #tpu.pipeline_mode<synchronous>, transform_indices = @transform_2, window_bounds = array<i64: 1, 64>}, {pipeline_mode = #tpu.pipeline_mode<synchronous>, transform_indices = @transform_3, window_bounds = array<i64: 1, 64>}, {pipeline_mode = #tpu.pipeline_mode<synchronous>, transform_indices = @transform_4, window_bounds = array<i64: 576, 128>}, {pipeline_mode = #tpu.pipeline_mode<synchronous>, transform_indices = @transform_5, window_bounds = array<i64: 1, 128>}, {pipeline_mode = #tpu.pipeline_mode<synchronous>, transform_indices = @transform_6, window_bounds = array<i64: 1, 128>}, {pipeline_mode = #tpu.pipeline_mode<synchronous>, transform_indices = @transform_7, window_bounds = array<i64: 64, 1>}, {pipeline_mode = #tpu.pipeline_mode<synchronous>, transform_indices = @transform_8, window_bounds = array<i64: 64, 128>}]} {
    %c0_i32 = arith.constant 0 : i32
    %0 = arith.cmpi eq, %arg0, %c0_i32 : i32
    %1 = arith.extui %0 : i1 to i32
    %c0_i32_0 = arith.constant 0 : i32
    %2 = arith.cmpi ne, %1, %c0_i32_0 : i32
    scf.if %2 {
      %cst_17 = arith.constant 0.000000e+00 : f32
      %25 = vector.broadcast %cst_17 : f32 to vector<1x64xf32>
      %c0_18 = arith.constant 0 : index
      %c0_19 = arith.constant 0 : index
      %26 = vector.load %arg11[%c0_18, %c0_19] : memref<1x64xf32, #tpu.memory_space<vmem>>, vector<1x64xf32>
      tpu.vector_store %arg11[%c0_18, %c0_19], %25 {strides = array<i32>} : memref<1x64xf32, #tpu.memory_space<vmem>>, vector<1x64xf32>,
      %cst_20 = arith.constant 0.000000e+00 : f32
      %27 = vector.broadcast %cst_20 : f32 to vector<1x64xf32>
      %c0_21 = arith.constant 0 : index
      %c0_22 = arith.constant 0 : index
      %28 = vector.load %arg12[%c0_21, %c0_22] : memref<1x64xf32, #tpu.memory_space<vmem>>, vector<1x64xf32>
      tpu.vector_store %arg12[%c0_21, %c0_22], %27 {strides = array<i32>} : memref<1x64xf32, #tpu.memory_space<vmem>>, vector<1x64xf32>,
    } else {
    }
    %c0 = arith.constant 0 : index
    %c0_1 = arith.constant 0 : index
    %3 = vector.load %arg1[%c0, %c0_1] : memref<272x512xbf16, #tpu.memory_space<vmem>>, vector<272x512xbf16>
    %c0_2 = arith.constant 0 : index
    %c0_3 = arith.constant 0 : index
    %4 = vector.load %arg2[%c0_2, %c0_3] : memref<512x64xbf16, #tpu.memory_space<vmem>>, vector<512x64xbf16>
    %cst = arith.constant dense<0.000000e+00> : vector<272x64xf32>
    %5 = tpu.matmul %3, %4, %cst {dimension_numbers = #tpu.dot_dimension_numbers<[1], [0], [0], [1], [0, 0, 1, 1], [], []>} : vector<272x512xbf16>, vector<512x64xbf16>, vector<272x64xf32> -> vector<272x64xf32>
    %c272_i32 = arith.constant 272 : i32
    %6 = arith.muli %arg0, %c272_i32 : i32
    %7 = tpu.assume_multiple %6, 16 : i32
    %8 = arith.truncf %5 : vector<272x64xf32> to vector<272x64xbf16>
    %9 = arith.index_cast %7 : i32 to index
    %c0_4 = arith.constant 0 : index
    %10 = vector.load %arg10[%9, %c0_4] : memref<272x64xbf16, #tpu.memory_space<vmem>>, vector<272x64xbf16>
    tpu.vector_store %arg10[%9, %c0_4], %8 {strides = array<i32>} : memref<272x64xbf16, #tpu.memory_space<vmem>>, vector<272x64xbf16>,
    %c0_5 = arith.constant 0 : index
    %c0_6 = arith.constant 0 : index
    %11 = vector.load %arg11[%c0_5, %c0_6] : memref<1x64xf32, #tpu.memory_space<vmem>>, vector<1x64xf32>
    %cst_7 = arith.constant dense<0.000000e+00> : vector<64xf32>
    %12 = vector.multi_reduction <add>, %5, %cst_7 [0] : vector<272x64xf32> to vector<64xf32>
    %13 = vector.shape_cast %12 : vector<64xf32> to vector<1x64xf32>
    %14 = arith.addf %11, %13 : vector<1x64xf32>
    %c0_8 = arith.constant 0 : index
    %c0_9 = arith.constant 0 : index
    %15 = vector.load %arg11[%c0_8, %c0_9] : memref<1x64xf32, #tpu.memory_space<vmem>>, vector<1x64xf32>
    tpu.vector_store %arg11[%c0_8, %c0_9], %14 {strides = array<i32>} : memref<1x64xf32, #tpu.memory_space<vmem>>, vector<1x64xf32>,
    %c0_10 = arith.constant 0 : index
    %c0_11 = arith.constant 0 : index
    %16 = vector.load %arg12[%c0_10, %c0_11] : memref<1x64xf32, #tpu.memory_space<vmem>>, vector<1x64xf32>
    %17 = arith.mulf %5, %5 : vector<272x64xf32>
    %cst_12 = arith.constant dense<0.000000e+00> : vector<64xf32>
    %18 = vector.multi_reduction <add>, %17, %cst_12 [0] : vector<272x64xf32> to vector<64xf32>
    %19 = vector.shape_cast %18 : vector<64xf32> to vector<1x64xf32>
    %20 = arith.addf %16, %19 : vector<1x64xf32>
    %c0_13 = arith.constant 0 : index
    %c0_14 = arith.constant 0 : index
    %21 = vector.load %arg12[%c0_13, %c0_14] : memref<1x64xf32, #tpu.memory_space<vmem>>, vector<1x64xf32>
    tpu.vector_store %arg12[%c0_13, %c0_14], %20 {strides = array<i32>} : memref<1x64xf32, #tpu.memory_space<vmem>>, vector<1x64xf32>,
    %c0_i32_15 = arith.constant 0 : i32
    %22 = arith.cmpi eq, %arg0, %c0_i32_15 : i32
    %23 = arith.extui %22 : i1 to i32
    %c0_i32_16 = arith.constant 0 : i32
    %24 = arith.cmpi ne, %23, %c0_i32_16 : i32
    scf.if %24 {
      %c0_17 = arith.constant 0 : index
      %c0_18 = arith.constant 0 : index
      %25 = vector.load %arg11[%c0_17, %c0_18] : memref<1x64xf32, #tpu.memory_space<vmem>>, vector<1x64xf32>
      %cst_19 = arith.constant 0.00413223123 : f32
      %26 = vector.broadcast %cst_19 : f32 to vector<1x64xf32>
      %27 = arith.mulf %25, %26 : vector<1x64xf32>
      %c0_20 = arith.constant 0 : index
      %c0_21 = arith.constant 0 : index
      %28 = vector.load %arg12[%c0_20, %c0_21] : memref<1x64xf32, #tpu.memory_space<vmem>>, vector<1x64xf32>
      %cst_22 = arith.constant 0.00413223123 : f32
      %29 = vector.broadcast %cst_22 : f32 to vector<1x64xf32>
      %30 = arith.mulf %28, %29 : vector<1x64xf32>
      %31 = arith.mulf %27, %27 : vector<1x64xf32>
      %32 = arith.subf %30, %31 : vector<1x64xf32>
      %cst_23 = arith.constant 0.000000e+00 : f32
      %33 = vector.broadcast %cst_23 : f32 to vector<1x64xf32>
      %34 = arith.maximumf %32, %33 : vector<1x64xf32>
      %cst_24 = arith.constant 9.99999974E-6 : f32
      %35 = vector.broadcast %cst_24 : f32 to vector<1x64xf32>
      %36 = arith.addf %34, %35 : vector<1x64xf32>
      %37 = math.rsqrt %36 : vector<1x64xf32>
      %c0_25 = arith.constant 0 : index
      %c0_26 = arith.constant 0 : index
      %38 = vector.load %arg3[%c0_25, %c0_26] : memref<1x64xf32, #tpu.memory_space<vmem>>, vector<1x64xf32>
      %39 = arith.mulf %37, %38 : vector<1x64xf32>
      %c0_27 = arith.constant 0 : index
      %c0_28 = arith.constant 0 : index
      %40 = vector.load %arg4[%c0_27, %c0_28] : memref<1x64xf32, #tpu.memory_space<vmem>>, vector<1x64xf32>
      %41 = arith.mulf %27, %39 : vector<1x64xf32>
      %42 = arith.subf %40, %41 : vector<1x64xf32>
      %c0_29 = arith.constant 0 : index
      %c0_30 = arith.constant 0 : index
      %43 = vector.load %arg10[%c0_29, %c0_30] : memref<272x64xbf16, #tpu.memory_space<vmem>>, vector<256x64xbf16>
      %44 = arith.extf %43 : vector<256x64xbf16> to vector<256x64xf32>
      %45 = vector.broadcast %39 : vector<1x64xf32> to vector<256x64xf32>
      %46 = arith.mulf %44, %45 : vector<256x64xf32>
      %47 = vector.broadcast %42 : vector<1x64xf32> to vector<256x64xf32>
      %48 = arith.addf %46, %47 : vector<256x64xf32>
      %cst_31 = arith.constant 0.000000e+00 : f32
      %49 = vector.broadcast %cst_31 : f32 to vector<256x64xf32>
      %50 = arith.maximumf %48, %49 : vector<256x64xf32>
      %51 = arith.truncf %50 : vector<256x64xf32> to vector<256x64xbf16>
      %c0_32 = arith.constant 0 : index
      %c0_33 = arith.constant 0 : index
      %52 = vector.load %arg10[%c0_32, %c0_33] : memref<272x64xbf16, #tpu.memory_space<vmem>>, vector<256x64xbf16>
      tpu.vector_store %arg10[%c0_32, %c0_33], %51 {strides = array<i32>} : memref<272x64xbf16, #tpu.memory_space<vmem>>, vector<256x64xbf16>,
      %c256 = arith.constant 256 : index
      %c0_34 = arith.constant 0 : index
      %53 = vector.load %arg10[%c256, %c0_34] : memref<272x64xbf16, #tpu.memory_space<vmem>>, vector<16x64xbf16>
      %54 = arith.extf %53 : vector<16x64xbf16> to vector<16x64xf32>
      %55 = vector.broadcast %39 : vector<1x64xf32> to vector<16x64xf32>
      %56 = arith.mulf %54, %55 : vector<16x64xf32>
      %57 = vector.broadcast %42 : vector<1x64xf32> to vector<16x64xf32>
      %58 = arith.addf %56, %57 : vector<16x64xf32>
      %cst_35 = arith.constant 0.000000e+00 : f32
      %59 = vector.broadcast %cst_35 : f32 to vector<16x64xf32>
      %60 = arith.maximumf %58, %59 : vector<16x64xf32>
      %61 = arith.truncf %60 : vector<16x64xf32> to vector<16x64xbf16>
      %c256_36 = arith.constant 256 : index
      %c0_37 = arith.constant 0 : index
      %62 = vector.load %arg10[%c256_36, %c0_37] : memref<272x64xbf16, #tpu.memory_space<vmem>>, vector<16x64xbf16>
      tpu.vector_store %arg10[%c256_36, %c0_37], %61 {strides = array<i32>} : memref<272x64xbf16, #tpu.memory_space<vmem>>, vector<16x64xbf16>,
      %c0_38 = arith.constant 0 : index
      %c0_39 = arith.constant 0 : index
      %63 = vector.load %arg10[%c0_38, %c0_39] : memref<272x64xbf16, #tpu.memory_space<vmem>>, vector<60x64xbf16>
      %c1 = arith.constant 1 : index
      %c0_40 = arith.constant 0 : index
      %64 = vector.load %arg10[%c1, %c0_40] : memref<272x64xbf16, #tpu.memory_space<vmem>>, vector<60x64xbf16>
      %65 = arith.maximumf %63, %64 : vector<60x64xbf16>
      %c72 = arith.constant 72 : index
      %c0_41 = arith.constant 0 : index
      %66 = vector.load %arg10[%c72, %c0_41] : memref<272x64xbf16, #tpu.memory_space<vmem>>, vector<60x64xbf16>
      %67 = arith.maximumf %65, %66 : vector<60x64xbf16>
      %c144 = arith.constant 144 : index
      %c0_42 = arith.constant 0 : index
      %68 = vector.load %arg10[%c144, %c0_42] : memref<272x64xbf16, #tpu.memory_space<vmem>>, vector<60x64xbf16>
      %69 = arith.maximumf %67, %68 : vector<60x64xbf16>
      %c145 = arith.constant 145 : index
      %c0_43 = arith.constant 0 : index
      %70 = vector.load %arg10[%c145, %c0_43] : memref<272x64xbf16, #tpu.memory_space<vmem>>, vector<60x64xbf16>
      %71 = arith.maximumf %69, %70 : vector<60x64xbf16>
      %c204 = arith.constant 204 : index
      %c0_44 = arith.constant 0 : index
      %72 = vector.load %arg10[%c204, %c0_44] : memref<272x64xbf16, #tpu.memory_space<vmem>>, vector<60x64xbf16>
      %73 = arith.maximumf %71, %72 : vector<60x64xbf16>
      %c12 = arith.constant 12 : index
      %c0_45 = arith.constant 0 : index
      %74 = vector.load %arg10[%c12, %c0_45] : memref<272x64xbf16, #tpu.memory_space<vmem>>, vector<60x64xbf16>
      %75 = arith.maximumf %73, %74 : vector<60x64xbf16>
      %c13 = arith.constant 13 : index
      %c0_46 = arith.constant 0 : index
      %76 = vector.load %arg10[%c13, %c0_46] : memref<272x64xbf16, #tpu.memory_space<vmem>>, vector<60x64xbf16>
      %77 = arith.maximumf %75, %76 : vector<60x64xbf16>
      %c84 = arith.constant 84 : index
      %c0_47 = arith.constant 0 : index
      %78 = vector.load %arg10[%c84, %c0_47] : memref<272x64xbf16, #tpu.memory_space<vmem>>, vector<60x64xbf16>
      %79 = arith.maximumf %77, %78 : vector<60x64xbf16>
      %c0_48 = arith.constant 0 : index
      %c0_49 = arith.constant 0 : index
      %80 = vector.load %arg8[%c0_48, %c0_49] : memref<64x1xf32, #tpu.memory_space<vmem>>, vector<60x1xf32>
      %81 = arith.truncf %80 : vector<60x1xf32> to vector<60x1xbf16>
      %cst_50 = arith.constant 0.000000e+00 : bf16
      %82 = vector.broadcast %cst_50 : bf16 to vector<128x64xbf16>
      %c0_51 = arith.constant 0 : index
      %c0_52 = arith.constant 0 : index
      %83 = vector.load %arg13[%c0_51, %c0_52] : memref<128x64xbf16, #tpu.memory_space<vmem>>, vector<128x64xbf16>
      tpu.vector_store %arg13[%c0_51, %c0_52], %82 {strides = array<i32>} : memref<128x64xbf16, #tpu.memory_space<vmem>>, vector<128x64xbf16>,
      %84 = vector.broadcast %81 : vector<60x1xbf16> to vector<60x64xbf16>
      %85 = arith.mulf %79, %84 : vector<60x64xbf16>
      %c32 = arith.constant 32 : index
      %c0_53 = arith.constant 0 : index
      %86 = vector.load %arg13[%c32, %c0_53] : memref<128x64xbf16, #tpu.memory_space<vmem>>, vector<60x64xbf16>
      tpu.vector_store %arg13[%c32, %c0_53], %85 {strides = array<i32>} : memref<128x64xbf16, #tpu.memory_space<vmem>>, vector<60x64xbf16>,
      %cst_54 = arith.constant 0.000000e+00 : f32
      %87 = vector.broadcast %cst_54 : f32 to vector<64x128xf32>
      %c19 = arith.constant 19 : index
      %c0_55 = arith.constant 0 : index
      %88 = vector.load %arg13[%c19, %c0_55] : memref<128x64xbf16, #tpu.memory_space<vmem>>, vector<64x64xbf16>
      %c0_56 = arith.constant 0 : index
      %c0_57 = arith.constant 0 : index
      %89 = vector.load %arg5[%c0_56, %c0_57] : memref<576x128xbf16, #tpu.memory_space<vmem>>, vector<64x128xbf16>
      %cst_58 = arith.constant dense<0.000000e+00> : vector<64x128xf32>
      %90 = tpu.matmul %88, %89, %cst_58 {dimension_numbers = #tpu.dot_dimension_numbers<[1], [0], [0], [1], [0, 0, 1, 1], [], []>} : vector<64x64xbf16>, vector<64x128xbf16>, vector<64x128xf32> -> vector<64x128xf32>
      %91 = arith.addf %87, %90 : vector<64x128xf32>
      %c20 = arith.constant 20 : index
      %c0_59 = arith.constant 0 : index
      %92 = vector.load %arg13[%c20, %c0_59] : memref<128x64xbf16, #tpu.memory_space<vmem>>, vector<64x64xbf16>
      %c64 = arith.constant 64 : index
      %c0_60 = arith.constant 0 : index
      %93 = vector.load %arg5[%c64, %c0_60] : memref<576x128xbf16, #tpu.memory_space<vmem>>, vector<64x128xbf16>
      %cst_61 = arith.constant dense<0.000000e+00> : vector<64x128xf32>
      %94 = tpu.matmul %92, %93, %cst_61 {dimension_numbers = #tpu.dot_dimension_numbers<[1], [0], [0], [1], [0, 0, 1, 1], [], []>} : vector<64x64xbf16>, vector<64x128xbf16>, vector<64x128xf32> -> vector<64x128xf32>
      %95 = arith.addf %91, %94 : vector<64x128xf32>
      %c21 = arith.constant 21 : index
      %c0_62 = arith.constant 0 : index
      %96 = vector.load %arg13[%c21, %c0_62] : memref<128x64xbf16, #tpu.memory_space<vmem>>, vector<64x64xbf16>
      %c128 = arith.constant 128 : index
      %c0_63 = arith.constant 0 : index
      %97 = vector.load %arg5[%c128, %c0_63] : memref<576x128xbf16, #tpu.memory_space<vmem>>, vector<64x128xbf16>
      %cst_64 = arith.constant dense<0.000000e+00> : vector<64x128xf32>
      %98 = tpu.matmul %96, %97, %cst_64 {dimension_numbers = #tpu.dot_dimension_numbers<[1], [0], [0], [1], [0, 0, 1, 1], [], []>} : vector<64x64xbf16>, vector<64x128xbf16>, vector<64x128xf32> -> vector<64x128xf32>
      %99 = arith.addf %95, %98 : vector<64x128xf32>
      %c31 = arith.constant 31 : index
      %c0_65 = arith.constant 0 : index
      %100 = vector.load %arg13[%c31, %c0_65] : memref<128x64xbf16, #tpu.memory_space<vmem>>, vector<64x64xbf16>
      %c192 = arith.constant 192 : index
      %c0_66 = arith.constant 0 : index
      %101 = vector.load %arg5[%c192, %c0_66] : memref<576x128xbf16, #tpu.memory_space<vmem>>, vector<64x128xbf16>
      %cst_67 = arith.constant dense<0.000000e+00> : vector<64x128xf32>
      %102 = tpu.matmul %100, %101, %cst_67 {dimension_numbers = #tpu.dot_dimension_numbers<[1], [0], [0], [1], [0, 0, 1, 1], [], []>} : vector<64x64xbf16>, vector<64x128xbf16>, vector<64x128xf32> -> vector<64x128xf32>
      %103 = arith.addf %99, %102 : vector<64x128xf32>
      %c32_68 = arith.constant 32 : index
      %c0_69 = arith.constant 0 : index
      %104 = vector.load %arg13[%c32_68, %c0_69] : memref<128x64xbf16, #tpu.memory_space<vmem>>, vector<64x64xbf16>
      %c256_70 = arith.constant 256 : index
      %c0_71 = arith.constant 0 : index
      %105 = vector.load %arg5[%c256_70, %c0_71] : memref<576x128xbf16, #tpu.memory_space<vmem>>, vector<64x128xbf16>
      %cst_72 = arith.constant dense<0.000000e+00> : vector<64x128xf32>
      %106 = tpu.matmul %104, %105, %cst_72 {dimension_numbers = #tpu.dot_dimension_numbers<[1], [0], [0], [1], [0, 0, 1, 1], [], []>} : vector<64x64xbf16>, vector<64x128xbf16>, vector<64x128xf32> -> vector<64x128xf32>
      %107 = arith.addf %103, %106 : vector<64x128xf32>
      %c33 = arith.constant 33 : index
      %c0_73 = arith.constant 0 : index
      %108 = vector.load %arg13[%c33, %c0_73] : memref<128x64xbf16, #tpu.memory_space<vmem>>, vector<64x64xbf16>
      %c320 = arith.constant 320 : index
      %c0_74 = arith.constant 0 : index
      %109 = vector.load %arg5[%c320, %c0_74] : memref<576x128xbf16, #tpu.memory_space<vmem>>, vector<64x128xbf16>
      %cst_75 = arith.constant dense<0.000000e+00> : vector<64x128xf32>
      %110 = tpu.matmul %108, %109, %cst_75 {dimension_numbers = #tpu.dot_dimension_numbers<[1], [0], [0], [1], [0, 0, 1, 1], [], []>} : vector<64x64xbf16>, vector<64x128xbf16>, vector<64x128xf32> -> vector<64x128xf32>
      %111 = arith.addf %107, %110 : vector<64x128xf32>
      %c43 = arith.constant 43 : index
      %c0_76 = arith.constant 0 : index
      %112 = vector.load %arg13[%c43, %c0_76] : memref<128x64xbf16, #tpu.memory_space<vmem>>, vector<64x64xbf16>
      %c384 = arith.constant 384 : index
      %c0_77 = arith.constant 0 : index
      %113 = vector.load %arg5[%c384, %c0_77] : memref<576x128xbf16, #tpu.memory_space<vmem>>, vector<64x128xbf16>
      %cst_78 = arith.constant dense<0.000000e+00> : vector<64x128xf32>
      %114 = tpu.matmul %112, %113, %cst_78 {dimension_numbers = #tpu.dot_dimension_numbers<[1], [0], [0], [1], [0, 0, 1, 1], [], []>} : vector<64x64xbf16>, vector<64x128xbf16>, vector<64x128xf32> -> vector<64x128xf32>
      %115 = arith.addf %111, %114 : vector<64x128xf32>
      %c44 = arith.constant 44 : index
      %c0_79 = arith.constant 0 : index
      %116 = vector.load %arg13[%c44, %c0_79] : memref<128x64xbf16, #tpu.memory_space<vmem>>, vector<64x64xbf16>
      %c448 = arith.constant 448 : index
      %c0_80 = arith.constant 0 : index
      %117 = vector.load %arg5[%c448, %c0_80] : memref<576x128xbf16, #tpu.memory_space<vmem>>, vector<64x128xbf16>
      %cst_81 = arith.constant dense<0.000000e+00> : vector<64x128xf32>
      %118 = tpu.matmul %116, %117, %cst_81 {dimension_numbers = #tpu.dot_dimension_numbers<[1], [0], [0], [1], [0, 0, 1, 1], [], []>} : vector<64x64xbf16>, vector<64x128xbf16>, vector<64x128xf32> -> vector<64x128xf32>
      %119 = arith.addf %115, %118 : vector<64x128xf32>
      %c45 = arith.constant 45 : index
      %c0_82 = arith.constant 0 : index
      %120 = vector.load %arg13[%c45, %c0_82] : memref<128x64xbf16, #tpu.memory_space<vmem>>, vector<64x64xbf16>
      %c512 = arith.constant 512 : index
      %c0_83 = arith.constant 0 : index
      %121 = vector.load %arg5[%c512, %c0_83] : memref<576x128xbf16, #tpu.memory_space<vmem>>, vector<64x128xbf16>
      %cst_84 = arith.constant dense<0.000000e+00> : vector<64x128xf32>
      %122 = tpu.matmul %120, %121, %cst_84 {dimension_numbers = #tpu.dot_dimension_numbers<[1], [0], [0], [1], [0, 0, 1, 1], [], []>} : vector<64x64xbf16>, vector<64x128xbf16>, vector<64x128xf32> -> vector<64x128xf32>
      %123 = arith.addf %119, %122 : vector<64x128xf32>
      %c0_85 = arith.constant 0 : index
      %c0_86 = arith.constant 0 : index
      %124 = vector.load %arg8[%c0_85, %c0_86] : memref<64x1xf32, #tpu.memory_space<vmem>>, vector<64x1xf32>
      %125 = vector.broadcast %124 : vector<64x1xf32> to vector<64x128xf32>
      %126 = arith.mulf %123, %125 : vector<64x128xf32>
      %cst_87 = arith.constant dense<0.000000e+00> : vector<128xf32>
      %127 = vector.multi_reduction <add>, %126, %cst_87 [0] : vector<64x128xf32> to vector<128xf32>
      %128 = vector.shape_cast %127 : vector<128xf32> to vector<1x128xf32>
      %cst_88 = arith.constant 2.000000e-02 : f32
      %129 = vector.broadcast %cst_88 : f32 to vector<1x128xf32>
      %130 = arith.mulf %128, %129 : vector<1x128xf32>
      %131 = arith.mulf %123, %123 : vector<64x128xf32>
      %132 = vector.broadcast %124 : vector<64x1xf32> to vector<64x128xf32>
      %133 = arith.mulf %131, %132 : vector<64x128xf32>
      %cst_89 = arith.constant dense<0.000000e+00> : vector<128xf32>
      %134 = vector.multi_reduction <add>, %133, %cst_89 [0] : vector<64x128xf32> to vector<128xf32>
      %135 = vector.shape_cast %134 : vector<128xf32> to vector<1x128xf32>
      %cst_90 = arith.constant 2.000000e-02 : f32
      %136 = vector.broadcast %cst_90 : f32 to vector<1x128xf32>
      %137 = arith.mulf %135, %136 : vector<1x128xf32>
      %138 = arith.mulf %130, %130 : vector<1x128xf32>
      %139 = arith.subf %137, %138 : vector<1x128xf32>
      %cst_91 = arith.constant 0.000000e+00 : f32
      %140 = vector.broadcast %cst_91 : f32 to vector<1x128xf32>
      %141 = arith.maximumf %139, %140 : vector<1x128xf32>
      %cst_92 = arith.constant 9.99999974E-6 : f32
      %142 = vector.broadcast %cst_92 : f32 to vector<1x128xf32>
      %143 = arith.addf %141, %142 : vector<1x128xf32>
      %144 = math.rsqrt %143 : vector<1x128xf32>
      %c0_93 = arith.constant 0 : index
      %c0_94 = arith.constant 0 : index
      %145 = vector.load %arg6[%c0_93, %c0_94] : memref<1x128xf32, #tpu.memory_space<vmem>>, vector<1x128xf32>
      %146 = arith.mulf %144, %145 : vector<1x128xf32>
      %c0_95 = arith.constant 0 : index
      %c0_96 = arith.constant 0 : index
      %147 = vector.load %arg7[%c0_95, %c0_96] : memref<1x128xf32, #tpu.memory_space<vmem>>, vector<1x128xf32>
      %148 = arith.mulf %130, %146 : vector<1x128xf32>
      %149 = arith.subf %147, %148 : vector<1x128xf32>
      %150 = vector.broadcast %146 : vector<1x128xf32> to vector<64x128xf32>
      %151 = arith.mulf %123, %150 : vector<64x128xf32>
      %152 = vector.broadcast %149 : vector<1x128xf32> to vector<64x128xf32>
      %153 = arith.addf %151, %152 : vector<64x128xf32>
      %cst_97 = arith.constant 0.000000e+00 : f32
      %154 = vector.broadcast %cst_97 : f32 to vector<64x128xf32>
      %155 = arith.maximumf %153, %154 : vector<64x128xf32>
      %c0_98 = arith.constant 0 : index
      %c0_99 = arith.constant 0 : index
      %156 = vector.load %arg9[%c0_98, %c0_99] : memref<64x128xf32, #tpu.memory_space<vmem>>, vector<64x128xf32>
      tpu.vector_store %arg9[%c0_98, %c0_99], %155 {strides = array<i32>} : memref<64x128xf32, #tpu.memory_space<vmem>>, vector<64x128xf32>,
    } else {
    }
    return
  }
  func.func @transform_0(%arg0: i32) -> (i32, i32) {
    %c0_i32 = arith.constant 0 : i32
    %c0_i32_0 = arith.constant 0 : i32
    return %arg0, %c0_i32 : i32, i32
  }
  func.func @transform_1(%arg0: i32) -> (i32, i32) {
    %c0_i32 = arith.constant 0 : i32
    %c0_i32_0 = arith.constant 0 : i32
    %c0_i32_1 = arith.constant 0 : i32
    return %c0_i32, %c0_i32_0 : i32, i32
  }
  func.func @transform_2(%arg0: i32) -> (i32, i32) {
    %c0_i32 = arith.constant 0 : i32
    %c0_i32_0 = arith.constant 0 : i32
    %c0_i32_1 = arith.constant 0 : i32
    return %c0_i32, %c0_i32_0 : i32, i32
  }
  func.func @transform_3(%arg0: i32) -> (i32, i32) {
    %c0_i32 = arith.constant 0 : i32
    %c0_i32_0 = arith.constant 0 : i32
    %c0_i32_1 = arith.constant 0 : i32
    return %c0_i32, %c0_i32_0 : i32, i32
  }
  func.func @transform_4(%arg0: i32) -> (i32, i32) {
    %c0_i32 = arith.constant 0 : i32
    %c0_i32_0 = arith.constant 0 : i32
    %c0_i32_1 = arith.constant 0 : i32
    return %c0_i32, %c0_i32_0 : i32, i32
  }
  func.func @transform_5(%arg0: i32) -> (i32, i32) {
    %c0_i32 = arith.constant 0 : i32
    %c0_i32_0 = arith.constant 0 : i32
    %c0_i32_1 = arith.constant 0 : i32
    return %c0_i32, %c0_i32_0 : i32, i32
  }
  func.func @transform_6(%arg0: i32) -> (i32, i32) {
    %c0_i32 = arith.constant 0 : i32
    %c0_i32_0 = arith.constant 0 : i32
    %c0_i32_1 = arith.constant 0 : i32
    return %c0_i32, %c0_i32_0 : i32, i32
  }
  func.func @transform_7(%arg0: i32) -> (i32, i32) {
    %c0_i32 = arith.constant 0 : i32
    %c0_i32_0 = arith.constant 0 : i32
    %c0_i32_1 = arith.constant 0 : i32
    return %c0_i32, %c0_i32_0 : i32, i32
  }
  func.func @transform_8(%arg0: i32) -> (i32, i32) {
    %c0_i32 = arith.constant 0 : i32
    %c0_i32_0 = arith.constant 0 : i32
    %c0_i32_1 = arith.constant 0 : i32
    return %c0_i32, %c0_i32_0 : i32, i32
  }
}

</mosaic_0001>

<llo_original>
// kernel: conv_block1.1
$region0: #{conv_block1.1}
  #allocation0 [shape = 'u32[]', space=smem, size = 0x4, offset = 0x4, fixed_abs, tag = 'smem constant byte address 0x4 - core index']
  #allocation1 [shape = 'u32[144,128]{1,0:T(1,128)}', space=vmem, size = 0x12000, scoped, tag = 'internal scratch']
  #allocation2 [shape = 'bf16[272,64]{1,0:T(16,128)(2,1)}', space=vmem, size = 0x11000, scoped, tag = 'scratch operand']
  #allocation3 [shape = 'f32[1,64]{1,0:T(1,128)}', space=vmem, size = 0x200, scoped, tag = 'scratch operand']
  #allocation4 [shape = 'f32[1,64]{1,0:T(1,128)}', space=vmem, size = 0x200, scoped, tag = 'scratch operand']
  #allocation5 [shape = 'bf16[128,64]{1,0:T(16,128)(2,1)}', space=vmem, size = 0x8000, scoped, tag = 'scratch operand']
  %s0 = inlined_call_operand.vmem [shape: bf16[272,512], index: 0, kind: input, shape index: {}]
  %s1 = inlined_call_operand.vmem [shape: bf16[512,64], index: 1, kind: input, shape index: {}]
  %s2 = inlined_call_operand.vmem [shape: f32[1,64], index: 2, kind: input, shape index: {}]
  %s3 = inlined_call_operand.vmem [shape: f32[1,64], index: 3, kind: input, shape index: {}]
  %s4 = inlined_call_operand.vmem [shape: bf16[576,128], index: 4, kind: input, shape index: {}]
  %s5 = inlined_call_operand.vmem [shape: f32[1,128], index: 5, kind: input, shape index: {}]
  %s6 = inlined_call_operand.vmem [shape: f32[1,128], index: 6, kind: input, shape index: {}]
  %s7 = inlined_call_operand.vmem [shape: f32[64,1], index: 7, kind: input, shape index: {}]
  %s8 = inlined_call_operand.vmem [shape: f32[64,128], index: 8, kind: output, shape index: {}]
  %s9 = sld [smem:[#allocation0]]
  $region50: #{conv_block1.1} parent=0
    _
  %s11 = ssub.s32 1, %s9
  %s12 = scalar_select 0, %s11, %s9
  // Predicated region
  $region2: #{conv_block1.1} parent=0 // pred_check
    _
  $region3: #{conv_block1.1} parent=0 // pred_check_branch
    %14 = sbr.rel (0) target = $region5
  $region4: #{conv_block1.1} parent=0 // pred_region
    _
  $region5: #{conv_block1.1} parent=0 // pred_fallthru
    _
  // Predicated region
  $region6: #{conv_block1.1} parent=0 // pred_check
    _
  $region7: #{conv_block1.1} parent=0 // pred_check_branch
    %16 = sbr.rel (0) target = $region9
  $region8: #{conv_block1.1} parent=0 // pred_region
    _
  $region9: #{conv_block1.1} parent=0 // pred_fallthru
    _
  // Predicated region
  $region10: #{conv_block1.1} parent=0 // pred_check
    _
  $region11: #{conv_block1.1} parent=0 // pred_check_branch
    %18 = sbr.rel (0) target = $region13
  $region12: #{conv_block1.1} parent=0 // pred_region
    _
  $region13: #{conv_block1.1} parent=0 // pred_fallthru
    _
  // Predicated region
  $region14: #{conv_block1.1} parent=0 // pred_check
    _
  $region15: #{conv_block1.1} parent=0 // pred_check_branch
    %20 = sbr.rel (0) target = $region17
  $region16: #{conv_block1.1} parent=0 // pred_region
    _
  $region17: #{conv_block1.1} parent=0 // pred_fallthru
    _
  // Predicated region
  $region18: #{conv_block1.1} parent=0 // pred_check
    _
  $region19: #{conv_block1.1} parent=0 // pred_check_branch
    %22 = sbr.rel (0) target = $region21
  $region20: #{conv_block1.1} parent=0 // pred_region
    _
  $region21: #{conv_block1.1} parent=0 // pred_fallthru
    _
  // Predicated region
  $region22: #{conv_block1.1} parent=0 // pred_check
    _
  $region23: #{conv_block1.1} parent=0 // pred_check_branch
    %24 = sbr.rel (0) target = $region25
  $region24: #{conv_block1.1} parent=0 // pred_region
    _
  $region25: #{conv_block1.1} parent=0 // pred_fallthru
    _
  // Predicated region
  $region26: #{conv_block1.1} parent=0 // pred_check
    _
  $region27: #{conv_block1.1} parent=0 // pred_check_branch
    %26 = sbr.rel (0) target = $region29
  $region28: #{conv_block1.1} parent=0 // pred_region
    _
  $region29: #{conv_block1.1} parent=0 // pred_fallthru
    _
  // Predicated region
  $region30: #{conv_block1.1} parent=0 // pred_check
    _
  $region31: #{conv_block1.1} parent=0 // pred_check_branch
    %28 = sbr.rel (0) target = $region33
  $region32: #{conv_block1.1} parent=0 // pred_region
    _
  $region33: #{conv_block1.1} parent=0 // pred_fallthru
    _
  %p30 = scmp.eq.s32.totalorder 0, 0
  // Predicated region
  $region34: #{conv_block1.1} parent=0 // pred_check
    %p31 = pneg %p30
  $region35: #{conv_block1.1} parent=0 // pred_check_branch
    %33 = sbr.rel (%p31) target = $region37
  $region36: #{conv_block1.1} parent=0 // pred_region
    %vm34 = vcmask 516096
    %35 = vst.msk [vmem:[#allocation3] sm:$0x1] %vm34, 0.0
    %36 = vst.msk [vmem:[#allocation4] sm:$0x1] %vm34, 0.0
  $region37: #{conv_block1.1} parent=0 // pred_fallthru
    _
  %v37 = vld [vmem:[%s0] sm:$0xff]
  %v38 = vld [vmem:[%s0 + $0x8] sm:$0xff]
  %v39 = vld [vmem:[%s0 + $0x10] sm:$0xff]
  %v40 = vld [vmem:[%s0 + $0x18] sm:$0xff]
  %v41 = vld [vmem:[%s0 + $0x20] sm:$0xff]
  %v42 = vld [vmem:[%s0 + $0x28] sm:$0xff]
  %v43 = vld [vmem:[%s0 + $0x30] sm:$0xff]
  %v44 = vld [vmem:[%s0 + $0x38] sm:$0xff]
  %v45 = vld [vmem:[%s0 + $0x40] sm:$0xff]
  %v46 = vld [vmem:[%s0 + $0x48] sm:$0xff]
  %v47 = vld [vmem:[%s0 + $0x50] sm:$0xff]
  %v48 = vld [vmem:[%s0 + $0x58] sm:$0xff]
  %v49 = vld [vmem:[%s0 + $0x60] sm:$0xff]
  %v50 = vld [vmem:[%s0 + $0x68] sm:$0xff]
  %v51 = vld [vmem:[%s0 + $0x70] sm:$0xff]
  %v52 = vld [vmem:[%s0 + $0x78] sm:$0xff]
  %v53 = vld [vmem:[%s0 + $0x80] sm:$0xff]
  %v54 = vld [vmem:[%s0 + $0x88] sm:$0xff]
  %v55 = vld [vmem:[%s0 + $0x90] sm:$0xff]
  %v56 = vld [vmem:[%s0 + $0x98] sm:$0xff]
  %v57 = vld [vmem:[%s0 + $0xa0] sm:$0xff]
  %v58 = vld [vmem:[%s0 + $0xa8] sm:$0xff]
  %v59 = vld [vmem:[%s0 + $0xb0] sm:$0xff]
  %v60 = vld [vmem:[%s0 + $0xb8] sm:$0xff]
  %v61 = vld [vmem:[%s0 + $0xc0] sm:$0xff]
  %v62 = vld [vmem:[%s0 + $0xc8] sm:$0xff]
  %v63 = vld [vmem:[%s0 + $0xd0] sm:$0xff]
  %v64 = vld [vmem:[%s0 + $0xd8] sm:$0xff]
  %v65 = vld [vmem:[%s0 + $0xe0] sm:$0xff]
  %v66 = vld [vmem:[%s0 + $0xe8] sm:$0xff]
  %v67 = vld [vmem:[%s0 + $0xf0] sm:$0xff]
  %v68 = vld [vmem:[%s0 + $0xf8] sm:$0xff]
  %v69 = vld [vmem:[%s0 + $0x100] sm:$0xff]
  %v70 = vld [vmem:[%s0 + $0x108] sm:$0xff]
  %v71 = vld [vmem:[%s0 + $0x110] sm:$0xff]
  %v72 = vld [vmem:[%s0 + $0x118] sm:$0xff]
  %v73 = vld [vmem:[%s0 + $0x120] sm:$0xff]
  %v74 = vld [vmem:[%s0 + $0x128] sm:$0xff]
  %v75 = vld [vmem:[%s0 + $0x130] sm:$0xff]
  %v76 = vld [vmem:[%s0 + $0x138] sm:$0xff]
  %v77 = vld [vmem:[%s0 + $0x140] sm:$0xff]
  %v78 = vld [vmem:[%s0 + $0x148] sm:$0xff]
  %v79 = vld [vmem:[%s0 + $0x150] sm:$0xff]
  %v80 = vld [vmem:[%s0 + $0x158] sm:$0xff]
  %v81 = vld [vmem:[%s0 + $0x160] sm:$0xff]
  %v82 = vld [vmem:[%s0 + $0x168] sm:$0xff]
  %v83 = vld [vmem:[%s0 + $0x170] sm:$0xff]
  %v84 = vld [vmem:[%s0 + $0x178] sm:$0xff]
  %v85 = vld [vmem:[%s0 + $0x180] sm:$0xff]
  %v86 = vld [vmem:[%s0 + $0x188] sm:$0xff]
  %v87 = vld [vmem:[%s0 + $0x190] sm:$0xff]
  %v88 = vld [vmem:[%s0 + $0x198] sm:$0xff]
  %v89 = vld [vmem:[%s0 + $0x1a0] sm:$0xff]
  %v90 = vld [vmem:[%s0 + $0x1a8] sm:$0xff]
  %v91 = vld [vmem:[%s0 + $0x1b0] sm:$0xff]
  %v92 = vld [vmem:[%s0 + $0x1b8] sm:$0xff]
  %v93 = vld [vmem:[%s0 + $0x1c0] sm:$0xff]
  %v94 = vld [vmem:[%s0 + $0x1c8] sm:$0xff]
  %v95 = vld [vmem:[%s0 + $0x1d0] sm:$0xff]
  %v96 = vld [vmem:[%s0 + $0x1d8] sm:$0xff]
  %v97 = vld [vmem:[%s0 + $0x1e0] sm:$0xff]
  %v98 = vld [vmem:[%s0 + $0x1e8] sm:$0xff]
  %v99 = vld [vmem:[%s0 + $0x1f0] sm:$0xff]
  %v100 = vld [vmem:[%s0 + $0x1f8] sm:$0xff]
  %v101 = vld [vmem:[%s0 + $0x200] sm:$0xff]
  %v102 = vld [vmem:[%s0 + $0x208] sm:$0xff]
  %v103 = vld [vmem:[%s0 + $0x210] sm:$0xff]
  %v104 = vld [vmem:[%s0 + $0x218] sm:$0xff]
  %v105 = vld [vmem:[%s1] sm:$0xf]
  %v106 = vld [vmem:[%s1 + $0x4] sm:$0xf]
  %v107 = vld [vmem:[%s1 + $0x8] sm:$0xf]
  %v108 = vld [vmem:[%s1 + $0xc] sm:$0xf]
  %v109 = vld [vmem:[%s1 + $0x10] sm:$0xf]
  %v110 = vld [vmem:[%s1 + $0x14] sm:$0xf]
  %v111 = vld [vmem:[%s1 + $0x18] sm:$0xf]
  %v112 = vld [vmem:[%s1 + $0x1c] sm:$0xf]
  %v113 = vld [vmem:[%s1 + $0x20] sm:$0xf]
  %v114 = vld [vmem:[%s1 + $0x24] sm:$0xf]
  %v115 = vld [vmem:[%s1 + $0x28] sm:$0xf]
  %v116 = vld [vmem:[%s1 + $0x2c] sm:$0xf]
  %v117 = vld [vmem:[%s1 + $0x30] sm:$0xf]
  %v118 = vld [vmem:[%s1 + $0x34] sm:$0xf]
  %v119 = vld [vmem:[%s1 + $0x38] sm:$0xf]
  %v120 = vld [vmem:[%s1 + $0x3c] sm:$0xf]
  %v121 = vld [vmem:[%s1 + $0x40] sm:$0xf]
  %v122 = vld [vmem:[%s1 + $0x44] sm:$0xf]
  %v123 = vld [vmem:[%s1 + $0x48] sm:$0xf]
  %v124 = vld [vmem:[%s1 + $0x4c] sm:$0xf]
  %v125 = vld [vmem:[%s1 + $0x50] sm:$0xf]
  %v126 = vld [vmem:[%s1 + $0x54] sm:$0xf]
  %v127 = vld [vmem:[%s1 + $0x58] sm:$0xf]
  %v128 = vld [vmem:[%s1 + $0x5c] sm:$0xf]
  %v129 = vld [vmem:[%s1 + $0x60] sm:$0xf]
  %v130 = vld [vmem:[%s1 + $0x64] sm:$0xf]
  %v131 = vld [vmem:[%s1 + $0x68] sm:$0xf]
  %v132 = vld [vmem:[%s1 + $0x6c] sm:$0xf]
  %v133 = vld [vmem:[%s1 + $0x70] sm:$0xf]
  %v134 = vld [vmem:[%s1 + $0x74] sm:$0xf]
  %v135 = vld [vmem:[%s1 + $0x78] sm:$0xf]
  %v136 = vld [vmem:[%s1 + $0x7c] sm:$0xf]
  %v137 = vld [vmem:[%s1 + $0x80] sm:$0xf]
  %v138 = vld [vmem:[%s1 + $0x84] sm:$0xf]
  %v139 = vld [vmem:[%s1 + $0x88] sm:$0xf]
  %v140 = vld [vmem:[%s1 + $0x8c] sm:$0xf]
  %v141 = vld [vmem:[%s1 + $0x90] sm:$0xf]
  %v142 = vld [vmem:[%s1 + $0x94] sm:$0xf]
  %v143 = vld [vmem:[%s1 + $0x98] sm:$0xf]
  %v144 = vld [vmem:[%s1 + $0x9c] sm:$0xf]
  %v145 = vld [vmem:[%s1 + $0xa0] sm:$0xf]
  %v146 = vld [vmem:[%s1 + $0xa4] sm:$0xf]
  %v147 = vld [vmem:[%s1 + $0xa8] sm:$0xf]
  %v148 = vld [vmem:[%s1 + $0xac] sm:$0xf]
  %v149 = vld [vmem:[%s1 + $0xb0] sm:$0xf]
  %v150 = vld [vmem:[%s1 + $0xb4] sm:$0xf]
  %v151 = vld [vmem:[%s1 + $0xb8] sm:$0xf]
  %v152 = vld [vmem:[%s1 + $0xbc] sm:$0xf]
  %v153 = vld [vmem:[%s1 + $0xc0] sm:$0xf]
  %v154 = vld [vmem:[%s1 + $0xc4] sm:$0xf]
  %v155 = vld [vmem:[%s1 + $0xc8] sm:$0xf]
  %v156 = vld [vmem:[%s1 + $0xcc] sm:$0xf]
  %v157 = vld [vmem:[%s1 + $0xd0] sm:$0xf]
  %v158 = vld [vmem:[%s1 + $0xd4] sm:$0xf]
  %v159 = vld [vmem:[%s1 + $0xd8] sm:$0xf]
  %v160 = vld [vmem:[%s1 + $0xdc] sm:$0xf]
  %v161 = vld [vmem:[%s1 + $0xe0] sm:$0xf]
  %v162 = vld [vmem:[%s1 + $0xe4] sm:$0xf]
  %v163 = vld [vmem:[%s1 + $0xe8] sm:$0xf]
  %v164 = vld [vmem:[%s1 + $0xec] sm:$0xf]
  %v165 = vld [vmem:[%s1 + $0xf0] sm:$0xf]
  %v166 = vld [vmem:[%s1 + $0xf4] sm:$0xf]
  %v167 = vld [vmem:[%s1 + $0xf8] sm:$0xf]
  %v168 = vld [vmem:[%s1 + $0xfc] sm:$0xf]
  %v237 = vunpack.c.l.b16 %v37
  %v238 = vunpack.c.h.b16 %v37
  %v239 = vunpack.c.l.b16 %v38
  %v240 = vunpack.c.h.b16 %v38
  %v241 = vunpack.c.l.b16 %v39
  %v242 = vunpack.c.h.b16 %v39
  %v243 = vunpack.c.l.b16 %v40
  %v244 = vunpack.c.h.b16 %v40
  %v245 = vunpack.c.l.b16 %v41
  %v246 = vunpack.c.h.b16 %v41
  %v247 = vunpack.c.l.b16 %v42
  %v248 = vunpack.c.h.b16 %v42
  %v249 = vunpack.c.l.b16 %v43
  %v250 = vunpack.c.h.b16 %v43
  %v251 = vunpack.c.l.b16 %v44
  %v252 = vunpack.c.h.b16 %v44
  %v253 = vunpack.c.l.b16 %v45
  %v254 = vunpack.c.h.b16 %v45
  %v255 = vunpack.c.l.b16 %v46
  %v256 = vunpack.c.h.b16 %v46
  %v257 = vunpack.c.l.b16 %v47
  %v258 = vunpack.c.h.b16 %v47
  %v259 = vunpack.c.l.b16 %v48
  %v260 = vunpack.c.h.b16 %v48
  %v261 = vunpack.c.l.b16 %v49
  %v262 = vunpack.c.h.b16 %v49
  %v263 = vunpack.c.l.b16 %v50
  %v264 = vunpack.c.h.b16 %v50
  %v265 = vunpack.c.l.b16 %v51
  %v266 = vunpack.c.h.b16 %v51
  %v267 = vunpack.c.l.b16 %v52
  %v268 = vunpack.c.h.b16 %v52
  %v269 = vunpack.c.l.b16 %v53
  %v270 = vunpack.c.h.b16 %v53
  %v271 = vunpack.c.l.b16 %v54
  %v272 = vunpack.c.h.b16 %v54
  %v273 = vunpack.c.l.b16 %v55
  %v274 = vunpack.c.h.b16 %v55
  %v275 = vunpack.c.l.b16 %v56
  %v276 = vunpack.c.h.b16 %v56
  %v277 = vunpack.c.l.b16 %v57
  %v278 = vunpack.c.h.b16 %v57
  %v279 = vunpack.c.l.b16 %v58
  %v280 = vunpack.c.h.b16 %v58
  %v281 = vunpack.c.l.b16 %v59
  %v282 = vunpack.c.h.b16 %v59
  %v283 = vunpack.c.l.b16 %v60
  %v284 = vunpack.c.h.b16 %v60
  %v285 = vunpack.c.l.b16 %v61
  %v286 = vunpack.c.h.b16 %v61
  %v287 = vunpack.c.l.b16 %v62
  %v288 = vunpack.c.h.b16 %v62
  %v289 = vunpack.c.l.b16 %v63
  %v290 = vunpack.c.h.b16 %v63
  %v291 = vunpack.c.l.b16 %v64
  %v292 = vunpack.c.h.b16 %v64
  %v293 = vunpack.c.l.b16 %v65
  %v294 = vunpack.c.h.b16 %v65
  %v295 = vunpack.c.l.b16 %v66
  %v296 = vunpack.c.h.b16 %v66
  %v297 = vunpack.c.l.b16 %v67
  %v298 = vunpack.c.h.b16 %v67
  %v299 = vunpack.c.l.b16 %v68
  %v300 = vunpack.c.h.b16 %v68
  %v301 = vunpack.c.l.b16 %v69
  %v302 = vunpack.c.h.b16 %v69
  %v303 = vunpack.c.l.b16 %v70
  %v304 = vunpack.c.h.b16 %v70
  %v305 = vunpack.c.l.b16 %v71
  %v306 = vunpack.c.h.b16 %v71
  %v307 = vunpack.c.l.b16 %v72
  %v308 = vunpack.c.h.b16 %v72
  %v309 = vunpack.c.l.b16 %v73
  %v310 = vunpack.c.h.b16 %v73
  %v311 = vunpack.c.l.b16 %v74
  %v312 = vunpack.c.h.b16 %v74
  %v313 = vunpack.c.l.b16 %v75
  %v314 = vunpack.c.h.b16 %v75
  %v315 = vunpack.c.l.b16 %v76
  %v316 = vunpack.c.h.b16 %v76
  %v317 = vunpack.c.l.b16 %v77
  %v318 = vunpack.c.h.b16 %v77
  %v319 = vunpack.c.l.b16 %v78
  %v320 = vunpack.c.h.b16 %v78
  %v321 = vunpack.c.l.b16 %v79
  %v322 = vunpack.c.h.b16 %v79
  %v323 = vunpack.c.l.b16 %v80
  %v324 = vunpack.c.h.b16 %v80
  %v325 = vunpack.c.l.b16 %v81
  %v326 = vunpack.c.h.b16 %v81
  %v327 = vunpack.c.l.b16 %v82
  %v328 = vunpack.c.h.b16 %v82
  %v329 = vunpack.c.l.b16 %v83
  %v330 = vunpack.c.h.b16 %v83
  %v331 = vunpack.c.l.b16 %v84
  %v332 = vunpack.c.h.b16 %v84
  %v333 = vunpack.c.l.b16 %v85
  %v334 = vunpack.c.h.b16 %v85
  %v335 = vunpack.c.l.b16 %v86
  %v336 = vunpack.c.h.b16 %v86
  %v337 = vunpack.c.l.b16 %v87
  %v338 = vunpack.c.h.b16 %v87
  %v339 = vunpack.c.l.b16 %v88
  %v340 = vunpack.c.h.b16 %v88
  %v341 = vunpack.c.l.b16 %v89
  %v342 = vunpack.c.h.b16 %v89
  %v343 = vunpack.c.l.b16 %v90
  %v344 = vunpack.c.h.b16 %v90
  %v345 = vunpack.c.l.b16 %v91
  %v346 = vunpack.c.h.b16 %v91
  %v347 = vunpack.c.l.b16 %v92
  %v348 = vunpack.c.h.b16 %v92
  %v349 = vunpack.c.l.b16 %v93
  %v350 = vunpack.c.h.b16 %v93
  %v351 = vunpack.c.l.b16 %v94
  %v352 = vunpack.c.h.b16 %v94
  %v353 = vunpack.c.l.b16 %v95
  %v354 = vunpack.c.h.b16 %v95
  %v355 = vunpack.c.l.b16 %v96
  %v356 = vunpack.c.h.b16 %v96
  %v357 = vunpack.c.l.b16 %v97
  %v358 = vunpack.c.h.b16 %v97
  %v359 = vunpack.c.l.b16 %v98
  %v360 = vunpack.c.h.b16 %v98
  %v361 = vunpack.c.l.b16 %v99
  %v362 = vunpack.c.h.b16 %v99
  %v363 = vunpack.c.l.b16 %v100
  %v364 = vunpack.c.h.b16 %v100
  %v365 = vunpack.c.l.b16 %v101
  %v366 = vunpack.c.h.b16 %v101
  %v367 = vunpack.c.l.b16 %v102
  %v368 = vunpack.c.h.b16 %v102
  %v369 = vunpack.c.l.b16 %v103
  %v370 = vunpack.c.h.b16 %v103
  %v371 = vunpack.c.l.b16 %v104
  %v372 = vunpack.c.h.b16 %v104
  %v373 = vpack.c.b16 %v241, %v237
  %v374 = vpack.c.b16 %v242, %v238
  %v375 = vpack.c.b16 %v243, %v239
  %v376 = vpack.c.b16 %v244, %v240
  %v377 = vpack.c.b16 %v249, %v245
  %v378 = vpack.c.b16 %v250, %v246
  %v379 = vpack.c.b16 %v251, %v247
  %v380 = vpack.c.b16 %v252, %v248
  %v381 = vpack.c.b16 %v257, %v253
  %v382 = vpack.c.b16 %v258, %v254
  %v383 = vpack.c.b16 %v259, %v255
  %v384 = vpack.c.b16 %v260, %v256
  %v385 = vpack.c.b16 %v265, %v261
  %v386 = vpack.c.b16 %v266, %v262
  %v387 = vpack.c.b16 %v267, %v263
  %v388 = vpack.c.b16 %v268, %v264
  %v389 = vpack.c.b16 %v273, %v269
  %v390 = vpack.c.b16 %v274, %v270
  %v391 = vpack.c.b16 %v275, %v271
  %v392 = vpack.c.b16 %v276, %v272
  %v393 = vpack.c.b16 %v281, %v277
  %v394 = vpack.c.b16 %v282, %v278
  %v395 = vpack.c.b16 %v283, %v279
  %v396 = vpack.c.b16 %v284, %v280
  %v397 = vpack.c.b16 %v289, %v285
  %v398 = vpack.c.b16 %v290, %v286
  %v399 = vpack.c.b16 %v291, %v287
  %v400 = vpack.c.b16 %v292, %v288
  %v401 = vpack.c.b16 %v297, %v293
  %v402 = vpack.c.b16 %v298, %v294
  %v403 = vpack.c.b16 %v299, %v295
  %v404 = vpack.c.b16 %v300, %v296
  %v405 = vpack.c.b16 %v305, %v301
  %v406 = vpack.c.b16 %v306, %v302
  %v407 = vpack.c.b16 %v307, %v303
  %v408 = vpack.c.b16 %v308, %v304
  %v409 = vpack.c.b16 %v313, %v309
  %v410 = vpack.c.b16 %v314, %v310
  %v411 = vpack.c.b16 %v315, %v311
  %v412 = vpack.c.b16 %v316, %v312
  %v413 = vpack.c.b16 %v321, %v317
  %v414 = vpack.c.b16 %v322, %v318
  %v415 = vpack.c.b16 %v323, %v319
  %v416 = vpack.c.b16 %v324, %v320
  %v417 = vpack.c.b16 %v329, %v325
  %v418 = vpack.c.b16 %v330, %v326
  %v419 = vpack.c.b16 %v331, %v327
  %v420 = vpack.c.b16 %v332, %v328
  %v421 = vpack.c.b16 %v337, %v333
  %v422 = vpack.c.b16 %v338, %v334
  %v423 = vpack.c.b16 %v339, %v335
  %v424 = vpack.c.b16 %v340, %v336
  %v425 = vpack.c.b16 %v345, %v341
  %v426 = vpack.c.b16 %v346, %v342
  %v427 = vpack.c.b16 %v347, %v343
  %v428 = vpack.c.b16 %v348, %v344
  %v429 = vpack.c.b16 %v353, %v349
  %v430 = vpack.c.b16 %v354, %v350
  %v431 = vpack.c.b16 %v355, %v351
  %v432 = vpack.c.b16 %v356, %v352
  %v433 = vpack.c.b16 %v361, %v357
  %v434 = vpack.c.b16 %v362, %v358
  %v435 = vpack.c.b16 %v363, %v359
  %v436 = vpack.c.b16 %v364, %v360
  %v437 = vpack.c.b16 %v369, %v365
  %v438 = vpack.c.b16 %v370, %v366
  %v439 = vpack.c.b16 %v371, %v367
  %v440 = vpack.c.b16 %v372, %v368
  %v573 = vunpack.c.l.b16 %v105
  %v574 = vunpack.c.l.b16 %v106
  %v575 = vunpack.c.l.b16 %v107
  %v576 = vunpack.c.l.b16 %v108
  %v577 = vunpack.c.l.b16 %v109
  %v578 = vunpack.c.l.b16 %v110
  %v579 = vunpack.c.l.b16 %v111
  %v580 = vunpack.c.l.b16 %v112
  %v581 = vunpack.c.l.b16 %v113
  %v582 = vunpack.c.l.b16 %v114
  %v583 = vunpack.c.l.b16 %v115
  %v584 = vunpack.c.l.b16 %v116
  %v585 = vunpack.c.l.b16 %v117
  %v586 = vunpack.c.l.b16 %v118
  %v587 = vunpack.c.l.b16 %v119
  %v588 = vunpack.c.l.b16 %v120
  %v589 = vunpack.c.l.b16 %v121
  %v590 = vunpack.c.l.b16 %v122
  %v591 = vunpack.c.l.b16 %v123
  %v592 = vunpack.c.l.b16 %v124
  %v593 = vunpack.c.l.b16 %v125
  %v594 = vunpack.c.l.b16 %v126
  %v595 = vunpack.c.l.b16 %v127
  %v596 = vunpack.c.l.b16 %v128
  %v597 = vunpack.c.l.b16 %v129
  %v598 = vunpack.c.l.b16 %v130
  %v599 = vunpack.c.l.b16 %v131
  %v600 = vunpack.c.l.b16 %v132
  %v601 = vunpack.c.l.b16 %v133
  %v602 = vunpack.c.l.b16 %v134
  %v603 = vunpack.c.l.b16 %v135
  %v604 = vunpack.c.l.b16 %v136
  %v605 = vunpack.c.l.b16 %v137
  %v606 = vunpack.c.l.b16 %v138
  %v607 = vunpack.c.l.b16 %v139
  %v608 = vunpack.c.l.b16 %v140
  %v609 = vunpack.c.l.b16 %v141
  %v610 = vunpack.c.l.b16 %v142
  %v611 = vunpack.c.l.b16 %v143
  %v612 = vunpack.c.l.b16 %v144
  %v613 = vunpack.c.l.b16 %v145
  %v614 = vunpack.c.l.b16 %v146
  %v615 = vunpack.c.l.b16 %v147
  %v616 = vunpack.c.l.b16 %v148
  %v617 = vunpack.c.l.b16 %v149
  %v618 = vunpack.c.l.b16 %v150
  %v619 = vunpack.c.l.b16 %v151
  %v620 = vunpack.c.l.b16 %v152
  %v621 = vunpack.c.l.b16 %v153
  %v622 = vunpack.c.l.b16 %v154
  %v623 = vunpack.c.l.b16 %v155
  %v624 = vunpack.c.l.b16 %v156
  %v625 = vunpack.c.l.b16 %v157
  %v626 = vunpack.c.l.b16 %v158
  %v627 = vunpack.c.l.b16 %v159
  %v628 = vunpack.c.l.b16 %v160
  %v629 = vunpack.c.l.b16 %v161
  %v630 = vunpack.c.l.b16 %v162
  %v631 = vunpack.c.l.b16 %v163
  %v632 = vunpack.c.l.b16 %v164
  %v633 = vunpack.c.l.b16 %v165
  %v634 = vunpack.c.l.b16 %v166
  %v635 = vunpack.c.l.b16 %v167
  %v636 = vunpack.c.l.b16 %v168
  %v637 = vpack.c.b16 %v574, %v573
  %v638 = vpack.c.b16 %v576, %v575
  %v639 = vpack.c.b16 %v578, %v577
  %v640 = vpack.c.b16 %v580, %v579
  %v641 = vpack.c.b16 %v582, %v581
  %v642 = vpack.c.b16 %v584, %v583
  %v643 = vpack.c.b16 %v586, %v585
  %v644 = vpack.c.b16 %v588, %v587
  %v645 = vpack.c.b16 %v590, %v589
  %v646 = vpack.c.b16 %v592, %v591
  %v647 = vpack.c.b16 %v594, %v593
  %v648 = vpack.c.b16 %v596, %v595
  %v649 = vpack.c.b16 %v598, %v597
  %v650 = vpack.c.b16 %v600, %v599
  %v651 = vpack.c.b16 %v602, %v601
  %v652 = vpack.c.b16 %v604, %v603
  %v653 = vpack.c.b16 %v606, %v605
  %v654 = vpack.c.b16 %v608, %v607
  %v655 = vpack.c.b16 %v610, %v609
  %v656 = vpack.c.b16 %v612, %v611
  %v657 = vpack.c.b16 %v614, %v613
  %v658 = vpack.c.b16 %v616, %v615
  %v659 = vpack.c.b16 %v618, %v617
  %v660 = vpack.c.b16 %v620, %v619
  %v661 = vpack.c.b16 %v622, %v621
  %v662 = vpack.c.b16 %v624, %v623
  %v663 = vpack.c.b16 %v626, %v625
  %v664 = vpack.c.b16 %v628, %v627
  %v665 = vpack.c.b16 %v630, %v629
  %v666 = vpack.c.b16 %v632, %v631
  %v667 = vpack.c.b16 %v634, %v633
  %v668 = vpack.c.b16 %v636, %v635
  %701 = vmatprep.subr.bf16.mxu0 0
  %702 = vmatpush1.bf16.msra.mxu0 %v637
  %703 = vmatprep.subr.bf16.mxu0 0
  %704 = vmatpush1.bf16.msra.mxu0 %v638
  %705 = vmatprep.subr.bf16.mxu0 0
  %706 = vmatpush1.bf16.msra.mxu0 %v639
  %707 = vmatprep.subr.bf16.mxu0 0
  %708 = vmatpush1.bf16.msra.mxu0 %v640
  %709 = vmatprep.subr.bf16.mxu0 0
  %710 = vmatpush1.bf16.msra.mxu0 %v641
  %711 = vmatprep.subr.bf16.mxu0 0
  %712 = vmatpush1.bf16.msra.mxu0 %v642
  %713 = vmatprep.subr.bf16.mxu0 0
  %714 = vmatpush1.bf16.msra.mxu0 %v643
  %715 = vmatprep.subr.bf16.mxu0 0
  %716 = vmatpush1.bf16.msra.mxu0 %v644
  %717 = vmatprep.subr.bf16.mxu0 0
  %718 = vmatpush1.bf16.msra.mxu0 %v645
  %719 = vmatprep.subr.bf16.mxu0 0
  %720 = vmatpush1.bf16.msra.mxu0 %v646
  %721 = vmatprep.subr.bf16.mxu0 0
  %722 = vmatpush1.bf16.msra.mxu0 %v647
  %723 = vmatprep.subr.bf16.mxu0 0
  %724 = vmatpush1.bf16.msra.mxu0 %v648
  %725 = vmatprep.subr.bf16.mxu0 0
  %726 = vmatpush1.bf16.msra.mxu0 %v649
  %727 = vmatprep.subr.bf16.mxu0 0
  %728 = vmatpush1.bf16.msra.mxu0 %v650
  %729 = vmatprep.subr.bf16.mxu0 0
  %730 = vmatpush1.bf16.msra.mxu0 %v651
  %731 = vmatprep.subr.bf16.mxu0 0
  %732 = vmatpush1.bf16.msra.mxu0 %v652
  %733 = vmatprep.mubr.bf16.mxu0 %v374
  %734 = vmatmul.mubr.bf16.gmra.mrb[0].mxu0 %v373
  %v735 = vpop.f32.mrb[0].mxu0
  %v736 = vadd.f32 0.0, %v735
  %v737 = vpop.f32.mrb[0].mxu0
  %v738 = vpop.f32.mrb[0].mxu0
  %v739 = vadd.f32 0.0, %v738
  %v740 = vpop.f32.mrb[0].mxu0
  %741 = vmatprep.mubr.bf16.mxu0 %v378
  %742 = vmatmul.mubr.bf16.gmra.mrb[0].mxu0 %v377
  %v743 = vpop.f32.mrb[0].mxu0
  %v744 = vadd.f32 0.0, %v743
  %v745 = vpop.f32.mrb[0].mxu0
  %v746 = vpop.f32.mrb[0].mxu0
  %v747 = vadd.f32 0.0, %v746
  %v748 = vpop.f32.mrb[0].mxu0
  %749 = vmatprep.mubr.bf16.mxu0 %v382
  %750 = vmatmul.mubr.bf16.gmra.mrb[0].mxu0 %v381
  %v751 = vpop.f32.mrb[0].mxu0
  %v752 = vadd.f32 0.0, %v751
  %v753 = vpop.f32.mrb[0].mxu0
  %v754 = vpop.f32.mrb[0].mxu0
  %v755 = vadd.f32 0.0, %v754
  %v756 = vpop.f32.mrb[0].mxu0
  %757 = vmatprep.mubr.bf16.mxu0 %v386
  %758 = vmatmul.mubr.bf16.gmra.mrb[0].mxu0 %v385
  %v759 = vpop.f32.mrb[0].mxu0
  %v760 = vadd.f32 0.0, %v759
  %v761 = vpop.f32.mrb[0].mxu0
  %v762 = vpop.f32.mrb[0].mxu0
  %v763 = vadd.f32 0.0, %v762
  %v764 = vpop.f32.mrb[0].mxu0
  %765 = vmatprep.mubr.bf16.mxu0 %v390
  %766 = vmatmul.mubr.bf16.gmra.mrb[0].mxu0 %v389
  %v767 = vpop.f32.mrb[0].mxu0
  %v768 = vadd.f32 0.0, %v767
  %v769 = vpop.f32.mrb[0].mxu0
  %v770 = vpop.f32.mrb[0].mxu0
  %v771 = vadd.f32 0.0, %v770
  %v772 = vpop.f32.mrb[0].mxu0
  %773 = vmatprep.mubr.bf16.mxu0 %v394
  %774 = vmatmul.mubr.bf16.gmra.mrb[0].mxu0 %v393
  %v775 = vpop.f32.mrb[0].mxu0
  %v776 = vadd.f32 0.0, %v775
  %v777 = vpop.f32.mrb[0].mxu0
  %v778 = vpop.f32.mrb[0].mxu0
  %v779 = vadd.f32 0.0, %v778
  %v780 = vpop.f32.mrb[0].mxu0
  %781 = vmatprep.mubr.bf16.mxu0 %v398
  %782 = vmatmul.mubr.bf16.gmra.mrb[0].mxu0 %v397
  %v783 = vpop.f32.mrb[0].mxu0
  %v784 = vadd.f32 0.0, %v783
  %v785 = vpop.f32.mrb[0].mxu0
  %v786 = vpop.f32.mrb[0].mxu0
  %v787 = vadd.f32 0.0, %v786
  %v788 = vpop.f32.mrb[0].mxu0
  %789 = vmatprep.mubr.bf16.mxu0 %v402
  %790 = vmatmul.mubr.bf16.gmra.mrb[0].mxu0 %v401
  %v791 = vpop.f32.mrb[0].mxu0
  %v792 = vadd.f32 0.0, %v791
  %v793 = vpop.f32.mrb[0].mxu0
  %v794 = vpop.f32.mrb[0].mxu0
  %v795 = vadd.f32 0.0, %v794
  %v796 = vpop.f32.mrb[0].mxu0
  %797 = vmatprep.mubr.bf16.mxu0 %v406
  %798 = vmatmul.mubr.bf16.gmra.mrb[0].mxu0 %v405
  %v799 = vpop.f32.mrb[0].mxu0
  %v800 = vadd.f32 0.0, %v799
  %v801 = vpop.f32.mrb[0].mxu0
  %v802 = vpop.f32.mrb[0].mxu0
  %v803 = vadd.f32 0.0, %v802
  %v804 = vpop.f32.mrb[0].mxu0
  %805 = vmatprep.mubr.bf16.mxu0 %v410
  %806 = vmatmul.mubr.bf16.gmra.mrb[0].mxu0 %v409
  %v807 = vpop.f32.mrb[0].mxu0
  %v808 = vadd.f32 0.0, %v807
  %v809 = vpop.f32.mrb[0].mxu0
  %v810 = vpop.f32.mrb[0].mxu0
  %v811 = vadd.f32 0.0, %v810
  %v812 = vpop.f32.mrb[0].mxu0
  %813 = vmatprep.mubr.bf16.mxu0 %v414
  %814 = vmatmul.mubr.bf16.gmra.mrb[0].mxu0 %v413
  %v815 = vpop.f32.mrb[0].mxu0
  %v816 = vadd.f32 0.0, %v815
  %v817 = vpop.f32.mrb[0].mxu0
  %v818 = vpop.f32.mrb[0].mxu0
  %v819 = vadd.f32 0.0, %v818
  %v820 = vpop.f32.mrb[0].mxu0
  %821 = vmatprep.mubr.bf16.mxu0 %v418
  %822 = vmatmul.mubr.bf16.gmra.mrb[0].mxu0 %v417
  %v823 = vpop.f32.mrb[0].mxu0
  %v824 = vadd.f32 0.0, %v823
  %v825 = vpop.f32.mrb[0].mxu0
  %v826 = vpop.f32.mrb[0].mxu0
  %v827 = vadd.f32 0.0, %v826
  %v828 = vpop.f32.mrb[0].mxu0
  %829 = vmatprep.mubr.bf16.mxu0 %v422
  %830 = vmatmul.mubr.bf16.gmra.mrb[0].mxu0 %v421
  %v831 = vpop.f32.mrb[0].mxu0
  %v832 = vadd.f32 0.0, %v831
  %v833 = vpop.f32.mrb[0].mxu0
  %v834 = vpop.f32.mrb[0].mxu0
  %v835 = vadd.f32 0.0, %v834
  %v836 = vpop.f32.mrb[0].mxu0
  %837 = vmatprep.mubr.bf16.mxu0 %v426
  %838 = vmatmul.mubr.bf16.gmra.mrb[0].mxu0 %v425
  %v839 = vpop.f32.mrb[0].mxu0
  %v840 = vadd.f32 0.0, %v839
  %v841 = vpop.f32.mrb[0].mxu0
  %v842 = vpop.f32.mrb[0].mxu0
  %v843 = vadd.f32 0.0, %v842
  %v844 = vpop.f32.mrb[0].mxu0
  %845 = vmatprep.mubr.bf16.mxu0 %v430
  %846 = vmatmul.mubr.bf16.gmra.mrb[0].mxu0 %v429
  %v847 = vpop.f32.mrb[0].mxu0
  %v848 = vadd.f32 0.0, %v847
  %v849 = vpop.f32.mrb[0].mxu0
  %v850 = vpop.f32.mrb[0].mxu0
  %v851 = vadd.f32 0.0, %v850
  %v852 = vpop.f32.mrb[0].mxu0
  %853 = vmatprep.mubr.bf16.mxu0 %v434
  %854 = vmatmul.mubr.bf16.gmra.mrb[0].mxu0 %v433
  %v855 = vpop.f32.mrb[0].mxu0
  %v856 = vadd.f32 0.0, %v855
  %v857 = vpop.f32.mrb[0].mxu0
  %v858 = vpop.f32.mrb[0].mxu0
  %v859 = vadd.f32 0.0, %v858
  %v860 = vpop.f32.mrb[0].mxu0
  %861 = vmatprep.mubr.bf16.mxu0 %v438
  %862 = vmatmul.mubr.bf16.gmra.mrb[0].mxu0 %v437
  %v863 = vpop.f32.mrb[0].mxu0
  %v864 = vadd.f32 0.0, %v863
  %v865 = vpop.f32.mrb[0].mxu0
  %v866 = vpop.f32.mrb[0].mxu0
  %v867 = vadd.f32 0.0, %v866
  %v868 = vpop.f32.mrb[0].mxu0
  %869 = vdwg.mxu0
  %870 = vmatprep.subr.bf16.mxu0 0
  %871 = vmatpush1.bf16.msra.mxu0 %v653
  %872 = vmatprep.subr.bf16.mxu0 0
  %873 = vmatpush1.bf16.msra.mxu0 %v654
  %874 = vmatprep.subr.bf16.mxu0 0
  %875 = vmatpush1.bf16.msra.mxu0 %v655
  %876 = vmatprep.subr.bf16.mxu0 0
  %877 = vmatpush1.bf16.msra.mxu0 %v656
  %878 = vmatprep.subr.bf16.mxu0 0
  %879 = vmatpush1.bf16.msra.mxu0 %v657
  %880 = vmatprep.subr.bf16.mxu0 0
  %881 = vmatpush1.bf16.msra.mxu0 %v658
  %882 = vmatprep.subr.bf16.mxu0 0
  %883 = vmatpush1.bf16.msra.mxu0 %v659
  %884 = vmatprep.subr.bf16.mxu0 0
  %885 = vmatpush1.bf16.msra.mxu0 %v660
  %886 = vmatprep.subr.bf16.mxu0 0
  %887 = vmatpush1.bf16.msra.mxu0 %v661
  %888 = vmatprep.subr.bf16.mxu0 0
  %889 = vmatpush1.bf16.msra.mxu0 %v662
  %890 = vmatprep.subr.bf16.mxu0 0
  %891 = vmatpush1.bf16.msra.mxu0 %v663
  %892 = vmatprep.subr.bf16.mxu0 0
  %893 = vmatpush1.bf16.msra.mxu0 %v664
  %894 = vmatprep.subr.bf16.mxu0 0
  %895 = vmatpush1.bf16.msra.mxu0 %v665
  %896 = vmatprep.subr.bf16.mxu0 0
  %897 = vmatpush1.bf16.msra.mxu0 %v666
  %898 = vmatprep.subr.bf16.mxu0 0
  %899 = vmatpush1.bf16.msra.mxu0 %v667
  %900 = vmatprep.subr.bf16.mxu0 0
  %901 = vmatpush1.bf16.msra.mxu0 %v668
  %902 = vmatprep.mubr.bf16.mxu0 %v376
  %903 = vmatmul.mubr.bf16.gmra.mrb[0].mxu0 %v375
  %v904 = vpop.f32.mrb[0].mxu0
  %v905 = vadd.f32 %v736, %v904
  %v906 = vpop.f32.mrb[0].mxu0
  %v907 = vpop.f32.mrb[0].mxu0
  %v908 = vadd.f32 %v739, %v907
  %v909 = vpop.f32.mrb[0].mxu0
  %910 = vmatprep.mubr.bf16.mxu0 %v380
  %911 = vmatmul.mubr.bf16.gmra.mrb[0].mxu0 %v379
  %v912 = vpop.f32.mrb[0].mxu0
  %v913 = vadd.f32 %v744, %v912
  %v914 = vpop.f32.mrb[0].mxu0
  %v915 = vpop.f32.mrb[0].mxu0
  %v916 = vadd.f32 %v747, %v915
  %v917 = vpop.f32.mrb[0].mxu0
  %918 = vmatprep.mubr.bf16.mxu0 %v384
  %919 = vmatmul.mubr.bf16.gmra.mrb[0].mxu0 %v383
  %v920 = vpop.f32.mrb[0].mxu0
  %v921 = vadd.f32 %v752, %v920
  %v922 = vpop.f32.mrb[0].mxu0
  %v923 = vpop.f32.mrb[0].mxu0
  %v924 = vadd.f32 %v755, %v923
  %v925 = vpop.f32.mrb[0].mxu0
  %926 = vmatprep.mubr.bf16.mxu0 %v388
  %927 = vmatmul.mubr.bf16.gmra.mrb[0].mxu0 %v387
  %v928 = vpop.f32.mrb[0].mxu0
  %v929 = vadd.f32 %v760, %v928
  %v930 = vpop.f32.mrb[0].mxu0
  %v931 = vpop.f32.mrb[0].mxu0
  %v932 = vadd.f32 %v763, %v931
  %v933 = vpop.f32.mrb[0].mxu0
  %934 = vmatprep.mubr.bf16.mxu0 %v392
  %935 = vmatmul.mubr.bf16.gmra.mrb[0].mxu0 %v391
  %v936 = vpop.f32.mrb[0].mxu0
  %v937 = vadd.f32 %v768, %v936
  %v938 = vpop.f32.mrb[0].mxu0
  %v939 = vpop.f32.mrb[0].mxu0
  %v940 = vadd.f32 %v771, %v939
  %v941 = vpop.f32.mrb[0].mxu0
  %942 = vmatprep.mubr.bf16.mxu0 %v396
  %943 = vmatmul.mubr.bf16.gmra.mrb[0].mxu0 %v395
  %v944 = vpop.f32.mrb[0].mxu0
  %v945 = vadd.f32 %v776, %v944
  %v946 = vpop.f32.mrb[0].mxu0
  %v947 = vpop.f32.mrb[0].mxu0
  %v948 = vadd.f32 %v779, %v947
  %v949 = vpop.f32.mrb[0].mxu0
  %950 = vmatprep.mubr.bf16.mxu0 %v400
  %951 = vmatmul.mubr.bf16.gmra.mrb[0].mxu0 %v399
  %v952 = vpop.f32.mrb[0].mxu0
  %v953 = vadd.f32 %v784, %v952
  %v954 = vpop.f32.mrb[0].mxu0
  %v955 = vpop.f32.mrb[0].mxu0
  %v956 = vadd.f32 %v787, %v955
  %v957 = vpop.f32.mrb[0].mxu0
  %958 = vmatprep.mubr.bf16.mxu0 %v404
  %959 = vmatmul.mubr.bf16.gmra.mrb[0].mxu0 %v403
  %v960 = vpop.f32.mrb[0].mxu0
  %v961 = vadd.f32 %v792, %v960
  %v962 = vpop.f32.mrb[0].mxu0
  %v963 = vpop.f32.mrb[0].mxu0
  %v964 = vadd.f32 %v795, %v963
  %v965 = vpop.f32.mrb[0].mxu0
  %966 = vmatprep.mubr.bf16.mxu0 %v408
  %967 = vmatmul.mubr.bf16.gmra.mrb[0].mxu0 %v407
  %v968 = vpop.f32.mrb[0].mxu0
  %v969 = vadd.f32 %v800, %v968
  %v970 = vpop.f32.mrb[0].mxu0
  %v971 = vpop.f32.mrb[0].mxu0
  %v972 = vadd.f32 %v803, %v971
  %v973 = vpop.f32.mrb[0].mxu0
  %974 = vmatprep.mubr.bf16.mxu0 %v412
  %975 = vmatmul.mubr.bf16.gmra.mrb[0].mxu0 %v411
  %v976 = vpop.f32.mrb[0].mxu0
  %v977 = vadd.f32 %v808, %v976
  %v978 = vpop.f32.mrb[0].mxu0
  %v979 = vpop.f32.mrb[0].mxu0
  %v980 = vadd.f32 %v811, %v979
  %v981 = vpop.f32.mrb[0].mxu0
  %982 = vmatprep.mubr.bf16.mxu0 %v416
  %983 = vmatmul.mubr.bf16.gmra.mrb[0].mxu0 %v415
  %v984 = vpop.f32.mrb[0].mxu0
  %v985 = vadd.f32 %v816, %v984
  %v986 = vpop.f32.mrb[0].mxu0
  %v987 = vpop.f32.mrb[0].mxu0
  %v988 = vadd.f32 %v819, %v987
  %v989 = vpop.f32.mrb[0].mxu0
  %990 = vmatprep.mubr.bf16.mxu0 %v420
  %991 = vmatmul.mubr.bf16.gmra.mrb[0].mxu0 %v419
  %v992 = vpop.f32.mrb[0].mxu0
  %v993 = vadd.f32 %v824, %v992
  %v994 = vpop.f32.mrb[0].mxu0
  %v995 = vpop.f32.mrb[0].mxu0
  %v996 = vadd.f32 %v827, %v995
  %v997 = vpop.f32.mrb[0].mxu0
  %998 = vmatprep.mubr.bf16.mxu0 %v424
  %999 = vmatmul.mubr.bf16.gmra.mrb[0].mxu0 %v423
  %v1000 = vpop.f32.mrb[0].mxu0
  %v1001 = vadd.f32 %v832, %v1000
  %v1002 = vpop.f32.mrb[0].mxu0
  %v1003 = vpop.f32.mrb[0].mxu0
  %v1004 = vadd.f32 %v835, %v1003
  %v1005 = vpop.f32.mrb[0].mxu0
  %1006 = vmatprep.mubr.bf16.mxu0 %v428
  %1007 = vmatmul.mubr.bf16.gmra.mrb[0].mxu0 %v427
  %v1008 = vpop.f32.mrb[0].mxu0
  %v1009 = vadd.f32 %v840, %v1008
  %v1010 = vpop.f32.mrb[0].mxu0
  %v1011 = vpop.f32.mrb[0].mxu0
  %v1012 = vadd.f32 %v843, %v1011
  %v1013 = vpop.f32.mrb[0].mxu0
  %1014 = vmatprep.mubr.bf16.mxu0 %v432
  %1015 = vmatmul.mubr.bf16.gmra.mrb[0].mxu0 %v431
  %v1016 = vpop.f32.mrb[0].mxu0
  %v1017 = vadd.f32 %v848, %v1016
  %v1018 = vpop.f32.mrb[0].mxu0
  %v1019 = vpop.f32.mrb[0].mxu0
  %v1020 = vadd.f32 %v851, %v1019
  %v1021 = vpop.f32.mrb[0].mxu0
  %1022 = vmatprep.mubr.bf16.mxu0 %v436
  %1023 = vmatmul.mubr.bf16.gmra.mrb[0].mxu0 %v435
  %v1024 = vpop.f32.mrb[0].mxu0
  %v1025 = vadd.f32 %v856, %v1024
  %v1026 = vpop.f32.mrb[0].mxu0
  %v1027 = vpop.f32.mrb[0].mxu0
  %v1028 = vadd.f32 %v859, %v1027
  %v1029 = vpop.f32.mrb[0].mxu0
  %1030 = vmatprep.mubr.bf16.mxu0 %v440
  %1031 = vmatmul.mubr.bf16.gmra.mrb[0].mxu0 %v439
  %v1032 = vpop.f32.mrb[0].mxu0
  %v1033 = vadd.f32 %v864, %v1032
  %v1034 = vpop.f32.mrb[0].mxu0
  %v1035 = vpop.f32.mrb[0].mxu0
  %v1036 = vadd.f32 %v867, %v1035
  %v1037 = vpop.f32.mrb[0].mxu0
  %1038 = vdwg.mxu0
  %s1039 = smul.u32 0, 272
  %v1040 = vpack.c.bf16 %v908, %v905
  %v1041 = vpack.c.bf16 %v916, %v913
  %v1042 = vpack.c.bf16 %v924, %v921
  %v1043 = vpack.c.bf16 %v932, %v929
  %v1044 = vpack.c.bf16 %v940, %v937
  %v1045 = vpack.c.bf16 %v948, %v945
  %v1046 = vpack.c.bf16 %v956, %v953
  %v1047 = vpack.c.bf16 %v964, %v961
  %v1048 = vpack.c.bf16 %v972, %v969
  %v1049 = vpack.c.bf16 %v980, %v977
  %v1050 = vpack.c.bf16 %v988, %v985
  %v1051 = vpack.c.bf16 %v996, %v993
  %v1052 = vpack.c.bf16 %v1004, %v1001
  %v1053 = vpack.c.bf16 %v1012, %v1009
  %v1054 = vpack.c.bf16 %v1020, %v1017
  %v1055 = vpack.c.bf16 %v1028, %v1025
  %v1056 = vpack.c.bf16 %v1036, %v1033
  %s1057 = sshra.s32 %s1039, 4
  %s1058 = sand.u32 %s1039, 15
  %s1059 = smul.addr %s1057, 8
  %s1060 = scalar_lea.vmem [#allocation2], %s1059
  %vm1061 = vcmask 523264
  %1062 = vst.msk [vmem:[%s1060] sm:$0xff] %vm1061, %v1040
  %1063 = vst.msk [vmem:[%s1060 + $0x8] sm:$0xff] %vm1061, %v1041
  %1064 = vst.msk [vmem:[%s1060 + $0x10] sm:$0xff] %vm1061, %v1042
  %1065 = vst.msk [vmem:[%s1060 + $0x18] sm:$0xff] %vm1061, %v1043
  %1066 = vst.msk [vmem:[%s1060 + $0x20] sm:$0xff] %vm1061, %v1044
  %1067 = vst.msk [vmem:[%s1060 + $0x28] sm:$0xff] %vm1061, %v1045
  %1068 = vst.msk [vmem:[%s1060 + $0x30] sm:$0xff] %vm1061, %v1046
  %1069 = vst.msk [vmem:[%s1060 + $0x38] sm:$0xff] %vm1061, %v1047
  %1070 = vst.msk [vmem:[%s1060 + $0x40] sm:$0xff] %vm1061, %v1048
  %1071 = vst.msk [vmem:[%s1060 + $0x48] sm:$0xff] %vm1061, %v1049
  %1072 = vst.msk [vmem:[%s1060 + $0x50] sm:$0xff] %vm1061, %v1050
  %1073 = vst.msk [vmem:[%s1060 + $0x58] sm:$0xff] %vm1061, %v1051
  %1074 = vst.msk [vmem:[%s1060 + $0x60] sm:$0xff] %vm1061, %v1052
  %1075 = vst.msk [vmem:[%s1060 + $0x68] sm:$0xff] %vm1061, %v1053
  %1076 = vst.msk [vmem:[%s1060 + $0x70] sm:$0xff] %vm1061, %v1054
  %1077 = vst.msk [vmem:[%s1060 + $0x78] sm:$0xff] %vm1061, %v1055
  %1078 = vst.msk [vmem:[%s1060 + $0x80] sm:$0xff] %vm1061, %v1056
  %v1079 = vld [vmem:[#allocation3] sm:$0x1]
  %v1080 = vsel %vm1061, %v905, 0.0
  %v1081 = vsel %vm1061, %v908, 0.0
  %v1082 = vadd.f32 %v1080, %v1081
  %v1083 = vsel %vm1061, %v913, 0.0
  %v1084 = vadd.f32 %v1082, %v1083
  %v1085 = vsel %vm1061, %v916, 0.0
  %v1086 = vadd.f32 %v1084, %v1085
  %v1087 = vsel %vm1061, %v921, 0.0
  %v1088 = vadd.f32 %v1086, %v1087
  %v1089 = vsel %vm1061, %v924, 0.0
  %v1090 = vadd.f32 %v1088, %v1089
  %v1091 = vsel %vm1061, %v929, 0.0
  %v1092 = vadd.f32 %v1090, %v1091
  %v1093 = vsel %vm1061, %v932, 0.0
  %v1094 = vadd.f32 %v1092, %v1093
  %v1095 = vsel %vm1061, %v937, 0.0
  %v1096 = vadd.f32 %v1094, %v1095
  %v1097 = vsel %vm1061, %v940, 0.0
  %v1098 = vadd.f32 %v1096, %v1097
  %v1099 = vsel %vm1061, %v945, 0.0
  %v1100 = vadd.f32 %v1098, %v1099
  %v1101 = vsel %vm1061, %v948, 0.0
  %v1102 = vadd.f32 %v1100, %v1101
  %v1103 = vsel %vm1061, %v953, 0.0
  %v1104 = vadd.f32 %v1102, %v1103
  %v1105 = vsel %vm1061, %v956, 0.0
  %v1106 = vadd.f32 %v1104, %v1105
  %v1107 = vsel %vm1061, %v961, 0.0
  %v1108 = vadd.f32 %v1106, %v1107
  %v1109 = vsel %vm1061, %v964, 0.0
  %v1110 = vadd.f32 %v1108, %v1109
  %v1111 = vsel %vm1061, %v969, 0.0
  %v1112 = vadd.f32 %v1110, %v1111
  %v1113 = vsel %vm1061, %v972, 0.0
  %v1114 = vadd.f32 %v1112, %v1113
  %v1115 = vsel %vm1061, %v977, 0.0
  %v1116 = vadd.f32 %v1114, %v1115
  %v1117 = vsel %vm1061, %v980, 0.0
  %v1118 = vadd.f32 %v1116, %v1117
  %v1119 = vsel %vm1061, %v985, 0.0
  %v1120 = vadd.f32 %v1118, %v1119
  %v1121 = vsel %vm1061, %v988, 0.0
  %v1122 = vadd.f32 %v1120, %v1121
  %v1123 = vsel %vm1061, %v993, 0.0
  %v1124 = vadd.f32 %v1122, %v1123
  %v1125 = vsel %vm1061, %v996, 0.0
  %v1126 = vadd.f32 %v1124, %v1125
  %v1127 = vsel %vm1061, %v1001, 0.0
  %v1128 = vadd.f32 %v1126, %v1127
  %v1129 = vsel %vm1061, %v1004, 0.0
  %v1130 = vadd.f32 %v1128, %v1129
  %v1131 = vsel %vm1061, %v1009, 0.0
  %v1132 = vadd.f32 %v1130, %v1131
  %v1133 = vsel %vm1061, %v1012, 0.0
  %v1134 = vadd.f32 %v1132, %v1133
  %v1135 = vsel %vm1061, %v1017, 0.0
  %v1136 = vadd.f32 %v1134, %v1135
  %v1137 = vsel %vm1061, %v1020, 0.0
  %v1138 = vadd.f32 %v1136, %v1137
  %v1139 = vsel %vm1061, %v1025, 0.0
  %v1140 = vadd.f32 %v1138, %v1139
  %v1141 = vsel %vm1061, %v1028, 0.0
  %v1142 = vadd.f32 %v1140, %v1141
  %v1143 = vsel %vm1061, %v1033, 0.0
  %v1144 = vadd.f32 %v1142, %v1143
  %v1145 = vsel %vm1061, %v1036, 0.0
  %v1146 = vadd.f32 %v1144, %v1145
  %v1147 = vrot.slane %v1146, 4
  %v1148 = vadd.f32 %v1146, %v1147
  %v1149 = vrot.slane %v1148, 2
  %v1150 = vadd.f32 %v1148, %v1149
  %v1151 = vrot.slane %v1150, 1
  %v1152 = vadd.f32 %v1150, %v1151
  %v1153 = vadd.f32 %v1079, %v1152
  %vm1154 = vcmask 516096
  %1155 = vst.msk [vmem:[#allocation3] sm:$0x1] %vm1154, %v1153
  %v1156 = vld [vmem:[#allocation4] sm:$0x1]
  %v1157 = vmul.f32 %v905, %v905
  %v1158 = vmul.f32 %v908, %v908
  %v1159 = vmul.f32 %v913, %v913
  %v1160 = vmul.f32 %v916, %v916
  %v1161 = vmul.f32 %v921, %v921
  %v1162 = vmul.f32 %v924, %v924
  %v1163 = vmul.f32 %v929, %v929
  %v1164 = vmul.f32 %v932, %v932
  %v1165 = vmul.f32 %v937, %v937
  %v1166 = vmul.f32 %v940, %v940
  %v1167 = vmul.f32 %v945, %v945
  %v1168 = vmul.f32 %v948, %v948
  %v1169 = vmul.f32 %v953, %v953
  %v1170 = vmul.f32 %v956, %v956
  %v1171 = vmul.f32 %v961, %v961
  %v1172 = vmul.f32 %v964, %v964
  %v1173 = vmul.f32 %v969, %v969
  %v1174 = vmul.f32 %v972, %v972
  %v1175 = vmul.f32 %v977, %v977
  %v1176 = vmul.f32 %v980, %v980
  %v1177 = vmul.f32 %v985, %v985
  %v1178 = vmul.f32 %v988, %v988
  %v1179 = vmul.f32 %v993, %v993
  %v1180 = vmul.f32 %v996, %v996
  %v1181 = vmul.f32 %v1001, %v1001
  %v1182 = vmul.f32 %v1004, %v1004
  %v1183 = vmul.f32 %v1009, %v1009
  %v1184 = vmul.f32 %v1012, %v1012
  %v1185 = vmul.f32 %v1017, %v1017
  %v1186 = vmul.f32 %v1020, %v1020
  %v1187 = vmul.f32 %v1025, %v1025
  %v1188 = vmul.f32 %v1028, %v1028
  %v1189 = vmul.f32 %v1033, %v1033
  %v1190 = vmul.f32 %v1036, %v1036
  %v1191 = vsel %vm1061, %v1157, 0.0
  %v1192 = vsel %vm1061, %v1158, 0.0
  %v1193 = vadd.f32 %v1191, %v1192
  %v1194 = vsel %vm1061, %v1159, 0.0
  %v1195 = vadd.f32 %v1193, %v1194
  %v1196 = vsel %vm1061, %v1160, 0.0
  %v1197 = vadd.f32 %v1195, %v1196
  %v1198 = vsel %vm1061, %v1161, 0.0
  %v1199 = vadd.f32 %v1197, %v1198
  %v1200 = vsel %vm1061, %v1162, 0.0
  %v1201 = vadd.f32 %v1199, %v1200
  %v1202 = vsel %vm1061, %v1163, 0.0
  %v1203 = vadd.f32 %v1201, %v1202
  %v1204 = vsel %vm1061, %v1164, 0.0
  %v1205 = vadd.f32 %v1203, %v1204
  %v1206 = vsel %vm1061, %v1165, 0.0
  %v1207 = vadd.f32 %v1205, %v1206
  %v1208 = vsel %vm1061, %v1166, 0.0
  %v1209 = vadd.f32 %v1207, %v1208
  %v1210 = vsel %vm1061, %v1167, 0.0
  %v1211 = vadd.f32 %v1209, %v1210
  %v1212 = vsel %vm1061, %v1168, 0.0
  %v1213 = vadd.f32 %v1211, %v1212
  %v1214 = vsel %vm1061, %v1169, 0.0
  %v1215 = vadd.f32 %v1213, %v1214
  %v1216 = vsel %vm1061, %v1170, 0.0
  %v1217 = vadd.f32 %v1215, %v1216
  %v1218 = vsel %vm1061, %v1171, 0.0
  %v1219 = vadd.f32 %v1217, %v1218
  %v1220 = vsel %vm1061, %v1172, 0.0
  %v1221 = vadd.f32 %v1219, %v1220
  %v1222 = vsel %vm1061, %v1173, 0.0
  %v1223 = vadd.f32 %v1221, %v1222
  %v1224 = vsel %vm1061, %v1174, 0.0
  %v1225 = vadd.f32 %v1223, %v1224
  %v1226 = vsel %vm1061, %v1175, 0.0
  %v1227 = vadd.f32 %v1225, %v1226
  %v1228 = vsel %vm1061, %v1176, 0.0
  %v1229 = vadd.f32 %v1227, %v1228
  %v1230 = vsel %vm1061, %v1177, 0.0
  %v1231 = vadd.f32 %v1229, %v1230
  %v1232 = vsel %vm1061, %v1178, 0.0
  %v1233 = vadd.f32 %v1231, %v1232
  %v1234 = vsel %vm1061, %v1179, 0.0
  %v1235 = vadd.f32 %v1233, %v1234
  %v1236 = vsel %vm1061, %v1180, 0.0
  %v1237 = vadd.f32 %v1235, %v1236
  %v1238 = vsel %vm1061, %v1181, 0.0
  %v1239 = vadd.f32 %v1237, %v1238
  %v1240 = vsel %vm1061, %v1182, 0.0
  %v1241 = vadd.f32 %v1239, %v1240
  %v1242 = vsel %vm1061, %v1183, 0.0
  %v1243 = vadd.f32 %v1241, %v1242
  %v1244 = vsel %vm1061, %v1184, 0.0
  %v1245 = vadd.f32 %v1243, %v1244
  %v1246 = vsel %vm1061, %v1185, 0.0
  %v1247 = vadd.f32 %v1245, %v1246
  %v1248 = vsel %vm1061, %v1186, 0.0
  %v1249 = vadd.f32 %v1247, %v1248
  %v1250 = vsel %vm1061, %v1187, 0.0
  %v1251 = vadd.f32 %v1249, %v1250
  %v1252 = vsel %vm1061, %v1188, 0.0
  %v1253 = vadd.f32 %v1251, %v1252
  %v1254 = vsel %vm1061, %v1189, 0.0
  %v1255 = vadd.f32 %v1253, %v1254
  %v1256 = vsel %vm1061, %v1190, 0.0
  %v1257 = vadd.f32 %v1255, %v1256
  %v1258 = vrot.slane %v1257, 4
  %v1259 = vadd.f32 %v1257, %v1258
  %v1260 = vrot.slane %v1259, 2
  %v1261 = vadd.f32 %v1259, %v1260
  %v1262 = vrot.slane %v1261, 1
  %v1263 = vadd.f32 %v1261, %v1262
  %v1264 = vadd.f32 %v1156, %v1263
  %1265 = vst.msk [vmem:[#allocation4] sm:$0x1] %vm1154, %v1264
  // Predicated region
  $region38: #{conv_block1.1} parent=0 // pred_check
    %p1266 = pneg %p30
  $region39: #{conv_block1.1} parent=0 // pred_check_branch
    %1268 = sbr.rel (%p1266) target = $region41
  $region40: #{conv_block1.1} parent=0 // pred_region
    %v1269 = vld [vmem:[#allocation3] sm:$0x1]
    %v1270 = vmul.f32 %v1269, 0.004132231
    %v1271 = vld [vmem:[#allocation4] sm:$0x1]
    %v1272 = vmul.f32 %v1271, 0.004132231
    %v1273 = vmul.f32 %v1270, %v1270
    %v1274 = vsub.f32 %v1272, %v1273
    %v1275 = vmax.f32 %v1274, 0.0
    %v1276 = vadd.f32 %v1275, 1e-05
    %v1277 = vrsqrt.pop %v1276
    %v1278 = vld [vmem:[%s2] sm:$0x1]
    %v1279 = vmul.f32 %v1277, %v1278
    %v1280 = vld [vmem:[%s3] sm:$0x1]
    %v1281 = vmul.f32 %v1270, %v1279
    %v1282 = vsub.f32 %v1280, %v1281
    %v1283 = vld [vmem:[#allocation2] sm:$0xff]
    %v1284 = vld [vmem:[#allocation2 + $0x8] sm:$0xff]
    %v1285 = vld [vmem:[#allocation2 + $0x10] sm:$0xff]
    %v1286 = vld [vmem:[#allocation2 + $0x18] sm:$0xff]
    %v1287 = vld [vmem:[#allocation2 + $0x20] sm:$0xff]
    %v1288 = vld [vmem:[#allocation2 + $0x28] sm:$0xff]
    %v1289 = vld [vmem:[#allocation2 + $0x30] sm:$0xff]
    %v1290 = vld [vmem:[#allocation2 + $0x38] sm:$0xff]
    %v1291 = vld [vmem:[#allocation2 + $0x40] sm:$0xff]
    %v1292 = vld [vmem:[#allocation2 + $0x48] sm:$0xff]
    %v1293 = vld [vmem:[#allocation2 + $0x50] sm:$0xff]
    %v1294 = vld [vmem:[#allocation2 + $0x58] sm:$0xff]
    %v1295 = vld [vmem:[#allocation2 + $0x60] sm:$0xff]
    %v1296 = vld [vmem:[#allocation2 + $0x68] sm:$0xff]
    %v1297 = vld [vmem:[#allocation2 + $0x70] sm:$0xff]
    %v1298 = vld [vmem:[#allocation2 + $0x78] sm:$0xff]
    %v1299 = vunpack.c.l.bf16 %v1283
    %v1300 = vunpack.c.h.bf16 %v1283
    %v1301 = vunpack.c.l.bf16 %v1284
    %v1302 = vunpack.c.h.bf16 %v1284
    %v1303 = vunpack.c.l.bf16 %v1285
    %v1304 = vunpack.c.h.bf16 %v1285
    %v1305 = vunpack.c.l.bf16 %v1286
    %v1306 = vunpack.c.h.bf16 %v1286
    %v1307 = vunpack.c.l.bf16 %v1287
    %v1308 = vunpack.c.h.bf16 %v1287
    %v1309 = vunpack.c.l.bf16 %v1288
    %v1310 = vunpack.c.h.bf16 %v1288
    %v1311 = vunpack.c.l.bf16 %v1289
    %v1312 = vunpack.c.h.bf16 %v1289
    %v1313 = vunpack.c.l.bf16 %v1290
    %v1314 = vunpack.c.h.bf16 %v1290
    %v1315 = vunpack.c.l.bf16 %v1291
    %v1316 = vunpack.c.h.bf16 %v1291
    %v1317 = vunpack.c.l.bf16 %v1292
    %v1318 = vunpack.c.h.bf16 %v1292
    %v1319 = vunpack.c.l.bf16 %v1293
    %v1320 = vunpack.c.h.bf16 %v1293
    %v1321 = vunpack.c.l.bf16 %v1294
    %v1322 = vunpack.c.h.bf16 %v1294
    %v1323 = vunpack.c.l.bf16 %v1295
    %v1324 = vunpack.c.h.bf16 %v1295
    %v1325 = vunpack.c.l.bf16 %v1296
    %v1326 = vunpack.c.h.bf16 %v1296
    %v1327 = vunpack.c.l.bf16 %v1297
    %v1328 = vunpack.c.h.bf16 %v1297
    %v1329 = vunpack.c.l.bf16 %v1298
    %v1330 = vunpack.c.h.bf16 %v1298
    %v1332 = vlaneseq
    %v1333 = vshrl.u32 %v1332, 7
    %v1334 = vsub.s32 0, %v1333
    %v1335 = vrot.slane %v1279, %v1334
    %v1337 = vmul.f32 %v1299, %v1335
    %v1338 = vmul.f32 %v1300, %v1335
    %v1339 = vmul.f32 %v1301, %v1335
    %v1340 = vmul.f32 %v1302, %v1335
    %v1341 = vmul.f32 %v1303, %v1335
    %v1342 = vmul.f32 %v1304, %v1335
    %v1343 = vmul.f32 %v1305, %v1335
    %v1344 = vmul.f32 %v1306, %v1335
    %v1345 = vmul.f32 %v1307, %v1335
    %v1346 = vmul.f32 %v1308, %v1335
    %v1347 = vmul.f32 %v1309, %v1335
    %v1348 = vmul.f32 %v1310, %v1335
    %v1349 = vmul.f32 %v1311, %v1335
    %v1350 = vmul.f32 %v1312, %v1335
    %v1351 = vmul.f32 %v1313, %v1335
    %v1352 = vmul.f32 %v1314, %v1335
    %v1353 = vmul.f32 %v1315, %v1335
    %v1354 = vmul.f32 %v1316, %v1335
    %v1355 = vmul.f32 %v1317, %v1335
    %v1356 = vmul.f32 %v1318, %v1335
    %v1357 = vmul.f32 %v1319, %v1335
    %v1358 = vmul.f32 %v1320, %v1335
    %v1359 = vmul.f32 %v1321, %v1335
    %v1360 = vmul.f32 %v1322, %v1335
    %v1361 = vmul.f32 %v1323, %v1335
    %v1362 = vmul.f32 %v1324, %v1335
    %v1363 = vmul.f32 %v1325, %v1335
    %v1364 = vmul.f32 %v1326, %v1335
    %v1365 = vmul.f32 %v1327, %v1335
    %v1366 = vmul.f32 %v1328, %v1335
    %v1367 = vmul.f32 %v1329, %v1335
    %v1368 = vmul.f32 %v1330, %v1335
    %v1370 = vlaneseq
    %v1371 = vshrl.u32 %v1370, 7
    %v1372 = vsub.s32 0, %v1371
    %v1373 = vrot.slane %v1282, %v1372
    %v1375 = vadd.f32 %v1337, %v1373
    %v1376 = vadd.f32 %v1338, %v1373
    %v1377 = vadd.f32 %v1339, %v1373
    %v1378 = vadd.f32 %v1340, %v1373
    %v1379 = vadd.f32 %v1341, %v1373
    %v1380 = vadd.f32 %v1342, %v1373
    %v1381 = vadd.f32 %v1343, %v1373
    %v1382 = vadd.f32 %v1344, %v1373
    %v1383 = vadd.f32 %v1345, %v1373
    %v1384 = vadd.f32 %v1346, %v1373
    %v1385 = vadd.f32 %v1347, %v1373
    %v1386 = vadd.f32 %v1348, %v1373
    %v1387 = vadd.f32 %v1349, %v1373
    %v1388 = vadd.f32 %v1350, %v1373
    %v1389 = vadd.f32 %v1351, %v1373
    %v1390 = vadd.f32 %v1352, %v1373
    %v1391 = vadd.f32 %v1353, %v1373
    %v1392 = vadd.f32 %v1354, %v1373
    %v1393 = vadd.f32 %v1355, %v1373
    %v1394 = vadd.f32 %v1356, %v1373
    %v1395 = vadd.f32 %v1357, %v1373
    %v1396 = vadd.f32 %v1358, %v1373
    %v1397 = vadd.f32 %v1359, %v1373
    %v1398 = vadd.f32 %v1360, %v1373
    %v1399 = vadd.f32 %v1361, %v1373
    %v1400 = vadd.f32 %v1362, %v1373
    %v1401 = vadd.f32 %v1363, %v1373
    %v1402 = vadd.f32 %v1364, %v1373
    %v1403 = vadd.f32 %v1365, %v1373
    %v1404 = vadd.f32 %v1366, %v1373
    %v1405 = vadd.f32 %v1367, %v1373
    %v1406 = vadd.f32 %v1368, %v1373
    %v1407 = vmax.f32 %v1375, 0.0
    %v1408 = vmax.f32 %v1376, 0.0
    %v1409 = vmax.f32 %v1377, 0.0
    %v1410 = vmax.f32 %v1378, 0.0
    %v1411 = vmax.f32 %v1379, 0.0
    %v1412 = vmax.f32 %v1380, 0.0
    %v1413 = vmax.f32 %v1381, 0.0
    %v1414 = vmax.f32 %v1382, 0.0
    %v1415 = vmax.f32 %v1383, 0.0
    %v1416 = vmax.f32 %v1384, 0.0
    %v1417 = vmax.f32 %v1385, 0.0
    %v1418 = vmax.f32 %v1386, 0.0
    %v1419 = vmax.f32 %v1387, 0.0
    %v1420 = vmax.f32 %v1388, 0.0
    %v1421 = vmax.f32 %v1389, 0.0
    %v1422 = vmax.f32 %v1390, 0.0
    %v1423 = vmax.f32 %v1391, 0.0
    %v1424 = vmax.f32 %v1392, 0.0
    %v1425 = vmax.f32 %v1393, 0.0
    %v1426 = vmax.f32 %v1394, 0.0
    %v1427 = vmax.f32 %v1395, 0.0
    %v1428 = vmax.f32 %v1396, 0.0
    %v1429 = vmax.f32 %v1397, 0.0
    %v1430 = vmax.f32 %v1398, 0.0
    %v1431 = vmax.f32 %v1399, 0.0
    %v1432 = vmax.f32 %v1400, 0.0
    %v1433 = vmax.f32 %v1401, 0.0
    %v1434 = vmax.f32 %v1402, 0.0
    %v1435 = vmax.f32 %v1403, 0.0
    %v1436 = vmax.f32 %v1404, 0.0
    %v1437 = vmax.f32 %v1405, 0.0
    %v1438 = vmax.f32 %v1406, 0.0
    %v1439 = vpack.c.bf16 %v1408, %v1407
    %v1440 = vpack.c.bf16 %v1410, %v1409
    %v1441 = vpack.c.bf16 %v1412, %v1411
    %v1442 = vpack.c.bf16 %v1414, %v1413
    %v1443 = vpack.c.bf16 %v1416, %v1415
    %v1444 = vpack.c.bf16 %v1418, %v1417
    %v1445 = vpack.c.bf16 %v1420, %v1419
    %v1446 = vpack.c.bf16 %v1422, %v1421
    %v1447 = vpack.c.bf16 %v1424, %v1423
    %v1448 = vpack.c.bf16 %v1426, %v1425
    %v1449 = vpack.c.bf16 %v1428, %v1427
    %v1450 = vpack.c.bf16 %v1430, %v1429
    %v1451 = vpack.c.bf16 %v1432, %v1431
    %v1452 = vpack.c.bf16 %v1434, %v1433
    %v1453 = vpack.c.bf16 %v1436, %v1435
    %v1454 = vpack.c.bf16 %v1438, %v1437
    %1455 = vst.msk [vmem:[#allocation2] sm:$0xff] %vm1061, %v1439
    %1456 = vst.msk [vmem:[#allocation2 + $0x8] sm:$0xff] %vm1061, %v1440
    %1457 = vst.msk [vmem:[#allocation2 + $0x10] sm:$0xff] %vm1061, %v1441
    %1458 = vst.msk [vmem:[#allocation2 + $0x18] sm:$0xff] %vm1061, %v1442
    %1459 = vst.msk [vmem:[#allocation2 + $0x20] sm:$0xff] %vm1061, %v1443
    %1460 = vst.msk [vmem:[#allocation2 + $0x28] sm:$0xff] %vm1061, %v1444
    %1461 = vst.msk [vmem:[#allocation2 + $0x30] sm:$0xff] %vm1061, %v1445
    %1462 = vst.msk [vmem:[#allocation2 + $0x38] sm:$0xff] %vm1061, %v1446
    %1463 = vst.msk [vmem:[#allocation2 + $0x40] sm:$0xff] %vm1061, %v1447
    %1464 = vst.msk [vmem:[#allocation2 + $0x48] sm:$0xff] %vm1061, %v1448
    %1465 = vst.msk [vmem:[#allocation2 + $0x50] sm:$0xff] %vm1061, %v1449
    %1466 = vst.msk [vmem:[#allocation2 + $0x58] sm:$0xff] %vm1061, %v1450
    %1467 = vst.msk [vmem:[#allocation2 + $0x60] sm:$0xff] %vm1061, %v1451
    %1468 = vst.msk [vmem:[#allocation2 + $0x68] sm:$0xff] %vm1061, %v1452
    %1469 = vst.msk [vmem:[#allocation2 + $0x70] sm:$0xff] %vm1061, %v1453
    %1470 = vst.msk [vmem:[#allocation2 + $0x78] sm:$0xff] %vm1061, %v1454
    %v1471 = vld [vmem:[#allocation2 + $0x80] sm:$0xff]
    %v1472 = vunpack.c.l.bf16 %v1471
    %v1473 = vunpack.c.h.bf16 %v1471
    %v1474 = vmul.f32 %v1472, %v1335
    %v1475 = vmul.f32 %v1473, %v1335
    %v1476 = vadd.f32 %v1474, %v1373
    %v1477 = vadd.f32 %v1475, %v1373
    %v1478 = vmax.f32 %v1476, 0.0
    %v1479 = vmax.f32 %v1477, 0.0
    %v1480 = vpack.c.bf16 %v1479, %v1478
    %1481 = vst.msk [vmem:[#allocation2 + $0x80] sm:$0xff] %vm1061, %v1480
    %v1482 = vld [vmem:[#allocation2] sm:$0xff]
    %v1483 = vld [vmem:[#allocation2 + $0x8] sm:$0xff]
    %v1484 = vld [vmem:[#allocation2 + $0x10] sm:$0xff]
    %v1485 = vld [vmem:[#allocation2 + $0x18] sm:$0x3f]
    %v1486 = vld [vmem:[#allocation2 + $0x18] sm:$0x7f]
    %vm1487 = vsmask.f32 7424
    %v1489 = vshrl.u32 %v1482, 16
    %v1491 = vshll.u32 %v1482, 16
    %v1493 = vrot.slane %v1491, 1
    %v1494 = vor.u32 %v1489, %v1493
    %v1496 = vshll.u32 %v1483, 16
    %v1498 = vrot.slane %v1496, 1
    %v1499 = vsel %vm1487, %v1494, %v1498
    %v1500 = vshrl.u32 %v1483, 16
    %v1502 = vor.u32 %v1500, %v1498
    %v1504 = vshll.u32 %v1484, 16
    %v1506 = vrot.slane %v1504, 1
    %v1507 = vsel %vm1487, %v1502, %v1506
    %v1508 = vshrl.u32 %v1484, 16
    %v1510 = vor.u32 %v1508, %v1506
    %v1512 = vshll.u32 %v1486, 16
    %v1514 = vrot.slane %v1512, 1
    %v1515 = vsel %vm1487, %v1510, %v1514
    %v1516 = vshrl.u32 %v1486, 16
    %v1518 = vor.u32 %v1516, %v1514
    %v1523 = vmax.bf16 %v1482, %v1499
    %v1524 = vmax.bf16 %v1483, %v1507
    %v1525 = vmax.bf16 %v1484, %v1515
    %v1526 = vmax.bf16 %v1485, %v1518
    %v1527 = vld [vmem:[#allocation2 + $0x20] sm:$0xf0]
    %v1528 = vld [vmem:[#allocation2 + $0x28] sm:$0xff]
    %v1529 = vld [vmem:[#allocation2 + $0x30] sm:$0xff]
    %v1530 = vld [vmem:[#allocation2 + $0x38] sm:$0xff]
    %v1531 = vld [vmem:[#allocation2 + $0x40] sm:$0x3]
    %vm1537 = vcmask 1043456
    %v1538 = vrot.slane %v1527, 4
    %v1539 = vrot.slane %v1528, 4
    %v1540 = vsel %vm1537, %v1538, %v1539
    %v1541 = vrot.slane %v1529, 4
    %v1542 = vsel %vm1537, %v1539, %v1541
    %v1543 = vrot.slane %v1530, 4
    %v1544 = vsel %vm1537, %v1541, %v1543
    %v1545 = vrot.slane %v1531, 4
    %v1546 = vsel %vm1537, %v1543, %v1545
    %v1551 = vmax.bf16 %v1523, %v1540
    %v1552 = vmax.bf16 %v1524, %v1542
    %v1553 = vmax.bf16 %v1525, %v1544
    %v1554 = vmax.bf16 %v1526, %v1546
    %v1555 = vld [vmem:[#allocation2 + $0x48] sm:$0xff]
    %v1556 = vld [vmem:[#allocation2 + $0x50] sm:$0xff]
    %v1557 = vld [vmem:[#allocation2 + $0x58] sm:$0xff]
    %v1558 = vld [vmem:[#allocation2 + $0x60] sm:$0x3f]
    %v1559 = vmax.bf16 %v1551, %v1555
    %v1560 = vmax.bf16 %v1552, %v1556
    %v1561 = vmax.bf16 %v1553, %v1557
    %v1562 = vmax.bf16 %v1554, %v1558
    %v1563 = vld [vmem:[#allocation2 + $0x60] sm:$0x7f]
    %v1565 = vshrl.u32 %v1555, 16
    %v1567 = vshll.u32 %v1555, 16
    %v1569 = vrot.slane %v1567, 1
    %v1570 = vor.u32 %v1565, %v1569
    %v1572 = vshll.u32 %v1556, 16
    %v1574 = vrot.slane %v1572, 1
    %v1575 = vsel %vm1487, %v1570, %v1574
    %v1576 = vshrl.u32 %v1556, 16
    %v1578 = vor.u32 %v1576, %v1574
    %v1580 = vshll.u32 %v1557, 16
    %v1582 = vrot.slane %v1580, 1
    %v1583 = vsel %vm1487, %v1578, %v1582
    %v1584 = vshrl.u32 %v1557, 16
    %v1586 = vor.u32 %v1584, %v1582
    %v1588 = vshll.u32 %v1563, 16
    %v1590 = vrot.slane %v1588, 1
    %v1591 = vsel %vm1487, %v1586, %v1590
    %v1592 = vshrl.u32 %v1563, 16
    %v1594 = vor.u32 %v1592, %v1590
    %v1599 = vmax.bf16 %v1559, %v1575
    %v1600 = vmax.bf16 %v1560, %v1583
    %v1601 = vmax.bf16 %v1561, %v1591
    %v1602 = vmax.bf16 %v1562, %v1594
    %v1603 = vld [vmem:[#allocation2 + $0x60] sm:$0xc0]
    %v1604 = vld [vmem:[#allocation2 + $0x68] sm:$0xff]
    %v1605 = vld [vmem:[#allocation2 + $0x70] sm:$0xff]
    %v1606 = vld [vmem:[#allocation2 + $0x78] sm:$0xff]
    %v1607 = vld [vmem:[#allocation2 + $0x80] sm:$0xf]
    %vm1613 = vcmask 1041408
    %v1614 = vrot.slane %v1603, 6
    %v1615 = vrot.slane %v1604, 6
    %v1616 = vsel %vm1613, %v1614, %v1615
    %v1617 = vrot.slane %v1605, 6
    %v1618 = vsel %vm1613, %v1615, %v1617
    %v1619 = vrot.slane %v1606, 6
    %v1620 = vsel %vm1613, %v1617, %v1619
    %v1621 = vrot.slane %v1607, 6
    %v1622 = vsel %vm1613, %v1619, %v1621
    %v1627 = vmax.bf16 %v1599, %v1616
    %v1628 = vmax.bf16 %v1600, %v1618
    %v1629 = vmax.bf16 %v1601, %v1620
    %v1630 = vmax.bf16 %v1602, %v1622
    %v1631 = vld [vmem:[#allocation2] sm:$0xc0]
    %v1632 = vld [vmem:[#allocation2 + $0x18] sm:$0xff]
    %v1633 = vld [vmem:[#allocation2 + $0x20] sm:$0xf]
    %v1639 = vrot.slane %v1631, 6
    %v1640 = vrot.slane %v1483, 6
    %v1641 = vsel %vm1613, %v1639, %v1640
    %v1642 = vrot.slane %v1484, 6
    %v1643 = vsel %vm1613, %v1640, %v1642
    %v1644 = vrot.slane %v1632, 6
    %v1645 = vsel %vm1613, %v1642, %v1644
    %v1646 = vrot.slane %v1633, 6
    %v1647 = vsel %vm1613, %v1644, %v1646
    %v1652 = vmax.bf16 %v1627, %v1641
    %v1653 = vmax.bf16 %v1628, %v1643
    %v1654 = vmax.bf16 %v1629, %v1645
    %v1655 = vmax.bf16 %v1630, %v1647
    %v1656 = vld [vmem:[#allocation2 + $0x20] sm:$0x1f]
    %vm1657 = vsmask.f32 1280
    %v1659 = vshrl.u32 %v1631, 16
    %v1661 = vrot.slane %v1659, 6
    %v1662 = vshll.u32 %v1631, 16
    %v1664 = vrot.slane %v1662, 7
    %v1665 = vor.u32 %v1661, %v1664
    %v1666 = vrot.slane %v1500, 6
    %v1667 = vrot.slane %v1496, 7
    %v1668 = vor.u32 %v1666, %v1667
    %v1669 = vsel %vm1657, %v1665, %v1668
    %v1670 = vrot.slane %v1508, 6
    %v1671 = vrot.slane %v1504, 7
    %v1672 = vor.u32 %v1670, %v1671
    %v1673 = vsel %vm1657, %v1668, %v1672
    %v1675 = vshrl.u32 %v1632, 16
    %v1677 = vrot.slane %v1675, 6
    %v1678 = vshll.u32 %v1632, 16
    %v1680 = vrot.slane %v1678, 7
    %v1681 = vor.u32 %v1677, %v1680
    %v1682 = vsel %vm1657, %v1672, %v1681
    %v1684 = vshrl.u32 %v1656, 16
    %v1686 = vrot.slane %v1684, 6
    %v1687 = vshll.u32 %v1656, 16
    %v1689 = vrot.slane %v1687, 7
    %v1690 = vor.u32 %v1686, %v1689
    %v1691 = vsel %vm1657, %v1681, %v1690
    %v1696 = vmax.bf16 %v1652, %v1669
    %v1697 = vmax.bf16 %v1653, %v1673
    %v1698 = vmax.bf16 %v1654, %v1682
    %v1699 = vmax.bf16 %v1655, %v1691
    %v1700 = vld [vmem:[#allocation2 + $0x28] sm:$0xfc]
    %v1701 = vld [vmem:[#allocation2 + $0x40] sm:$0xff]
    %vm1704 = vcmask 1045504
    %v1705 = vrot.slane %v1700, 2
    %v1706 = vrot.slane %v1529, 2
    %v1707 = vsel %vm1704, %v1705, %v1706
    %v1708 = vrot.slane %v1530, 2
    %v1709 = vsel %vm1704, %v1706, %v1708
    %v1710 = vrot.slane %v1701, 2
    %v1711 = vsel %vm1704, %v1708, %v1710
    %v1716 = vmax.bf16 %v1696, %v1707
    %v1717 = vmax.bf16 %v1697, %v1709
    %v1718 = vmax.bf16 %v1698, %v1711
    %v1719 = vmax.bf16 %v1699, %v1710
    %v1720 = vld [vmem:[%s7] sm:$0xff]
    %v1721 = vld [vmem:[%s7 + $0x8] sm:$0xff]
    %v1722 = vld [vmem:[%s7 + $0x10] sm:$0xff]
    %v1723 = vld [vmem:[%s7 + $0x18] sm:$0xff]
    %v1724 = vld [vmem:[%s7 + $0x20] sm:$0xff]
    %v1725 = vld [vmem:[%s7 + $0x28] sm:$0xff]
    %v1726 = vld [vmem:[%s7 + $0x30] sm:$0xff]
    %v1727 = vld [vmem:[%s7 + $0x38] sm:$0xf]
    %v1728 = vpack.c.bf16 %v1721, %v1720
    %v1729 = vpack.c.bf16 %v1723, %v1722
    %v1730 = vpack.c.bf16 %v1725, %v1724
    %v1731 = vpack.c.bf16 %v1727, %v1726
    %1732 = vst.msk [vmem:[#allocation5] sm:$0xff] %vm1061, 0
    %1733 = vst.msk [vmem:[#allocation5 + $0x8] sm:$0xff] %vm1061, 0
    %1734 = vst.msk [vmem:[#allocation5 + $0x10] sm:$0xff] %vm1061, 0
    %1735 = vst.msk [vmem:[#allocation5 + $0x18] sm:$0xff] %vm1061, 0
    %1736 = vst.msk [vmem:[#allocation5 + $0x20] sm:$0xff] %vm1061, 0
    %1737 = vst.msk [vmem:[#allocation5 + $0x28] sm:$0xff] %vm1061, 0
    %1738 = vst.msk [vmem:[#allocation5 + $0x30] sm:$0xff] %vm1061, 0
    %1739 = vst.msk [vmem:[#allocation5 + $0x38] sm:$0xff] %vm1061, 0
    %1741 = vset.pattern.permute.xlu0 0
    %1742 = vperm.xlu0 %1741, %v1728
    %v1743 = vpop.permute.xlu0 %1742
    %1746 = vset.pattern.permute.xlu0 0
    %1747 = vperm.xlu0 %1746, %v1729
    %v1748 = vpop.permute.xlu0 %1747
    %1751 = vset.pattern.permute.xlu0 0
    %1752 = vperm.xlu0 %1751, %v1730
    %v1753 = vpop.permute.xlu0 %1752
    %1756 = vset.pattern.permute.xlu0 0
    %1757 = vperm.xlu0 %1756, %v1731
    %v1758 = vpop.permute.xlu0 %1757
    %v1760 = vmul.bf16 %v1716, %v1743
    %v1761 = vmul.bf16 %v1717, %v1748
    %v1762 = vmul.bf16 %v1718, %v1753
    %v1763 = vmul.bf16 %v1719, %v1758
    %1764 = vst.msk [vmem:[#allocation5 + $0x10] sm:$0xff] %vm1061, %v1760
    %1765 = vst.msk [vmem:[#allocation5 + $0x18] sm:$0xff] %vm1061, %v1761
    %1766 = vst.msk [vmem:[#allocation5 + $0x20] sm:$0xff] %vm1061, %v1762
    %vm1767 = vcmask 521216
    %1768 = vst.msk [vmem:[#allocation5 + $0x28] sm:$0x3f] %vm1767, %v1763
    %v1769 = vld [vmem:[#allocation5 + $0x8] sm:$0xfe]
    %v1770 = vld [vmem:[#allocation5 + $0x10] sm:$0xff]
    %v1771 = vld [vmem:[#allocation5 + $0x18] sm:$0xff]
    %v1772 = vld [vmem:[#allocation5 + $0x20] sm:$0xff]
    %v1773 = vld [vmem:[#allocation5 + $0x28] sm:$0x3]
    %v1774 = vld [vmem:[%s4] sm:$0xf]
    %v1775 = vld [vmem:[%s4 + $0x4] sm:$0xf]
    %v1776 = vld [vmem:[%s4 + $0x8] sm:$0xf]
    %v1777 = vld [vmem:[%s4 + $0xc] sm:$0xf]
    %v1778 = vld [vmem:[%s4 + $0x10] sm:$0xf]
    %v1779 = vld [vmem:[%s4 + $0x14] sm:$0xf]
    %v1780 = vld [vmem:[%s4 + $0x18] sm:$0xf]
    %v1781 = vld [vmem:[%s4 + $0x1c] sm:$0xf]
    %v1782 = vld [vmem:[#allocation5 + $0x8] sm:$0xfc]
    %v1783 = vld [vmem:[%s4 + $0x20] sm:$0xf]
    %v1784 = vld [vmem:[%s4 + $0x24] sm:$0xf]
    %v1785 = vld [vmem:[%s4 + $0x28] sm:$0xf]
    %v1786 = vld [vmem:[%s4 + $0x2c] sm:$0xf]
    %v1787 = vld [vmem:[%s4 + $0x30] sm:$0xf]
    %v1788 = vld [vmem:[%s4 + $0x34] sm:$0xf]
    %v1789 = vld [vmem:[%s4 + $0x38] sm:$0xf]
    %v1790 = vld [vmem:[%s4 + $0x3c] sm:$0xf]
    %v1796 = vrot.slane %v1782, 2
    %v1797 = vrot.slane %v1770, 2
    %v1798 = vsel %vm1704, %v1796, %v1797
    %v1799 = vrot.slane %v1771, 2
    %v1800 = vsel %vm1704, %v1797, %v1799
    %v1801 = vrot.slane %v1772, 2
    %v1802 = vsel %vm1704, %v1799, %v1801
    %v1803 = vrot.slane %v1773, 2
    %v1804 = vsel %vm1704, %v1801, %v1803
    %v1813 = vunpack.c.l.b16 %v1783
    %v1814 = vunpack.c.l.b16 %v1784
    %v1815 = vunpack.c.l.b16 %v1785
    %v1816 = vunpack.c.l.b16 %v1786
    %v1817 = vunpack.c.l.b16 %v1787
    %v1818 = vunpack.c.l.b16 %v1788
    %v1819 = vunpack.c.l.b16 %v1789
    %v1820 = vunpack.c.l.b16 %v1790
    %v1821 = vpack.c.b16 %v1814, %v1813
    %v1822 = vpack.c.b16 %v1816, %v1815
    %v1823 = vpack.c.b16 %v1818, %v1817
    %v1824 = vpack.c.b16 %v1820, %v1819
    %v1830 = vsel %vm1061, %v1798, 0
    %v1833 = vsel %vm1061, %v1800, 0
    %v1836 = vsel %vm1061, %v1802, 0
    %v1839 = vsel %vm1061, %v1804, 0
    %1841 = vmatprep.subr.bf16.mxu0 0
    %1842 = vmatpush1.bf16.msra.mxu0 %v1821
    %1843 = vmatprep.subr.bf16.mxu0 0
    %1844 = vmatpush1.bf16.msra.mxu0 %v1822
    %1845 = vmatprep.subr.bf16.mxu0 0
    %1846 = vmatpush1.bf16.msra.mxu0 %v1823
    %1847 = vmatprep.subr.bf16.mxu0 0
    %1848 = vmatpush1.bf16.msra.mxu0 %v1824
    %1849 = vmatprep.subr.bf16.mxu0 0
    %1850 = vmatpush1.bf16.msra.mxu0 0
    %1851 = vmatprep.subr.bf16.mxu0 0
    %1852 = vmatpush1.bf16.msra.mxu0 0
    %1853 = vmatprep.subr.bf16.mxu0 0
    %1854 = vmatpush1.bf16.msra.mxu0 0
    %1855 = vmatprep.subr.bf16.mxu0 0
    %1856 = vmatpush1.bf16.msra.mxu0 0
    %1857 = vmatprep.subr.bf16.mxu0 0
    %1858 = vmatpush1.bf16.msra.mxu0 0
    %1859 = vmatprep.subr.bf16.mxu0 0
    %1860 = vmatpush1.bf16.msra.mxu0 0
    %1861 = vmatprep.subr.bf16.mxu0 0
    %1862 = vmatpush1.bf16.msra.mxu0 0
    %1863 = vmatprep.subr.bf16.mxu0 0
    %1864 = vmatpush1.bf16.msra.mxu0 0
    %1865 = vmatprep.subr.bf16.mxu0 0
    %1866 = vmatpush1.bf16.msra.mxu0 0
    %1867 = vmatprep.subr.bf16.mxu0 0
    %1868 = vmatpush1.bf16.msra.mxu0 0
    %1869 = vmatprep.subr.bf16.mxu0 0
    %1870 = vmatpush1.bf16.msra.mxu0 0
    %1871 = vmatprep.subr.bf16.mxu0 0
    %1872 = vmatpush1.bf16.msra.mxu0 0
    %1873 = vmatprep.mubr.bf16.mxu0 0
    %1874 = vmatmul.mubr.bf16.gmra.mrb[0].mxu0 %v1830
    %v1875 = vpop.f32.mrb[0].mxu0
    %v1876 = vadd.f32 0.0, %v1875
    %v1877 = vpop.f32.mrb[0].mxu0
    %v1878 = vpop.f32.mrb[0].mxu0
    %v1879 = vadd.f32 0.0, %v1878
    %v1880 = vpop.f32.mrb[0].mxu0
    %1881 = vmatprep.mubr.bf16.mxu0 0
    %1882 = vmatmul.mubr.bf16.gmra.mrb[0].mxu0 %v1833
    %v1883 = vpop.f32.mrb[0].mxu0
    %v1884 = vadd.f32 0.0, %v1883
    %v1885 = vpop.f32.mrb[0].mxu0
    %v1886 = vpop.f32.mrb[0].mxu0
    %v1887 = vadd.f32 0.0, %v1886
    %v1888 = vpop.f32.mrb[0].mxu0
    %1889 = vmatprep.mubr.bf16.mxu0 0
    %1890 = vmatmul.mubr.bf16.gmra.mrb[0].mxu0 %v1836
    %v1891 = vpop.f32.mrb[0].mxu0
    %v1892 = vadd.f32 0.0, %v1891
    %v1893 = vpop.f32.mrb[0].mxu0
    %v1894 = vpop.f32.mrb[0].mxu0
    %v1895 = vadd.f32 0.0, %v1894
    %v1896 = vpop.f32.mrb[0].mxu0
    %1897 = vmatprep.mubr.bf16.mxu0 0
    %1898 = vmatmul.mubr.bf16.gmra.mrb[0].mxu0 %v1839
    %v1899 = vpop.f32.mrb[0].mxu0
    %v1900 = vadd.f32 0.0, %v1899
    %v1901 = vpop.f32.mrb[0].mxu0
    %v1902 = vpop.f32.mrb[0].mxu0
    %v1903 = vadd.f32 0.0, %v1902
    %v1904 = vpop.f32.mrb[0].mxu0
    %1905 = vdwg.mxu0
    %vm1906 = vsmask.f32 6400
    %v1908 = vshrl.u32 %v1769, 16
    %v1910 = vrot.slane %v1908, 1
    %v1911 = vshll.u32 %v1769, 16
    %v1913 = vrot.slane %v1911, 2
    %v1914 = vor.u32 %v1910, %v1913
    %v1916 = vshrl.u32 %v1770, 16
    %v1918 = vrot.slane %v1916, 1
    %v1919 = vshll.u32 %v1770, 16
    %v1921 = vrot.slane %v1919, 2
    %v1922 = vor.u32 %v1918, %v1921
    %v1923 = vsel %vm1906, %v1914, %v1922
    %v1925 = vshrl.u32 %v1771, 16
    %v1927 = vrot.slane %v1925, 1
    %v1928 = vshll.u32 %v1771, 16
    %v1930 = vrot.slane %v1928, 2
    %v1931 = vor.u32 %v1927, %v1930
    %v1932 = vsel %vm1906, %v1922, %v1931
    %v1934 = vshrl.u32 %v1772, 16
    %v1936 = vrot.slane %v1934, 1
    %v1937 = vshll.u32 %v1772, 16
    %v1939 = vrot.slane %v1937, 2
    %v1940 = vor.u32 %v1936, %v1939
    %v1941 = vsel %vm1906, %v1931, %v1940
    %v1943 = vshrl.u32 %v1773, 16
    %v1945 = vrot.slane %v1943, 1
    %v1946 = vshll.u32 %v1773, 16
    %v1948 = vrot.slane %v1946, 2
    %v1949 = vor.u32 %v1945, %v1948
    %v1950 = vsel %vm1906, %v1940, %v1949
    %v1959 = vunpack.c.l.b16 %v1774
    %v1960 = vunpack.c.l.b16 %v1775
    %v1961 = vunpack.c.l.b16 %v1776
    %v1962 = vunpack.c.l.b16 %v1777
    %v1963 = vunpack.c.l.b16 %v1778
    %v1964 = vunpack.c.l.b16 %v1779
    %v1965 = vunpack.c.l.b16 %v1780
    %v1966 = vunpack.c.l.b16 %v1781
    %v1967 = vpack.c.b16 %v1960, %v1959
    %v1968 = vpack.c.b16 %v1962, %v1961
    %v1969 = vpack.c.b16 %v1964, %v1963
    %v1970 = vpack.c.b16 %v1966, %v1965
    %v1976 = vsel %vm1061, %v1923, 0
    %v1979 = vsel %vm1061, %v1932, 0
    %v1982 = vsel %vm1061, %v1941, 0
    %v1985 = vsel %vm1061, %v1950, 0
    %1987 = vmatprep.subr.bf16.mxu0 0
    %1988 = vmatpush1.bf16.msra.mxu0 %v1967
    %1989 = vmatprep.subr.bf16.mxu0 0
    %1990 = vmatpush1.bf16.msra.mxu0 %v1968
    %1991 = vmatprep.subr.bf16.mxu0 0
    %1992 = vmatpush1.bf16.msra.mxu0 %v1969
    %1993 = vmatprep.subr.bf16.mxu0 0
    %1994 = vmatpush1.bf16.msra.mxu0 %v1970
    %1995 = vmatprep.subr.bf16.mxu0 0
    %1996 = vmatpush1.bf16.msra.mxu0 0
    %1997 = vmatprep.subr.bf16.mxu0 0
    %1998 = vmatpush1.bf16.msra.mxu0 0
    %1999 = vmatprep.subr.bf16.mxu0 0
    %2000 = vmatpush1.bf16.msra.mxu0 0
    %2001 = vmatprep.subr.bf16.mxu0 0
    %2002 = vmatpush1.bf16.msra.mxu0 0
    %2003 = vmatprep.subr.bf16.mxu0 0
    %2004 = vmatpush1.bf16.msra.mxu0 0
    %2005 = vmatprep.subr.bf16.mxu0 0
    %2006 = vmatpush1.bf16.msra.mxu0 0
    %2007 = vmatprep.subr.bf16.mxu0 0
    %2008 = vmatpush1.bf16.msra.mxu0 0
    %2009 = vmatprep.subr.bf16.mxu0 0
    %2010 = vmatpush1.bf16.msra.mxu0 0
    %2011 = vmatprep.subr.bf16.mxu0 0
    %2012 = vmatpush1.bf16.msra.mxu0 0
    %2013 = vmatprep.subr.bf16.mxu0 0
    %2014 = vmatpush1.bf16.msra.mxu0 0
    %2015 = vmatprep.subr.bf16.mxu0 0
    %2016 = vmatpush1.bf16.msra.mxu0 0
    %2017 = vmatprep.subr.bf16.mxu0 0
    %2018 = vmatpush1.bf16.msra.mxu0 0
    %2019 = vmatprep.mubr.bf16.mxu0 0
    %2020 = vmatmul.mubr.bf16.gmra.mrb[0].mxu0 %v1976
    %v2021 = vpop.f32.mrb[0].mxu0
    %v2022 = vadd.f32 %v1876, %v2021
    %v2023 = vpop.f32.mrb[0].mxu0
    %v2024 = vpop.f32.mrb[0].mxu0
    %v2025 = vadd.f32 %v1879, %v2024
    %v2026 = vpop.f32.mrb[0].mxu0
    %2027 = vmatprep.mubr.bf16.mxu0 0
    %2028 = vmatmul.mubr.bf16.gmra.mrb[0].mxu0 %v1979
    %v2029 = vpop.f32.mrb[0].mxu0
    %v2030 = vadd.f32 %v1884, %v2029
    %v2031 = vpop.f32.mrb[0].mxu0
    %v2032 = vpop.f32.mrb[0].mxu0
    %v2033 = vadd.f32 %v1887, %v2032
    %v2034 = vpop.f32.mrb[0].mxu0
    %2035 = vmatprep.mubr.bf16.mxu0 0
    %2036 = vmatmul.mubr.bf16.gmra.mrb[0].mxu0 %v1982
    %v2037 = vpop.f32.mrb[0].mxu0
    %v2038 = vadd.f32 %v1892, %v2037
    %v2039 = vpop.f32.mrb[0].mxu0
    %v2040 = vpop.f32.mrb[0].mxu0
    %v2041 = vadd.f32 %v1895, %v2040
    %v2042 = vpop.f32.mrb[0].mxu0
    %2043 = vmatprep.mubr.bf16.mxu0 0
    %2044 = vmatmul.mubr.bf16.gmra.mrb[0].mxu0 %v1985
    %v2045 = vpop.f32.mrb[0].mxu0
    %v2046 = vadd.f32 %v1900, %v2045
    %v2047 = vpop.f32.mrb[0].mxu0
    %v2048 = vpop.f32.mrb[0].mxu0
    %v2049 = vadd.f32 %v1903, %v2048
    %v2050 = vpop.f32.mrb[0].mxu0
    %2051 = vdwg.mxu0
    %v2052 = vld [vmem:[#allocation5 + $0x28] sm:$0x7]
    %v2053 = vld [vmem:[%s4 + $0x40] sm:$0xf]
    %v2054 = vld [vmem:[%s4 + $0x44] sm:$0xf]
    %v2055 = vld [vmem:[%s4 + $0x48] sm:$0xf]
    %v2056 = vld [vmem:[%s4 + $0x4c] sm:$0xf]
    %v2057 = vld [vmem:[%s4 + $0x50] sm:$0xf]
    %v2058 = vld [vmem:[%s4 + $0x54] sm:$0xf]
    %v2059 = vld [vmem:[%s4 + $0x58] sm:$0xf]
    %v2060 = vld [vmem:[%s4 + $0x5c] sm:$0xf]
    %vm2061 = vsmask.f32 5376
    %v2063 = vshrl.u32 %v1782, 16
    %v2065 = vrot.slane %v2063, 2
    %v2066 = vshll.u32 %v1782, 16
    %v2068 = vrot.slane %v2066, 3
    %v2069 = vor.u32 %v2065, %v2068
    %v2070 = vrot.slane %v1916, 2
    %v2071 = vrot.slane %v1919, 3
    %v2072 = vor.u32 %v2070, %v2071
    %v2073 = vsel %vm2061, %v2069, %v2072
    %v2074 = vrot.slane %v1925, 2
    %v2075 = vrot.slane %v1928, 3
    %v2076 = vor.u32 %v2074, %v2075
    %v2077 = vsel %vm2061, %v2072, %v2076
    %v2078 = vrot.slane %v1934, 2
    %v2079 = vrot.slane %v1937, 3
    %v2080 = vor.u32 %v2078, %v2079
    %v2081 = vsel %vm2061, %v2076, %v2080
    %v2083 = vshrl.u32 %v2052, 16
    %v2085 = vrot.slane %v2083, 2
    %v2086 = vshll.u32 %v2052, 16
    %v2088 = vrot.slane %v2086, 3
    %v2089 = vor.u32 %v2085, %v2088
    %v2090 = vsel %vm2061, %v2080, %v2089
    %v2099 = vunpack.c.l.b16 %v2053
    %v2100 = vunpack.c.l.b16 %v2054
    %v2101 = vunpack.c.l.b16 %v2055
    %v2102 = vunpack.c.l.b16 %v2056
    %v2103 = vunpack.c.l.b16 %v2057
    %v2104 = vunpack.c.l.b16 %v2058
    %v2105 = vunpack.c.l.b16 %v2059
    %v2106 = vunpack.c.l.b16 %v2060
    %v2107 = vpack.c.b16 %v2100, %v2099
    %v2108 = vpack.c.b16 %v2102, %v2101
    %v2109 = vpack.c.b16 %v2104, %v2103
    %v2110 = vpack.c.b16 %v2106, %v2105
    %v2116 = vsel %vm1061, %v2073, 0
    %v2119 = vsel %vm1061, %v2077, 0
    %v2122 = vsel %vm1061, %v2081, 0
    %v2125 = vsel %vm1061, %v2090, 0
    %2127 = vmatprep.subr.bf16.mxu0 0
    %2128 = vmatpush1.bf16.msra.mxu0 %v2107
    %2129 = vmatprep.subr.bf16.mxu0 0
    %2130 = vmatpush1.bf16.msra.mxu0 %v2108
    %2131 = vmatprep.subr.bf16.mxu0 0
    %2132 = vmatpush1.bf16.msra.mxu0 %v2109
    %2133 = vmatprep.subr.bf16.mxu0 0
    %2134 = vmatpush1.bf16.msra.mxu0 %v2110
    %2135 = vmatprep.subr.bf16.mxu0 0
    %2136 = vmatpush1.bf16.msra.mxu0 0
    %2137 = vmatprep.subr.bf16.mxu0 0
    %2138 = vmatpush1.bf16.msra.mxu0 0
    %2139 = vmatprep.subr.bf16.mxu0 0
    %2140 = vmatpush1.bf16.msra.mxu0 0
    %2141 = vmatprep.subr.bf16.mxu0 0
    %2142 = vmatpush1.bf16.msra.mxu0 0
    %2143 = vmatprep.subr.bf16.mxu0 0
    %2144 = vmatpush1.bf16.msra.mxu0 0
    %2145 = vmatprep.subr.bf16.mxu0 0
    %2146 = vmatpush1.bf16.msra.mxu0 0
    %2147 = vmatprep.subr.bf16.mxu0 0
    %2148 = vmatpush1.bf16.msra.mxu0 0
    %2149 = vmatprep.subr.bf16.mxu0 0
    %2150 = vmatpush1.bf16.msra.mxu0 0
    %2151 = vmatprep.subr.bf16.mxu0 0
    %2152 = vmatpush1.bf16.msra.mxu0 0
    %2153 = vmatprep.subr.bf16.mxu0 0
    %2154 = vmatpush1.bf16.msra.mxu0 0
    %2155 = vmatprep.subr.bf16.mxu0 0
    %2156 = vmatpush1.bf16.msra.mxu0 0
    %2157 = vmatprep.subr.bf16.mxu0 0
    %2158 = vmatpush1.bf16.msra.mxu0 0
    %2159 = vmatprep.mubr.bf16.mxu0 0
    %2160 = vmatmul.mubr.bf16.gmra.mrb[0].mxu0 %v2116
    %v2161 = vpop.f32.mrb[0].mxu0
    %v2162 = vadd.f32 0.0, %v2161
    %v2163 = vpop.f32.mrb[0].mxu0
    %v2164 = vpop.f32.mrb[0].mxu0
    %v2165 = vadd.f32 0.0, %v2164
    %v2166 = vpop.f32.mrb[0].mxu0
    %2167 = vmatprep.mubr.bf16.mxu0 0
    %2168 = vmatmul.mubr.bf16.gmra.mrb[0].mxu0 %v2119
    %v2169 = vpop.f32.mrb[0].mxu0
    %v2170 = vadd.f32 0.0, %v2169
    %v2171 = vpop.f32.mrb[0].mxu0
    %v2172 = vpop.f32.mrb[0].mxu0
    %v2173 = vadd.f32 0.0, %v2172
    %v2174 = vpop.f32.mrb[0].mxu0
    %2175 = vmatprep.mubr.bf16.mxu0 0
    %2176 = vmatmul.mubr.bf16.gmra.mrb[0].mxu0 %v2122
    %v2177 = vpop.f32.mrb[0].mxu0
    %v2178 = vadd.f32 0.0, %v2177
    %v2179 = vpop.f32.mrb[0].mxu0
    %v2180 = vpop.f32.mrb[0].mxu0
    %v2181 = vadd.f32 0.0, %v2180
    %v2182 = vpop.f32.mrb[0].mxu0
    %2183 = vmatprep.mubr.bf16.mxu0 0
    %2184 = vmatmul.mubr.bf16.gmra.mrb[0].mxu0 %v2125
    %v2185 = vpop.f32.mrb[0].mxu0
    %v2186 = vadd.f32 0.0, %v2185
    %v2187 = vpop.f32.mrb[0].mxu0
    %v2188 = vpop.f32.mrb[0].mxu0
    %v2189 = vadd.f32 0.0, %v2188
    %v2190 = vpop.f32.mrb[0].mxu0
    %2191 = vdwg.mxu0
    %v2192 = vadd.f32 %v2022, %v2162
    %v2193 = vadd.f32 %v2025, %v2165
    %v2194 = vadd.f32 %v2030, %v2170
    %v2195 = vadd.f32 %v2033, %v2173
    %v2196 = vadd.f32 %v2038, %v2178
    %v2197 = vadd.f32 %v2041, %v2181
    %v2198 = vadd.f32 %v2046, %v2186
    %v2199 = vadd.f32 %v2049, %v2189
    %v2200 = vld [vmem:[#allocation5 + $0x8] sm:$0x80]
    %v2201 = vld [vmem:[#allocation5 + $0x28] sm:$0xff]
    %v2202 = vld [vmem:[%s4 + $0x60] sm:$0xf]
    %v2203 = vld [vmem:[%s4 + $0x64] sm:$0xf]
    %v2204 = vld [vmem:[%s4 + $0x68] sm:$0xf]
    %v2205 = vld [vmem:[%s4 + $0x6c] sm:$0xf]
    %v2206 = vld [vmem:[%s4 + $0x70] sm:$0xf]
    %v2207 = vld [vmem:[%s4 + $0x74] sm:$0xf]
    %v2208 = vld [vmem:[%s4 + $0x78] sm:$0xf]
    %v2209 = vld [vmem:[%s4 + $0x7c] sm:$0xf]
    %vm2210 = vsmask.f32 256
    %v2212 = vshrl.u32 %v2200, 16
    %v2214 = vrot.slane %v2212, 7
    %v2215 = vrot.slane %v1916, 7
    %v2216 = vor.u32 %v2215, %v1919
    %v2217 = vsel %vm2210, %v2214, %v2216
    %v2218 = vrot.slane %v1925, 7
    %v2219 = vor.u32 %v2218, %v1928
    %v2220 = vsel %vm2210, %v2215, %v2219
    %v2221 = vrot.slane %v1934, 7
    %v2222 = vor.u32 %v2221, %v1937
    %v2223 = vsel %vm2210, %v2218, %v2222
    %v2225 = vshrl.u32 %v2201, 16
    %v2227 = vrot.slane %v2225, 7
    %v2228 = vshll.u32 %v2201, 16
    %v2230 = vor.u32 %v2227, %v2228
    %v2231 = vsel %vm2210, %v2221, %v2230
    %v2240 = vunpack.c.l.b16 %v2202
    %v2241 = vunpack.c.l.b16 %v2203
    %v2242 = vunpack.c.l.b16 %v2204
    %v2243 = vunpack.c.l.b16 %v2205
    %v2244 = vunpack.c.l.b16 %v2206
    %v2245 = vunpack.c.l.b16 %v2207
    %v2246 = vunpack.c.l.b16 %v2208
    %v2247 = vunpack.c.l.b16 %v2209
    %v2248 = vpack.c.b16 %v2241, %v2240
    %v2249 = vpack.c.b16 %v2243, %v2242
    %v2250 = vpack.c.b16 %v2245, %v2244
    %v2251 = vpack.c.b16 %v2247, %v2246
    %v2257 = vsel %vm1061, %v2217, 0
    %v2260 = vsel %vm1061, %v2220, 0
    %v2263 = vsel %vm1061, %v2223, 0
    %v2266 = vsel %vm1061, %v2231, 0
    %2268 = vmatprep.subr.bf16.mxu0 0
    %2269 = vmatpush1.bf16.msra.mxu0 %v2248
    %2270 = vmatprep.subr.bf16.mxu0 0
    %2271 = vmatpush1.bf16.msra.mxu0 %v2249
    %2272 = vmatprep.subr.bf16.mxu0 0
    %2273 = vmatpush1.bf16.msra.mxu0 %v2250
    %2274 = vmatprep.subr.bf16.mxu0 0
    %2275 = vmatpush1.bf16.msra.mxu0 %v2251
    %2276 = vmatprep.subr.bf16.mxu0 0
    %2277 = vmatpush1.bf16.msra.mxu0 0
    %2278 = vmatprep.subr.bf16.mxu0 0
    %2279 = vmatpush1.bf16.msra.mxu0 0
    %2280 = vmatprep.subr.bf16.mxu0 0
    %2281 = vmatpush1.bf16.msra.mxu0 0
    %2282 = vmatprep.subr.bf16.mxu0 0
    %2283 = vmatpush1.bf16.msra.mxu0 0
    %2284 = vmatprep.subr.bf16.mxu0 0
    %2285 = vmatpush1.bf16.msra.mxu0 0
    %2286 = vmatprep.subr.bf16.mxu0 0
    %2287 = vmatpush1.bf16.msra.mxu0 0
    %2288 = vmatprep.subr.bf16.mxu0 0
    %2289 = vmatpush1.bf16.msra.mxu0 0
    %2290 = vmatprep.subr.bf16.mxu0 0
    %2291 = vmatpush1.bf16.msra.mxu0 0
    %2292 = vmatprep.subr.bf16.mxu0 0
    %2293 = vmatpush1.bf16.msra.mxu0 0
    %2294 = vmatprep.subr.bf16.mxu0 0
    %2295 = vmatpush1.bf16.msra.mxu0 0
    %2296 = vmatprep.subr.bf16.mxu0 0
    %2297 = vmatpush1.bf16.msra.mxu0 0
    %2298 = vmatprep.subr.bf16.mxu0 0
    %2299 = vmatpush1.bf16.msra.mxu0 0
    %2300 = vmatprep.mubr.bf16.mxu0 0
    %2301 = vmatmul.mubr.bf16.gmra.mrb[0].mxu0 %v2257
    %v2302 = vpop.f32.mrb[0].mxu0
    %v2303 = vadd.f32 0.0, %v2302
    %v2304 = vpop.f32.mrb[0].mxu0
    %v2305 = vpop.f32.mrb[0].mxu0
    %v2306 = vadd.f32 0.0, %v2305
    %v2307 = vpop.f32.mrb[0].mxu0
    %2308 = vmatprep.mubr.bf16.mxu0 0
    %2309 = vmatmul.mubr.bf16.gmra.mrb[0].mxu0 %v2260
    %v2310 = vpop.f32.mrb[0].mxu0
    %v2311 = vadd.f32 0.0, %v2310
    %v2312 = vpop.f32.mrb[0].mxu0
    %v2313 = vpop.f32.mrb[0].mxu0
    %v2314 = vadd.f32 0.0, %v2313
    %v2315 = vpop.f32.mrb[0].mxu0
    %2316 = vmatprep.mubr.bf16.mxu0 0
    %2317 = vmatmul.mubr.bf16.gmra.mrb[0].mxu0 %v2263
    %v2318 = vpop.f32.mrb[0].mxu0
    %v2319 = vadd.f32 0.0, %v2318
    %v2320 = vpop.f32.mrb[0].mxu0
    %v2321 = vpop.f32.mrb[0].mxu0
    %v2322 = vadd.f32 0.0, %v2321
    %v2323 = vpop.f32.mrb[0].mxu0
    %2324 = vmatprep.mubr.bf16.mxu0 0
    %2325 = vmatmul.mubr.bf16.gmra.mrb[0].mxu0 %v2266
    %v2326 = vpop.f32.mrb[0].mxu0
    %v2327 = vadd.f32 0.0, %v2326
    %v2328 = vpop.f32.mrb[0].mxu0
    %v2329 = vpop.f32.mrb[0].mxu0
    %v2330 = vadd.f32 0.0, %v2329
    %v2331 = vpop.f32.mrb[0].mxu0
    %2332 = vdwg.mxu0
    %v2333 = vadd.f32 %v2192, %v2303
    %v2334 = vadd.f32 %v2193, %v2306
    %v2335 = vadd.f32 %v2194, %v2311
    %v2336 = vadd.f32 %v2195, %v2314
    %v2337 = vadd.f32 %v2196, %v2319
    %v2338 = vadd.f32 %v2197, %v2322
    %v2339 = vadd.f32 %v2198, %v2327
    %v2340 = vadd.f32 %v2199, %v2330
    %v2341 = vld [vmem:[%s4 + $0x80] sm:$0xf]
    %v2342 = vld [vmem:[%s4 + $0x84] sm:$0xf]
    %v2343 = vld [vmem:[%s4 + $0x88] sm:$0xf]
    %v2344 = vld [vmem:[%s4 + $0x8c] sm:$0xf]
    %v2345 = vld [vmem:[%s4 + $0x90] sm:$0xf]
    %v2346 = vld [vmem:[%s4 + $0x94] sm:$0xf]
    %v2347 = vld [vmem:[%s4 + $0x98] sm:$0xf]
    %v2348 = vld [vmem:[%s4 + $0x9c] sm:$0xf]
    %v2357 = vunpack.c.l.b16 %v2341
    %v2358 = vunpack.c.l.b16 %v2342
    %v2359 = vunpack.c.l.b16 %v2343
    %v2360 = vunpack.c.l.b16 %v2344
    %v2361 = vunpack.c.l.b16 %v2345
    %v2362 = vunpack.c.l.b16 %v2346
    %v2363 = vunpack.c.l.b16 %v2347
    %v2364 = vunpack.c.l.b16 %v2348
    %v2365 = vpack.c.b16 %v2358, %v2357
    %v2366 = vpack.c.b16 %v2360, %v2359
    %v2367 = vpack.c.b16 %v2362, %v2361
    %v2368 = vpack.c.b16 %v2364, %v2363
    %v2373 = vsel %vm1061, %v1770, 0
    %v2375 = vsel %vm1061, %v1771, 0
    %v2377 = vsel %vm1061, %v1772, 0
    %v2379 = vsel %vm1061, %v2201, 0
    %2381 = vmatprep.subr.bf16.mxu0 0
    %2382 = vmatpush1.bf16.msra.mxu0 %v2365
    %2383 = vmatprep.subr.bf16.mxu0 0
    %2384 = vmatpush1.bf16.msra.mxu0 %v2366
    %2385 = vmatprep.subr.bf16.mxu0 0
    %2386 = vmatpush1.bf16.msra.mxu0 %v2367
    %2387 = vmatprep.subr.bf16.mxu0 0
    %2388 = vmatpush1.bf16.msra.mxu0 %v2368
    %2389 = vmatprep.subr.bf16.mxu0 0
    %2390 = vmatpush1.bf16.msra.mxu0 0
    %2391 = vmatprep.subr.bf16.mxu0 0
    %2392 = vmatpush1.bf16.msra.mxu0 0
    %2393 = vmatprep.subr.bf16.mxu0 0
    %2394 = vmatpush1.bf16.msra.mxu0 0
    %2395 = vmatprep.subr.bf16.mxu0 0
    %2396 = vmatpush1.bf16.msra.mxu0 0
    %2397 = vmatprep.subr.bf16.mxu0 0
    %2398 = vmatpush1.bf16.msra.mxu0 0
    %2399 = vmatprep.subr.bf16.mxu0 0
    %2400 = vmatpush1.bf16.msra.mxu0 0
    %2401 = vmatprep.subr.bf16.mxu0 0
    %2402 = vmatpush1.bf16.msra.mxu0 0
    %2403 = vmatprep.subr.bf16.mxu0 0
    %2404 = vmatpush1.bf16.msra.mxu0 0
    %2405 = vmatprep.subr.bf16.mxu0 0
    %2406 = vmatpush1.bf16.msra.mxu0 0
    %2407 = vmatprep.subr.bf16.mxu0 0
    %2408 = vmatpush1.bf16.msra.mxu0 0
    %2409 = vmatprep.subr.bf16.mxu0 0
    %2410 = vmatpush1.bf16.msra.mxu0 0
    %2411 = vmatprep.subr.bf16.mxu0 0
    %2412 = vmatpush1.bf16.msra.mxu0 0
    %2413 = vmatprep.mubr.bf16.mxu0 0
    %2414 = vmatmul.mubr.bf16.gmra.mrb[0].mxu0 %v2373
    %v2415 = vpop.f32.mrb[0].mxu0
    %v2416 = vadd.f32 0.0, %v2415
    %v2417 = vpop.f32.mrb[0].mxu0
    %v2418 = vpop.f32.mrb[0].mxu0
    %v2419 = vadd.f32 0.0, %v2418
    %v2420 = vpop.f32.mrb[0].mxu0
    %2421 = vmatprep.mubr.bf16.mxu0 0
    %2422 = vmatmul.mubr.bf16.gmra.mrb[0].mxu0 %v2375
    %v2423 = vpop.f32.mrb[0].mxu0
    %v2424 = vadd.f32 0.0, %v2423
    %v2425 = vpop.f32.mrb[0].mxu0
    %v2426 = vpop.f32.mrb[0].mxu0
    %v2427 = vadd.f32 0.0, %v2426
    %v2428 = vpop.f32.mrb[0].mxu0
    %2429 = vmatprep.mubr.bf16.mxu0 0
    %2430 = vmatmul.mubr.bf16.gmra.mrb[0].mxu0 %v2377
    %v2431 = vpop.f32.mrb[0].mxu0
    %v2432 = vadd.f32 0.0, %v2431
    %v2433 = vpop.f32.mrb[0].mxu0
    %v2434 = vpop.f32.mrb[0].mxu0
    %v2435 = vadd.f32 0.0, %v2434
    %v2436 = vpop.f32.mrb[0].mxu0
    %2437 = vmatprep.mubr.bf16.mxu0 0
    %2438 = vmatmul.mubr.bf16.gmra.mrb[0].mxu0 %v2379
    %v2439 = vpop.f32.mrb[0].mxu0
    %v2440 = vadd.f32 0.0, %v2439
    %v2441 = vpop.f32.mrb[0].mxu0
    %v2442 = vpop.f32.mrb[0].mxu0
    %v2443 = vadd.f32 0.0, %v2442
    %v2444 = vpop.f32.mrb[0].mxu0
    %2445 = vdwg.mxu0
    %v2446 = vadd.f32 %v2333, %v2416
    %v2447 = vadd.f32 %v2334, %v2419
    %v2448 = vadd.f32 %v2335, %v2424
    %v2449 = vadd.f32 %v2336, %v2427
    %v2450 = vadd.f32 %v2337, %v2432
    %v2451 = vadd.f32 %v2338, %v2435
    %v2452 = vadd.f32 %v2339, %v2440
    %v2453 = vadd.f32 %v2340, %v2443
    %v2454 = vld [vmem:[#allocation5 + $0x10] sm:$0xff]
    %v2455 = vld [vmem:[#allocation5 + $0x18] sm:$0xff]
    %v2456 = vld [vmem:[#allocation5 + $0x20] sm:$0xff]
    %v2457 = vld [vmem:[#allocation5 + $0x28] sm:$0xff]
    %v2458 = vld [vmem:[#allocation5 + $0x30] sm:$0x1]
    %v2459 = vld [vmem:[%s4 + $0xa0] sm:$0xf]
    %v2460 = vld [vmem:[%s4 + $0xa4] sm:$0xf]
    %v2461 = vld [vmem:[%s4 + $0xa8] sm:$0xf]
    %v2462 = vld [vmem:[%s4 + $0xac] sm:$0xf]
    %v2463 = vld [vmem:[%s4 + $0xb0] sm:$0xf]
    %v2464 = vld [vmem:[%s4 + $0xb4] sm:$0xf]
    %v2465 = vld [vmem:[%s4 + $0xb8] sm:$0xf]
    %v2466 = vld [vmem:[%s4 + $0xbc] sm:$0xf]
    %v2468 = vshrl.u32 %v2454, 16
    %v2470 = vshll.u32 %v2454, 16
    %v2472 = vrot.slane %v2470, 1
    %v2473 = vor.u32 %v2468, %v2472
    %v2475 = vshll.u32 %v2455, 16
    %v2477 = vrot.slane %v2475, 1
    %v2478 = vsel %vm1487, %v2473, %v2477
    %v2479 = vshrl.u32 %v2455, 16
    %v2481 = vor.u32 %v2479, %v2477
    %v2483 = vshll.u32 %v2456, 16
    %v2485 = vrot.slane %v2483, 1
    %v2486 = vsel %vm1487, %v2481, %v2485
    %v2487 = vshrl.u32 %v2456, 16
    %v2489 = vor.u32 %v2487, %v2485
    %v2491 = vshll.u32 %v2457, 16
    %v2493 = vrot.slane %v2491, 1
    %v2494 = vsel %vm1487, %v2489, %v2493
    %v2495 = vshrl.u32 %v2457, 16
    %v2497 = vor.u32 %v2495, %v2493
    %v2499 = vshll.u32 %v2458, 16
    %v2501 = vrot.slane %v2499, 1
    %v2502 = vsel %vm1487, %v2497, %v2501
    %v2511 = vunpack.c.l.b16 %v2459
    %v2512 = vunpack.c.l.b16 %v2460
    %v2513 = vunpack.c.l.b16 %v2461
    %v2514 = vunpack.c.l.b16 %v2462
    %v2515 = vunpack.c.l.b16 %v2463
    %v2516 = vunpack.c.l.b16 %v2464
    %v2517 = vunpack.c.l.b16 %v2465
    %v2518 = vunpack.c.l.b16 %v2466
    %v2519 = vpack.c.b16 %v2512, %v2511
    %v2520 = vpack.c.b16 %v2514, %v2513
    %v2521 = vpack.c.b16 %v2516, %v2515
    %v2522 = vpack.c.b16 %v2518, %v2517
    %v2528 = vsel %vm1061, %v2478, 0
    %v2531 = vsel %vm1061, %v2486, 0
    %v2534 = vsel %vm1061, %v2494, 0
    %v2537 = vsel %vm1061, %v2502, 0
    %2539 = vmatprep.subr.bf16.mxu0 0
    %2540 = vmatpush1.bf16.msra.mxu0 %v2519
    %2541 = vmatprep.subr.bf16.mxu0 0
    %2542 = vmatpush1.bf16.msra.mxu0 %v2520
    %2543 = vmatprep.subr.bf16.mxu0 0
    %2544 = vmatpush1.bf16.msra.mxu0 %v2521
    %2545 = vmatprep.subr.bf16.mxu0 0
    %2546 = vmatpush1.bf16.msra.mxu0 %v2522
    %2547 = vmatprep.subr.bf16.mxu0 0
    %2548 = vmatpush1.bf16.msra.mxu0 0
    %2549 = vmatprep.subr.bf16.mxu0 0
    %2550 = vmatpush1.bf16.msra.mxu0 0
    %2551 = vmatprep.subr.bf16.mxu0 0
    %2552 = vmatpush1.bf16.msra.mxu0 0
    %2553 = vmatprep.subr.bf16.mxu0 0
    %2554 = vmatpush1.bf16.msra.mxu0 0
    %2555 = vmatprep.subr.bf16.mxu0 0
    %2556 = vmatpush1.bf16.msra.mxu0 0
    %2557 = vmatprep.subr.bf16.mxu0 0
    %2558 = vmatpush1.bf16.msra.mxu0 0
    %2559 = vmatprep.subr.bf16.mxu0 0
    %2560 = vmatpush1.bf16.msra.mxu0 0
    %2561 = vmatprep.subr.bf16.mxu0 0
    %2562 = vmatpush1.bf16.msra.mxu0 0
    %2563 = vmatprep.subr.bf16.mxu0 0
    %2564 = vmatpush1.bf16.msra.mxu0 0
    %2565 = vmatprep.subr.bf16.mxu0 0
    %2566 = vmatpush1.bf16.msra.mxu0 0
    %2567 = vmatprep.subr.bf16.mxu0 0
    %2568 = vmatpush1.bf16.msra.mxu0 0
    %2569 = vmatprep.subr.bf16.mxu0 0
    %2570 = vmatpush1.bf16.msra.mxu0 0
    %2571 = vmatprep.mubr.bf16.mxu0 0
    %2572 = vmatmul.mubr.bf16.gmra.mrb[0].mxu0 %v2528
    %v2573 = vpop.f32.mrb[0].mxu0
    %v2574 = vadd.f32 0.0, %v2573
    %v2575 = vpop.f32.mrb[0].mxu0
    %v2576 = vpop.f32.mrb[0].mxu0
    %v2577 = vadd.f32 0.0, %v2576
    %v2578 = vpop.f32.mrb[0].mxu0
    %2579 = vmatprep.mubr.bf16.mxu0 0
    %2580 = vmatmul.mubr.bf16.gmra.mrb[0].mxu0 %v2531
    %v2581 = vpop.f32.mrb[0].mxu0
    %v2582 = vadd.f32 0.0, %v2581
    %v2583 = vpop.f32.mrb[0].mxu0
    %v2584 = vpop.f32.mrb[0].mxu0
    %v2585 = vadd.f32 0.0, %v2584
    %v2586 = vpop.f32.mrb[0].mxu0
    %2587 = vmatprep.mubr.bf16.mxu0 0
    %2588 = vmatmul.mubr.bf16.gmra.mrb[0].mxu0 %v2534
    %v2589 = vpop.f32.mrb[0].mxu0
    %v2590 = vadd.f32 0.0, %v2589
    %v2591 = vpop.f32.mrb[0].mxu0
    %v2592 = vpop.f32.mrb[0].mxu0
    %v2593 = vadd.f32 0.0, %v2592
    %v2594 = vpop.f32.mrb[0].mxu0
    %2595 = vmatprep.mubr.bf16.mxu0 0
    %2596 = vmatmul.mubr.bf16.gmra.mrb[0].mxu0 %v2537
    %v2597 = vpop.f32.mrb[0].mxu0
    %v2598 = vadd.f32 0.0, %v2597
    %v2599 = vpop.f32.mrb[0].mxu0
    %v2600 = vpop.f32.mrb[0].mxu0
    %v2601 = vadd.f32 0.0, %v2600
    %v2602 = vpop.f32.mrb[0].mxu0
    %2603 = vdwg.mxu0
    %v2604 = vadd.f32 %v2446, %v2574
    %v2605 = vadd.f32 %v2447, %v2577
    %v2606 = vadd.f32 %v2448, %v2582
    %v2607 = vadd.f32 %v2449, %v2585
    %v2608 = vadd.f32 %v2450, %v2590
    %v2609 = vadd.f32 %v2451, %v2593
    %v2610 = vadd.f32 %v2452, %v2598
    %v2611 = vadd.f32 %v2453, %v2601
    %v2612 = vld [vmem:[#allocation5 + $0x10] sm:$0xe0]
    %v2613 = vld [vmem:[#allocation5 + $0x30] sm:$0x3f]
    %v2614 = vld [vmem:[%s4 + $0xc0] sm:$0xf]
    %v2615 = vld [vmem:[%s4 + $0xc4] sm:$0xf]
    %v2616 = vld [vmem:[%s4 + $0xc8] sm:$0xf]
    %v2617 = vld [vmem:[%s4 + $0xcc] sm:$0xf]
    %v2618 = vld [vmem:[%s4 + $0xd0] sm:$0xf]
    %v2619 = vld [vmem:[%s4 + $0xd4] sm:$0xf]
    %v2620 = vld [vmem:[%s4 + $0xd8] sm:$0xf]
    %v2621 = vld [vmem:[%s4 + $0xdc] sm:$0xf]
    %vm2622 = vsmask.f32 2304
    %v2624 = vshrl.u32 %v2612, 16
    %v2626 = vrot.slane %v2624, 5
    %v2627 = vshll.u32 %v2612, 16
    %v2629 = vrot.slane %v2627, 6
    %v2630 = vor.u32 %v2626, %v2629
    %v2631 = vrot.slane %v2479, 5
    %v2632 = vrot.slane %v2475, 6
    %v2633 = vor.u32 %v2631, %v2632
    %v2634 = vsel %vm2622, %v2630, %v2633
    %v2635 = vrot.slane %v2487, 5
    %v2636 = vrot.slane %v2483, 6
    %v2637 = vor.u32 %v2635, %v2636
    %v2638 = vsel %vm2622, %v2633, %v2637
    %v2639 = vrot.slane %v2495, 5
    %v2640 = vrot.slane %v2491, 6
    %v2641 = vor.u32 %v2639, %v2640
    %v2642 = vsel %vm2622, %v2637, %v2641
    %v2644 = vshrl.u32 %v2613, 16
    %v2646 = vrot.slane %v2644, 5
    %v2647 = vshll.u32 %v2613, 16
    %v2649 = vrot.slane %v2647, 6
    %v2650 = vor.u32 %v2646, %v2649
    %v2651 = vsel %vm2622, %v2641, %v2650
    %v2660 = vunpack.c.l.b16 %v2614
    %v2661 = vunpack.c.l.b16 %v2615
    %v2662 = vunpack.c.l.b16 %v2616
    %v2663 = vunpack.c.l.b16 %v2617
    %v2664 = vunpack.c.l.b16 %v2618
    %v2665 = vunpack.c.l.b16 %v2619
    %v2666 = vunpack.c.l.b16 %v2620
    %v2667 = vunpack.c.l.b16 %v2621
    %v2668 = vpack.c.b16 %v2661, %v2660
    %v2669 = vpack.c.b16 %v2663, %v2662
    %v2670 = vpack.c.b16 %v2665, %v2664
    %v2671 = vpack.c.b16 %v2667, %v2666
    %v2677 = vsel %vm1061, %v2634, 0
    %v2680 = vsel %vm1061, %v2638, 0
    %v2683 = vsel %vm1061, %v2642, 0
    %v2686 = vsel %vm1061, %v2651, 0
    %2688 = vmatprep.subr.bf16.mxu0 0
    %2689 = vmatpush1.bf16.msra.mxu0 %v2668
    %2690 = vmatprep.subr.bf16.mxu0 0
    %2691 = vmatpush1.bf16.msra.mxu0 %v2669
    %2692 = vmatprep.subr.bf16.mxu0 0
    %2693 = vmatpush1.bf16.msra.mxu0 %v2670
    %2694 = vmatprep.subr.bf16.mxu0 0
    %2695 = vmatpush1.bf16.msra.mxu0 %v2671
    %2696 = vmatprep.subr.bf16.mxu0 0
    %2697 = vmatpush1.bf16.msra.mxu0 0
    %2698 = vmatprep.subr.bf16.mxu0 0
    %2699 = vmatpush1.bf16.msra.mxu0 0
    %2700 = vmatprep.subr.bf16.mxu0 0
    %2701 = vmatpush1.bf16.msra.mxu0 0
    %2702 = vmatprep.subr.bf16.mxu0 0
    %2703 = vmatpush1.bf16.msra.mxu0 0
    %2704 = vmatprep.subr.bf16.mxu0 0
    %2705 = vmatpush1.bf16.msra.mxu0 0
    %2706 = vmatprep.subr.bf16.mxu0 0
    %2707 = vmatpush1.bf16.msra.mxu0 0
    %2708 = vmatprep.subr.bf16.mxu0 0
    %2709 = vmatpush1.bf16.msra.mxu0 0
    %2710 = vmatprep.subr.bf16.mxu0 0
    %2711 = vmatpush1.bf16.msra.mxu0 0
    %2712 = vmatprep.subr.bf16.mxu0 0
    %2713 = vmatpush1.bf16.msra.mxu0 0
    %2714 = vmatprep.subr.bf16.mxu0 0
    %2715 = vmatpush1.bf16.msra.mxu0 0
    %2716 = vmatprep.subr.bf16.mxu0 0
    %2717 = vmatpush1.bf16.msra.mxu0 0
    %2718 = vmatprep.subr.bf16.mxu0 0
    %2719 = vmatpush1.bf16.msra.mxu0 0
    %2720 = vmatprep.mubr.bf16.mxu0 0
    %2721 = vmatmul.mubr.bf16.gmra.mrb[0].mxu0 %v2677
    %v2722 = vpop.f32.mrb[0].mxu0
    %v2723 = vadd.f32 0.0, %v2722
    %v2724 = vpop.f32.mrb[0].mxu0
    %v2725 = vpop.f32.mrb[0].mxu0
    %v2726 = vadd.f32 0.0, %v2725
    %v2727 = vpop.f32.mrb[0].mxu0
    %2728 = vmatprep.mubr.bf16.mxu0 0
    %2729 = vmatmul.mubr.bf16.gmra.mrb[0].mxu0 %v2680
    %v2730 = vpop.f32.mrb[0].mxu0
    %v2731 = vadd.f32 0.0, %v2730
    %v2732 = vpop.f32.mrb[0].mxu0
    %v2733 = vpop.f32.mrb[0].mxu0
    %v2734 = vadd.f32 0.0, %v2733
    %v2735 = vpop.f32.mrb[0].mxu0
    %2736 = vmatprep.mubr.bf16.mxu0 0
    %2737 = vmatmul.mubr.bf16.gmra.mrb[0].mxu0 %v2683
    %v2738 = vpop.f32.mrb[0].mxu0
    %v2739 = vadd.f32 0.0, %v2738
    %v2740 = vpop.f32.mrb[0].mxu0
    %v2741 = vpop.f32.mrb[0].mxu0
    %v2742 = vadd.f32 0.0, %v2741
    %v2743 = vpop.f32.mrb[0].mxu0
    %2744 = vmatprep.mubr.bf16.mxu0 0
    %2745 = vmatmul.mubr.bf16.gmra.mrb[0].mxu0 %v2686
    %v2746 = vpop.f32.mrb[0].mxu0
    %v2747 = vadd.f32 0.0, %v2746
    %v2748 = vpop.f32.mrb[0].mxu0
    %v2749 = vpop.f32.mrb[0].mxu0
    %v2750 = vadd.f32 0.0, %v2749
    %v2751 = vpop.f32.mrb[0].mxu0
    %2752 = vdwg.mxu0
    %v2753 = vadd.f32 %v2604, %v2723
    %v2754 = vadd.f32 %v2605, %v2726
    %v2755 = vadd.f32 %v2606, %v2731
    %v2756 = vadd.f32 %v2607, %v2734
    %v2757 = vadd.f32 %v2608, %v2739
    %v2758 = vadd.f32 %v2609, %v2742
    %v2759 = vadd.f32 %v2610, %v2747
    %v2760 = vadd.f32 %v2611, %v2750
    %v2761 = vld [vmem:[#allocation5 + $0x10] sm:$0xc0]
    %v2762 = vld [vmem:[%s4 + $0xe0] sm:$0xf]
    %v2763 = vld [vmem:[%s4 + $0xe4] sm:$0xf]
    %v2764 = vld [vmem:[%s4 + $0xe8] sm:$0xf]
    %v2765 = vld [vmem:[%s4 + $0xec] sm:$0xf]
    %v2766 = vld [vmem:[%s4 + $0xf0] sm:$0xf]
    %v2767 = vld [vmem:[%s4 + $0xf4] sm:$0xf]
    %v2768 = vld [vmem:[%s4 + $0xf8] sm:$0xf]
    %v2769 = vld [vmem:[%s4 + $0xfc] sm:$0xf]
    %v2775 = vrot.slane %v2761, 6
    %v2776 = vrot.slane %v2455, 6
    %v2777 = vsel %vm1613, %v2775, %v2776
    %v2778 = vrot.slane %v2456, 6
    %v2779 = vsel %vm1613, %v2776, %v2778
    %v2780 = vrot.slane %v2457, 6
    %v2781 = vsel %vm1613, %v2778, %v2780
    %v2782 = vrot.slane %v2613, 6
    %v2783 = vsel %vm1613, %v2780, %v2782
    %v2792 = vunpack.c.l.b16 %v2762
    %v2793 = vunpack.c.l.b16 %v2763
    %v2794 = vunpack.c.l.b16 %v2764
    %v2795 = vunpack.c.l.b16 %v2765
    %v2796 = vunpack.c.l.b16 %v2766
    %v2797 = vunpack.c.l.b16 %v2767
    %v2798 = vunpack.c.l.b16 %v2768
    %v2799 = vunpack.c.l.b16 %v2769
    %v2800 = vpack.c.b16 %v2793, %v2792
    %v2801 = vpack.c.b16 %v2795, %v2794
    %v2802 = vpack.c.b16 %v2797, %v2796
    %v2803 = vpack.c.b16 %v2799, %v2798
    %v2809 = vsel %vm1061, %v2777, 0
    %v2812 = vsel %vm1061, %v2779, 0
    %v2815 = vsel %vm1061, %v2781, 0
    %v2818 = vsel %vm1061, %v2783, 0
    %2820 = vmatprep.subr.bf16.mxu0 0
    %2821 = vmatpush1.bf16.msra.mxu0 %v2800
    %2822 = vmatprep.subr.bf16.mxu0 0
    %2823 = vmatpush1.bf16.msra.mxu0 %v2801
    %2824 = vmatprep.subr.bf16.mxu0 0
    %2825 = vmatpush1.bf16.msra.mxu0 %v2802
    %2826 = vmatprep.subr.bf16.mxu0 0
    %2827 = vmatpush1.bf16.msra.mxu0 %v2803
    %2828 = vmatprep.subr.bf16.mxu0 0
    %2829 = vmatpush1.bf16.msra.mxu0 0
    %2830 = vmatprep.subr.bf16.mxu0 0
    %2831 = vmatpush1.bf16.msra.mxu0 0
    %2832 = vmatprep.subr.bf16.mxu0 0
    %2833 = vmatpush1.bf16.msra.mxu0 0
    %2834 = vmatprep.subr.bf16.mxu0 0
    %2835 = vmatpush1.bf16.msra.mxu0 0
    %2836 = vmatprep.subr.bf16.mxu0 0
    %2837 = vmatpush1.bf16.msra.mxu0 0
    %2838 = vmatprep.subr.bf16.mxu0 0
    %2839 = vmatpush1.bf16.msra.mxu0 0
    %2840 = vmatprep.subr.bf16.mxu0 0
    %2841 = vmatpush1.bf16.msra.mxu0 0
    %2842 = vmatprep.subr.bf16.mxu0 0
    %2843 = vmatpush1.bf16.msra.mxu0 0
    %2844 = vmatprep.subr.bf16.mxu0 0
    %2845 = vmatpush1.bf16.msra.mxu0 0
    %2846 = vmatprep.subr.bf16.mxu0 0
    %2847 = vmatpush1.bf16.msra.mxu0 0
    %2848 = vmatprep.subr.bf16.mxu0 0
    %2849 = vmatpush1.bf16.msra.mxu0 0
    %2850 = vmatprep.subr.bf16.mxu0 0
    %2851 = vmatpush1.bf16.msra.mxu0 0
    %2852 = vmatprep.mubr.bf16.mxu0 0
    %2853 = vmatmul.mubr.bf16.gmra.mrb[0].mxu0 %v2809
    %v2854 = vpop.f32.mrb[0].mxu0
    %v2855 = vadd.f32 0.0, %v2854
    %v2856 = vpop.f32.mrb[0].mxu0
    %v2857 = vpop.f32.mrb[0].mxu0
    %v2858 = vadd.f32 0.0, %v2857
    %v2859 = vpop.f32.mrb[0].mxu0
    %2860 = vmatprep.mubr.bf16.mxu0 0
    %2861 = vmatmul.mubr.bf16.gmra.mrb[0].mxu0 %v2812
    %v2862 = vpop.f32.mrb[0].mxu0
    %v2863 = vadd.f32 0.0, %v2862
    %v2864 = vpop.f32.mrb[0].mxu0
    %v2865 = vpop.f32.mrb[0].mxu0
    %v2866 = vadd.f32 0.0, %v2865
    %v2867 = vpop.f32.mrb[0].mxu0
    %2868 = vmatprep.mubr.bf16.mxu0 0
    %2869 = vmatmul.mubr.bf16.gmra.mrb[0].mxu0 %v2815
    %v2870 = vpop.f32.mrb[0].mxu0
    %v2871 = vadd.f32 0.0, %v2870
    %v2872 = vpop.f32.mrb[0].mxu0
    %v2873 = vpop.f32.mrb[0].mxu0
    %v2874 = vadd.f32 0.0, %v2873
    %v2875 = vpop.f32.mrb[0].mxu0
    %2876 = vmatprep.mubr.bf16.mxu0 0
    %2877 = vmatmul.mubr.bf16.gmra.mrb[0].mxu0 %v2818
    %v2878 = vpop.f32.mrb[0].mxu0
    %v2879 = vadd.f32 0.0, %v2878
    %v2880 = vpop.f32.mrb[0].mxu0
    %v2881 = vpop.f32.mrb[0].mxu0
    %v2882 = vadd.f32 0.0, %v2881
    %v2883 = vpop.f32.mrb[0].mxu0
    %2884 = vdwg.mxu0
    %v2885 = vadd.f32 %v2753, %v2855
    %v2886 = vadd.f32 %v2754, %v2858
    %v2887 = vadd.f32 %v2755, %v2863
    %v2888 = vadd.f32 %v2756, %v2866
    %v2889 = vadd.f32 %v2757, %v2871
    %v2890 = vadd.f32 %v2758, %v2874
    %v2891 = vadd.f32 %v2759, %v2879
    %v2892 = vadd.f32 %v2760, %v2882
    %v2893 = vld [vmem:[#allocation5 + $0x30] sm:$0x7f]
    %v2894 = vld [vmem:[%s4 + $0x100] sm:$0xf]
    %v2895 = vld [vmem:[%s4 + $0x104] sm:$0xf]
    %v2896 = vld [vmem:[%s4 + $0x108] sm:$0xf]
    %v2897 = vld [vmem:[%s4 + $0x10c] sm:$0xf]
    %v2898 = vld [vmem:[%s4 + $0x110] sm:$0xf]
    %v2899 = vld [vmem:[%s4 + $0x114] sm:$0xf]
    %v2900 = vld [vmem:[%s4 + $0x118] sm:$0xf]
    %v2901 = vld [vmem:[%s4 + $0x11c] sm:$0xf]
    %v2903 = vshrl.u32 %v2761, 16
    %v2905 = vrot.slane %v2903, 6
    %v2906 = vshll.u32 %v2761, 16
    %v2908 = vrot.slane %v2906, 7
    %v2909 = vor.u32 %v2905, %v2908
    %v2910 = vrot.slane %v2479, 6
    %v2911 = vrot.slane %v2475, 7
    %v2912 = vor.u32 %v2910, %v2911
    %v2913 = vsel %vm1657, %v2909, %v2912
    %v2914 = vrot.slane %v2487, 6
    %v2915 = vrot.slane %v2483, 7
    %v2916 = vor.u32 %v2914, %v2915
    %v2917 = vsel %vm1657, %v2912, %v2916
    %v2918 = vrot.slane %v2495, 6
    %v2919 = vrot.slane %v2491, 7
    %v2920 = vor.u32 %v2918, %v2919
    %v2921 = vsel %vm1657, %v2916, %v2920
    %v2923 = vshrl.u32 %v2893, 16
    %v2925 = vrot.slane %v2923, 6
    %v2926 = vshll.u32 %v2893, 16
    %v2928 = vrot.slane %v2926, 7
    %v2929 = vor.u32 %v2925, %v2928
    %v2930 = vsel %vm1657, %v2920, %v2929
    %v2939 = vunpack.c.l.b16 %v2894
    %v2940 = vunpack.c.l.b16 %v2895
    %v2941 = vunpack.c.l.b16 %v2896
    %v2942 = vunpack.c.l.b16 %v2897
    %v2943 = vunpack.c.l.b16 %v2898
    %v2944 = vunpack.c.l.b16 %v2899
    %v2945 = vunpack.c.l.b16 %v2900
    %v2946 = vunpack.c.l.b16 %v2901
    %v2947 = vpack.c.b16 %v2940, %v2939
    %v2948 = vpack.c.b16 %v2942, %v2941
    %v2949 = vpack.c.b16 %v2944, %v2943
    %v2950 = vpack.c.b16 %v2946, %v2945
    %v2956 = vsel %vm1061, %v2913, 0
    %v2959 = vsel %vm1061, %v2917, 0
    %v2962 = vsel %vm1061, %v2921, 0
    %v2965 = vsel %vm1061, %v2930, 0
    %2967 = vmatprep.subr.bf16.mxu0 0
    %2968 = vmatpush1.bf16.msra.mxu0 %v2947
    %2969 = vmatprep.subr.bf16.mxu0 0
    %2970 = vmatpush1.bf16.msra.mxu0 %v2948
    %2971 = vmatprep.subr.bf16.mxu0 0
    %2972 = vmatpush1.bf16.msra.mxu0 %v2949
    %2973 = vmatprep.subr.bf16.mxu0 0
    %2974 = vmatpush1.bf16.msra.mxu0 %v2950
    %2975 = vmatprep.subr.bf16.mxu0 0
    %2976 = vmatpush1.bf16.msra.mxu0 0
    %2977 = vmatprep.subr.bf16.mxu0 0
    %2978 = vmatpush1.bf16.msra.mxu0 0
    %2979 = vmatprep.subr.bf16.mxu0 0
    %2980 = vmatpush1.bf16.msra.mxu0 0
    %2981 = vmatprep.subr.bf16.mxu0 0
    %2982 = vmatpush1.bf16.msra.mxu0 0
    %2983 = vmatprep.subr.bf16.mxu0 0
    %2984 = vmatpush1.bf16.msra.mxu0 0
    %2985 = vmatprep.subr.bf16.mxu0 0
    %2986 = vmatpush1.bf16.msra.mxu0 0
    %2987 = vmatprep.subr.bf16.mxu0 0
    %2988 = vmatpush1.bf16.msra.mxu0 0
    %2989 = vmatprep.subr.bf16.mxu0 0
    %2990 = vmatpush1.bf16.msra.mxu0 0
    %2991 = vmatprep.subr.bf16.mxu0 0
    %2992 = vmatpush1.bf16.msra.mxu0 0
    %2993 = vmatprep.subr.bf16.mxu0 0
    %2994 = vmatpush1.bf16.msra.mxu0 0
    %2995 = vmatprep.subr.bf16.mxu0 0
    %2996 = vmatpush1.bf16.msra.mxu0 0
    %2997 = vmatprep.subr.bf16.mxu0 0
    %2998 = vmatpush1.bf16.msra.mxu0 0
    %2999 = vmatprep.mubr.bf16.mxu0 0
    %3000 = vmatmul.mubr.bf16.gmra.mrb[0].mxu0 %v2956
    %v3001 = vpop.f32.mrb[0].mxu0
    %v3002 = vadd.f32 0.0, %v3001
    %v3003 = vpop.f32.mrb[0].mxu0
    %v3004 = vpop.f32.mrb[0].mxu0
    %v3005 = vadd.f32 0.0, %v3004
    %v3006 = vpop.f32.mrb[0].mxu0
    %3007 = vmatprep.mubr.bf16.mxu0 0
    %3008 = vmatmul.mubr.bf16.gmra.mrb[0].mxu0 %v2959
    %v3009 = vpop.f32.mrb[0].mxu0
    %v3010 = vadd.f32 0.0, %v3009
    %v3011 = vpop.f32.mrb[0].mxu0
    %v3012 = vpop.f32.mrb[0].mxu0
    %v3013 = vadd.f32 0.0, %v3012
    %v3014 = vpop.f32.mrb[0].mxu0
    %3015 = vmatprep.mubr.bf16.mxu0 0
    %3016 = vmatmul.mubr.bf16.gmra.mrb[0].mxu0 %v2962
    %v3017 = vpop.f32.mrb[0].mxu0
    %v3018 = vadd.f32 0.0, %v3017
    %v3019 = vpop.f32.mrb[0].mxu0
    %v3020 = vpop.f32.mrb[0].mxu0
    %v3021 = vadd.f32 0.0, %v3020
    %v3022 = vpop.f32.mrb[0].mxu0
    %3023 = vmatprep.mubr.bf16.mxu0 0
    %3024 = vmatmul.mubr.bf16.gmra.mrb[0].mxu0 %v2965
    %v3025 = vpop.f32.mrb[0].mxu0
    %v3026 = vadd.f32 0.0, %v3025
    %v3027 = vpop.f32.mrb[0].mxu0
    %v3028 = vpop.f32.mrb[0].mxu0
    %v3029 = vadd.f32 0.0, %v3028
    %v3030 = vpop.f32.mrb[0].mxu0
    %3031 = vdwg.mxu0
    %v3032 = vadd.f32 %v2885, %v3002
    %v3033 = vadd.f32 %v2886, %v3005
    %v3034 = vadd.f32 %v2887, %v3010
    %v3035 = vadd.f32 %v2888, %v3013
    %v3036 = vadd.f32 %v2889, %v3018
    %v3037 = vadd.f32 %v2890, %v3021
    %v3038 = vadd.f32 %v2891, %v3026
    %v3039 = vadd.f32 %v2892, %v3029
    %v3040 = vld [vmem:[%s7] sm:$0xff]
    %v3041 = vld [vmem:[%s7 + $0x8] sm:$0xff]
    %v3042 = vld [vmem:[%s7 + $0x10] sm:$0xff]
    %v3043 = vld [vmem:[%s7 + $0x18] sm:$0xff]
    %v3044 = vld [vmem:[%s7 + $0x20] sm:$0xff]
    %v3045 = vld [vmem:[%s7 + $0x28] sm:$0xff]
    %v3046 = vld [vmem:[%s7 + $0x30] sm:$0xff]
    %v3047 = vld [vmem:[%s7 + $0x38] sm:$0xff]
    %3049 = vset.pattern.permute.xlu0 0
    %3050 = vperm.xlu0 %3049, %v3040
    %v3051 = vpop.permute.xlu0 %3050
    %3054 = vset.pattern.permute.xlu0 0
    %3055 = vperm.xlu0 %3054, %v3041
    %v3056 = vpop.permute.xlu0 %3055
    %3059 = vset.pattern.permute.xlu0 0
    %3060 = vperm.xlu0 %3059, %v3042
    %v3061 = vpop.permute.xlu0 %3060
    %3064 = vset.pattern.permute.xlu0 0
    %3065 = vperm.xlu0 %3064, %v3043
    %v3066 = vpop.permute.xlu0 %3065
    %3069 = vset.pattern.permute.xlu0 0
    %3070 = vperm.xlu0 %3069, %v3044
    %v3071 = vpop.permute.xlu0 %3070
    %3074 = vset.pattern.permute.xlu0 0
    %3075 = vperm.xlu0 %3074, %v3045
    %v3076 = vpop.permute.xlu0 %3075
    %3079 = vset.pattern.permute.xlu0 0
    %3080 = vperm.xlu0 %3079, %v3046
    %v3081 = vpop.permute.xlu0 %3080
    %3084 = vset.pattern.permute.xlu0 0
    %3085 = vperm.xlu0 %3084, %v3047
    %v3086 = vpop.permute.xlu0 %3085
    %v3088 = vmul.f32 %v3032, %v3051
    %v3089 = vmul.f32 %v3033, %v3056
    %v3090 = vmul.f32 %v3034, %v3061
    %v3091 = vmul.f32 %v3035, %v3066
    %v3092 = vmul.f32 %v3036, %v3071
    %v3093 = vmul.f32 %v3037, %v3076
    %v3094 = vmul.f32 %v3038, %v3081
    %v3095 = vmul.f32 %v3039, %v3086
    %v3096 = vadd.f32 %v3088, %v3089
    %v3097 = vadd.f32 %v3096, %v3090
    %v3098 = vadd.f32 %v3097, %v3091
    %v3099 = vadd.f32 %v3098, %v3092
    %v3100 = vadd.f32 %v3099, %v3093
    %v3101 = vadd.f32 %v3100, %v3094
    %v3102 = vadd.f32 %v3101, %v3095
    %v3103 = vrot.slane %v3102, 4
    %v3104 = vadd.f32 %v3102, %v3103
    %v3105 = vrot.slane %v3104, 2
    %v3106 = vadd.f32 %v3104, %v3105
    %v3107 = vrot.slane %v3106, 1
    %v3108 = vadd.f32 %v3106, %v3107
    %v3109 = vmul.f32 %v3108, 0.02
    %v3110 = vmul.f32 %v3032, %v3032
    %v3111 = vmul.f32 %v3033, %v3033
    %v3112 = vmul.f32 %v3034, %v3034
    %v3113 = vmul.f32 %v3035, %v3035
    %v3114 = vmul.f32 %v3036, %v3036
    %v3115 = vmul.f32 %v3037, %v3037
    %v3116 = vmul.f32 %v3038, %v3038
    %v3117 = vmul.f32 %v3039, %v3039
    %v3118 = vmul.f32 %v3110, %v3051
    %v3119 = vmul.f32 %v3111, %v3056
    %v3120 = vmul.f32 %v3112, %v3061
    %v3121 = vmul.f32 %v3113, %v3066
    %v3122 = vmul.f32 %v3114, %v3071
    %v3123 = vmul.f32 %v3115, %v3076
    %v3124 = vmul.f32 %v3116, %v3081
    %v3125 = vmul.f32 %v3117, %v3086
    %v3126 = vadd.f32 %v3118, %v3119
    %v3127 = vadd.f32 %v3126, %v3120
    %v3128 = vadd.f32 %v3127, %v3121
    %v3129 = vadd.f32 %v3128, %v3122
    %v3130 = vadd.f32 %v3129, %v3123
    %v3131 = vadd.f32 %v3130, %v3124
    %v3132 = vadd.f32 %v3131, %v3125
    %v3133 = vrot.slane %v3132, 4
    %v3134 = vadd.f32 %v3132, %v3133
    %v3135 = vrot.slane %v3134, 2
    %v3136 = vadd.f32 %v3134, %v3135
    %v3137 = vrot.slane %v3136, 1
    %v3138 = vadd.f32 %v3136, %v3137
    %v3139 = vmul.f32 %v3138, 0.02
    %v3140 = vmul.f32 %v3109, %v3109
    %v3141 = vsub.f32 %v3139, %v3140
    %v3142 = vmax.f32 %v3141, 0.0
    %v3143 = vadd.f32 %v3142, 1e-05
    %v3144 = vrsqrt.pop %v3143
    %v3145 = vld [vmem:[%s5] sm:$0x1]
    %v3146 = vmul.f32 %v3144, %v3145
    %v3147 = vld [vmem:[%s6] sm:$0x1]
    %v3148 = vmul.f32 %v3109, %v3146
    %v3149 = vsub.f32 %v3147, %v3148
    %v3150 = vlaneseq
    %v3151 = vshrl.u32 %v3150, 7
    %v3152 = vsub.s32 0, %v3151
    %v3153 = vrot.slane %v3146, %v3152
    %v3154 = vmul.f32 %v3032, %v3153
    %v3155 = vmul.f32 %v3033, %v3153
    %v3156 = vmul.f32 %v3034, %v3153
    %v3157 = vmul.f32 %v3035, %v3153
    %v3158 = vmul.f32 %v3036, %v3153
    %v3159 = vmul.f32 %v3037, %v3153
    %v3160 = vmul.f32 %v3038, %v3153
    %v3161 = vmul.f32 %v3039, %v3153
    %v3163 = vlaneseq
    %v3164 = vshrl.u32 %v3163, 7
    %v3165 = vsub.s32 0, %v3164
    %v3166 = vrot.slane %v3149, %v3165
    %v3168 = vadd.f32 %v3154, %v3166
    %v3169 = vadd.f32 %v3155, %v3166
    %v3170 = vadd.f32 %v3156, %v3166
    %v3171 = vadd.f32 %v3157, %v3166
    %v3172 = vadd.f32 %v3158, %v3166
    %v3173 = vadd.f32 %v3159, %v3166
    %v3174 = vadd.f32 %v3160, %v3166
    %v3175 = vadd.f32 %v3161, %v3166
    %v3176 = vmax.f32 %v3168, 0.0
    %v3177 = vmax.f32 %v3169, 0.0
    %v3178 = vmax.f32 %v3170, 0.0
    %v3179 = vmax.f32 %v3171, 0.0
    %v3180 = vmax.f32 %v3172, 0.0
    %v3181 = vmax.f32 %v3173, 0.0
    %v3182 = vmax.f32 %v3174, 0.0
    %v3183 = vmax.f32 %v3175, 0.0
    %3184 = vst [vmem:[%s8] sm:$0xff] %v3176
    %3185 = vst [vmem:[%s8 + $0x8] sm:$0xff] %v3177
    %3186 = vst [vmem:[%s8 + $0x10] sm:$0xff] %v3178
    %3187 = vst [vmem:[%s8 + $0x18] sm:$0xff] %v3179
    %3188 = vst [vmem:[%s8 + $0x20] sm:$0xff] %v3180
    %3189 = vst [vmem:[%s8 + $0x28] sm:$0xff] %v3181
    %3190 = vst [vmem:[%s8 + $0x30] sm:$0xff] %v3182
    %3191 = vst [vmem:[%s8 + $0x38] sm:$0xff] %v3183
  $region41: #{conv_block1.1} parent=0 // pred_fallthru
    _
  // Predicated region
  $region42: #{conv_block1.1} parent=0 // pred_check
    _
  $region43: #{conv_block1.1} parent=0 // pred_check_branch
    %3193 = sbr.rel (0) target = $region45
  $region44: #{conv_block1.1} parent=0 // pred_region
    _
  $region45: #{conv_block1.1} parent=0 // pred_fallthru
    _
  // Predicated region
  $region46: #{conv_block1.1} parent=0 // pred_check
    _
  $region47: #{conv_block1.1} parent=0 // pred_check_branch
    %3195 = sbr.rel (0) target = $region49
  $region48: #{conv_block1.1} parent=0 // pred_region
    _
  $region49: #{conv_block1.1} parent=0 // pred_fallthru
    _

</llo_original>
